<compile_context>
chip_gen: v7x
topology: tpu7x:2x2x1
jax: 0.10.0
libtpu: 0.0.40
codegen_flags: <defaults>
</compile_context>

<pallas_src>
import jax
import jax.numpy as jnp
from jax.experimental import pallas as pl
from jax.experimental.pallas import tpu as pltpu

NEG_SLOPE = 0.2
LATENT = 100
LATENT_PAD = 128            # 100 zero-padded to a full lane width
H1, H2, H3 = 256, 512, 1024
OUT = 28 * 28               # 784 = 6*128 + 16 (mostly lane-dense output)
MAX_TILE_B = 256            # batch tile cap (safe on v5e/v6e/v7x)


def _leaky_relu_bf16(x_f32):
    # where() on the f32 accumulator; result staged directly as the bf16 MXU
    # operand for the next layer (halves live activation footprint).
    return jnp.where(x_f32 > 0, x_f32, NEG_SLOPE * x_f32).astype(jnp.bfloat16)


def generator_kernel(z_ref,
                     w1_ref, b1_ref,
                     w2_ref, b2_ref,
                     w3_ref, b3_ref,
                     w4_ref, b4_ref,
                     out_ref):
    """Fused 4-layer MLP: bf16 MXU matmuls, f32 accumulation, bf16 staging."""
    h = z_ref[...]                                             # bf16 (tb, 128)

    h = _leaky_relu_bf16(
        jnp.dot(h, w1_ref[...], preferred_element_type=jnp.float32) + b1_ref[...])
    h = _leaky_relu_bf16(
        jnp.dot(h, w2_ref[...], preferred_element_type=jnp.float32) + b2_ref[...])
    h = _leaky_relu_bf16(
        jnp.dot(h, w3_ref[...], preferred_element_type=jnp.float32) + b3_ref[...])
    h = jnp.dot(h, w4_ref[...], preferred_element_type=jnp.float32) + b4_ref[...]
    out_ref[...] = jnp.tanh(h).astype(out_ref.dtype)


# --------------------------------------------------------------------------
# Parameter construction / packing
# --------------------------------------------------------------------------
def init_generator_params(key):
    """Deterministic synthetic f32 master parameters (weights as (in, out))."""
    dims = (LATENT, H1, H2, H3, OUT)
    params = []
    for i in range(4):
        key, wk, bk = jax.random.split(key, 3)
        fan_in, fan_out = dims[i], dims[i + 1]
        bound = 1.0 / jnp.sqrt(fan_in)
        w = jax.random.uniform(wk, (fan_in, fan_out), jnp.float32, -bound, bound)
        b = jax.random.uniform(bk, (1, fan_out), jnp.float32, -bound, bound)
        params.append((w, b))
    return params


def pack_generator_params(params):
    """Cast weights to bf16; zero-pad W1 rows 100 -> 128. Biases stay f32."""
    (w1, b1), (w2, b2), (w3, b3), (w4, b4) = params
    w1p = jnp.zeros((LATENT_PAD, H1), jnp.bfloat16)
    w1p = w1p.at[:LATENT, :].set(w1.astype(jnp.bfloat16))
    return (w1p, b1,
            w2.astype(jnp.bfloat16), b2,
            w3.astype(jnp.bfloat16), b3,
            w4.astype(jnp.bfloat16), b4)


# --------------------------------------------------------------------------
# Capability probe: single-buffered resident weights (pl.Buffered(1))
# --------------------------------------------------------------------------
_SINGLE_BUFFER_OK = None


def _single_buffer_supported():
    """One-time probe of pipeline_mode=pl.Buffered(buffer_count=1) on a tiny
    dedicated kernel. Failures here only disable the VMEM-saving hint; the
    main generator pallas_call is never wrapped in an exception handler."""
    global _SINGLE_BUFFER_OK
    if _SINGLE_BUFFER_OK is not None:
        return _SINGLE_BUFFER_OK
    if not hasattr(pl, "Buffered"):
        _SINGLE_BUFFER_OK = False
        return _SINGLE_BUFFER_OK

    def _probe_kernel(x_ref, w_ref, o_ref):
        o_ref[...] = x_ref[...] + w_ref[...]

    try:
        probe = pl.pallas_call(
            _probe_kernel,
            out_shape=jax.ShapeDtypeStruct((16, 128), jnp.float32),
            grid=(2,),
            in_specs=[
                pl.BlockSpec((8, 128), lambda i: (i, 0)),
                pl.BlockSpec((8, 128), lambda i: (0, 0),
                             pipeline_mode=pl.Buffered(buffer_count=1)),
            ],
            out_specs=pl.BlockSpec((8, 128), lambda i: (i, 0)),
        )
        jax.block_until_ready(
            probe(jnp.zeros((16, 128), jnp.float32),
                  jnp.ones((8, 128), jnp.float32)))
        _SINGLE_BUFFER_OK = True
    except Exception:  # narrow, one-time feature probe (not the main kernel)
        _SINGLE_BUFFER_OK = False
    return _SINGLE_BUFFER_OK


# --------------------------------------------------------------------------
# Grid / tile selection
# --------------------------------------------------------------------------
def _is_v7x():
    try:
        kind = jax.devices()[0].device_kind.lower()
    except Exception:
        return False
    return "v7" in kind


def _round_up(x, m):
    return ((x + m - 1) // m) * m


def _choose_tiling(B):
    """Returns (tile_b, b_pad). Whole batch in one tile when it fits (best on
    single-TC v5e/v6e); otherwise 256-row tiles with the step count rounded up
    to even on v7x so both TensorCores get equal work."""
    b8 = _round_up(max(B, 1), 8)
    if b8 <= MAX_TILE_B:
        return b8, b8
    steps = -(-b8 // MAX_TILE_B)
    if _is_v7x() and steps % 2 == 1:
        steps += 1
    return MAX_TILE_B, steps * MAX_TILE_B


def _build_generator_call(b_pad, tile_b, out_dtype, *, single_buffer_weights):
    resident_kwargs = ({"pipeline_mode": pl.Buffered(buffer_count=1)}
                       if single_buffer_weights else {})

    def resident(shape):
        # Weight/bias block index never changes across the grid.
        return pl.BlockSpec(shape, lambda i: (0, 0), **resident_kwargs)

    return pl.pallas_call(
        generator_kernel,
        out_shape=jax.ShapeDtypeStruct((b_pad, OUT), out_dtype),
        grid=(b_pad // tile_b,),
        in_specs=[
            pl.BlockSpec((tile_b, LATENT_PAD), lambda i: (i, 0)),
            resident((LATENT_PAD, H1)), resident((1, H1)),
            resident((H1, H2)), resident((1, H2)),
            resident((H2, H3)), resident((1, H3)),
            resident((H3, OUT)), resident((1, OUT)),
        ],
        out_specs=pl.BlockSpec((tile_b, OUT), lambda i: (i, 0)),
        compiler_params=pltpu.CompilerParams(
            dimension_semantics=("parallel",),
            vmem_limit_bytes=32 << 20,
        ),
    )


# --------------------------------------------------------------------------
# Public forward
# --------------------------------------------------------------------------
def generator_forward(z, packed_params, *, out_dtype=jnp.float32):
    """Runs the fused generator. z: (B, 100). Returns (B, 1, 28, 28)."""
    B = z.shape[0]
    tile_b, b_pad = _choose_tiling(B)

    # Pre-pad (100 -> 128 lanes, batch -> tile multiple) and pre-cast to bf16.
    z_pad = jnp.zeros((b_pad, LATENT_PAD), jnp.bfloat16)
    z_pad = z_pad.at[:B, :LATENT].set(z.astype(jnp.bfloat16))

    call = _build_generator_call(
        b_pad, tile_b, out_dtype,
        single_buffer_weights=_single_buffer_supported())
    flat = call(z_pad, *packed_params)                 # (b_pad, 784)

    img = flat if b_pad == B else flat[:B]
    return img.reshape(B, 1, 28, 28)                   # matches .view(-1,1,28,28)


def generator_forward_ref(z, params):
    """Pure-JAX reference using the same bf16-weight / f32-accumulate recipe."""
    h = z.astype(jnp.bfloat16)
    for i, (w, b) in enumerate(params):
        h = jnp.dot(h, w.astype(jnp.bfloat16),
                    preferred_element_type=jnp.float32) + b
        if i < 3:
            h = jnp.where(h > 0, h, NEG_SLOPE * h).astype(jnp.bfloat16)
        else:
            h = jnp.tanh(h)
    return h.reshape(z.shape[0], 1, 28, 28)


if __name__ == "__main__":
    key = jax.random.PRNGKey(0)
    pkey, zkey1, zkey2 = jax.random.split(key, 3)

    params = init_generator_params(pkey)          # f32 master params
    packed = pack_generator_params(params)        # bf16 / padded kernel params

    # Small batch (single grid step).
    B1 = 8
    z1 = jax.random.normal(zkey1, (B1, LATENT), jnp.float32)
    out1 = jax.block_until_ready(generator_forward(z1, packed))
    ref1 = generator_forward_ref(z1, params)
    assert out1.shape == (B1, 1, 28, 28), out1.shape
    assert jnp.allclose(out1, ref1, atol=1e-2, rtol=1e-2), (
        "mismatch (B=8): max abs diff = "
        f"{float(jnp.max(jnp.abs(out1 - ref1)))}")

    # Awkward batch (exercises batch padding + multi-step parallel grid).
    B2 = 300
    z2 = jax.random.normal(zkey2, (B2, LATENT), jnp.float32)
    out2 = jax.block_until_ready(generator_forward(z2, packed))
    ref2 = generator_forward_ref(z2, params)
    assert out2.shape == (B2, 1, 28, 28), out2.shape
    assert jnp.allclose(out2, ref2, atol=1e-2, rtol=1e-2), (
        "mismatch (B=300): max abs diff = "
        f"{float(jnp.max(jnp.abs(out2 - ref2)))}")

    print("KERNEL_OK")
</pallas_src>

<mosaic_0001>
module attributes {stable_mosaic.version = 11 : i64} {
  func.func @_probe_kernel(%arg0: i32, %arg1: memref<8x128xf32, #tpu.memory_space<vmem>>, %arg2: memref<8x128xf32, #tpu.memory_space<vmem>>, %arg3: memref<8x128xf32, #tpu.memory_space<vmem>>) attributes {dimension_semantics = [#tpu.dimension_semantics<arbitrary>], iteration_bounds = array<i64: 2>, scalar_prefetch = 0 : i64, scratch_operands = 0 : i64, tpu.core_type = #tpu.core_type<tc>, window_params = [{transform_indices = @transform_0, window_bounds = array<i64: 8, 128>}, {pipeline_mode = #tpu.pipeline_mode<synchronous>, transform_indices = @transform_1, window_bounds = array<i64: 8, 128>}, {transform_indices = @transform_2, window_bounds = array<i64: 8, 128>}]} {
    %c0 = arith.constant 0 : index
    %c0_0 = arith.constant 0 : index
    %0 = vector.load %arg1[%c0, %c0_0] : memref<8x128xf32, #tpu.memory_space<vmem>>, vector<8x128xf32>
    %c0_1 = arith.constant 0 : index
    %c0_2 = arith.constant 0 : index
    %1 = vector.load %arg2[%c0_1, %c0_2] : memref<8x128xf32, #tpu.memory_space<vmem>>, vector<8x128xf32>
    %2 = arith.addf %0, %1 : vector<8x128xf32>
    %c0_3 = arith.constant 0 : index
    %c0_4 = arith.constant 0 : index
    %3 = vector.load %arg3[%c0_3, %c0_4] : memref<8x128xf32, #tpu.memory_space<vmem>>, vector<8x128xf32>
    tpu.vector_store %arg3[%c0_3, %c0_4], %2 {strides = array<i32>} : memref<8x128xf32, #tpu.memory_space<vmem>>, vector<8x128xf32>,
    return
  }
  func.func @transform_0(%arg0: i32) -> (i32, i32) {
    %c0_i32 = arith.constant 0 : i32
    %c0_i32_0 = arith.constant 0 : i32
    return %arg0, %c0_i32 : i32, i32
  }
  func.func @transform_1(%arg0: i32) -> (i32, i32) {
    %c0_i32 = arith.constant 0 : i32
    %c0_i32_0 = arith.constant 0 : i32
    %c0_i32_1 = arith.constant 0 : i32
    return %c0_i32, %c0_i32_0 : i32, i32
  }
  func.func @transform_2(%arg0: i32) -> (i32, i32) {
    %c0_i32 = arith.constant 0 : i32
    %c0_i32_0 = arith.constant 0 : i32
    return %arg0, %c0_i32 : i32, i32
  }
}

module attributes {stable_mosaic.version = 11 : i64} {
  func.func @generator_kernel(%arg0: i32, %arg1: memref<8x128xbf16, #tpu.memory_space<vmem>>, %arg2: memref<128x256xbf16, #tpu.memory_space<vmem>>, %arg3: memref<1x256xf32, #tpu.memory_space<vmem>>, %arg4: memref<256x512xbf16, #tpu.memory_space<vmem>>, %arg5: memref<1x512xf32, #tpu.memory_space<vmem>>, %arg6: memref<512x1024xbf16, #tpu.memory_space<vmem>>, %arg7: memref<1x1024xf32, #tpu.memory_space<vmem>>, %arg8: memref<1024x784xbf16, #tpu.memory_space<vmem>>, %arg9: memref<1x784xf32, #tpu.memory_space<vmem>>, %arg10: memref<8x784xf32, #tpu.memory_space<vmem>>) attributes {dimension_semantics = [#tpu.dimension_semantics<parallel>], iteration_bounds = array<i64: 1>, scalar_prefetch = 0 : i64, scratch_operands = 0 : i64, tpu.core_type = #tpu.core_type<tc>, window_params = [{transform_indices = @transform_0, window_bounds = array<i64: 8, 128>}, {pipeline_mode = #tpu.pipeline_mode<synchronous>, transform_indices = @transform_1, window_bounds = array<i64: 128, 256>}, {pipeline_mode = #tpu.pipeline_mode<synchronous>, transform_indices = @transform_2, window_bounds = array<i64: 1, 256>}, {pipeline_mode = #tpu.pipeline_mode<synchronous>, transform_indices = @transform_3, window_bounds = array<i64: 256, 512>}, {pipeline_mode = #tpu.pipeline_mode<synchronous>, transform_indices = @transform_4, window_bounds = array<i64: 1, 512>}, {pipeline_mode = #tpu.pipeline_mode<synchronous>, transform_indices = @transform_5, window_bounds = array<i64: 512, 1024>}, {pipeline_mode = #tpu.pipeline_mode<synchronous>, transform_indices = @transform_6, window_bounds = array<i64: 1, 1024>}, {pipeline_mode = #tpu.pipeline_mode<synchronous>, transform_indices = @transform_7, window_bounds = array<i64: 1024, 784>}, {pipeline_mode = #tpu.pipeline_mode<synchronous>, transform_indices = @transform_8, window_bounds = array<i64: 1, 784>}, {transform_indices = @transform_9, window_bounds = array<i64: 8, 784>}]} {
    %c0 = arith.constant 0 : index
    %c0_0 = arith.constant 0 : index
    %0 = vector.load %arg1[%c0, %c0_0] : memref<8x128xbf16, #tpu.memory_space<vmem>>, vector<8x128xbf16>
    %c0_1 = arith.constant 0 : index
    %c0_2 = arith.constant 0 : index
    %1 = vector.load %arg2[%c0_1, %c0_2] : memref<128x256xbf16, #tpu.memory_space<vmem>>, vector<128x256xbf16>
    %cst = arith.constant dense<0.000000e+00> : vector<8x256xf32>
    %2 = tpu.matmul %0, %1, %cst {dimension_numbers = #tpu.dot_dimension_numbers<[1], [0], [0], [1], [0, 0, 1, 1], [], []>} : vector<8x128xbf16>, vector<128x256xbf16>, vector<8x256xf32> -> vector<8x256xf32>
    %c0_3 = arith.constant 0 : index
    %c0_4 = arith.constant 0 : index
    %3 = vector.load %arg3[%c0_3, %c0_4] : memref<1x256xf32, #tpu.memory_space<vmem>>, vector<1x256xf32>
    %4 = vector.broadcast %3 : vector<1x256xf32> to vector<8x256xf32>
    %5 = arith.addf %2, %4 : vector<8x256xf32>
    %cst_5 = arith.constant 0.000000e+00 : f32
    %6 = vector.broadcast %cst_5 : f32 to vector<8x256xf32>
    %7 = arith.cmpf ogt, %5, %6 : vector<8x256xf32>
    %cst_6 = arith.constant 2.000000e-01 : f32
    %8 = vector.broadcast %cst_6 : f32 to vector<8x256xf32>
    %9 = arith.mulf %8, %5 : vector<8x256xf32>
    %10 = arith.select %7, %5, %9 : vector<8x256xi1>, vector<8x256xf32>
    %11 = arith.truncf %10 : vector<8x256xf32> to vector<8x256xbf16>
    %c0_7 = arith.constant 0 : index
    %c0_8 = arith.constant 0 : index
    %12 = vector.load %arg4[%c0_7, %c0_8] : memref<256x512xbf16, #tpu.memory_space<vmem>>, vector<256x512xbf16>
    %cst_9 = arith.constant dense<0.000000e+00> : vector<8x512xf32>
    %13 = tpu.matmul %11, %12, %cst_9 {dimension_numbers = #tpu.dot_dimension_numbers<[1], [0], [0], [1], [0, 0, 1, 1], [], []>} : vector<8x256xbf16>, vector<256x512xbf16>, vector<8x512xf32> -> vector<8x512xf32>
    %c0_10 = arith.constant 0 : index
    %c0_11 = arith.constant 0 : index
    %14 = vector.load %arg5[%c0_10, %c0_11] : memref<1x512xf32, #tpu.memory_space<vmem>>, vector<1x512xf32>
    %15 = vector.broadcast %14 : vector<1x512xf32> to vector<8x512xf32>
    %16 = arith.addf %13, %15 : vector<8x512xf32>
    %cst_12 = arith.constant 0.000000e+00 : f32
    %17 = vector.broadcast %cst_12 : f32 to vector<8x512xf32>
    %18 = arith.cmpf ogt, %16, %17 : vector<8x512xf32>
    %cst_13 = arith.constant 2.000000e-01 : f32
    %19 = vector.broadcast %cst_13 : f32 to vector<8x512xf32>
    %20 = arith.mulf %19, %16 : vector<8x512xf32>
    %21 = arith.select %18, %16, %20 : vector<8x512xi1>, vector<8x512xf32>
    %22 = arith.truncf %21 : vector<8x512xf32> to vector<8x512xbf16>
    %c0_14 = arith.constant 0 : index
    %c0_15 = arith.constant 0 : index
    %23 = vector.load %arg6[%c0_14, %c0_15] : memref<512x1024xbf16, #tpu.memory_space<vmem>>, vector<512x1024xbf16>
    %cst_16 = arith.constant dense<0.000000e+00> : vector<8x1024xf32>
    %24 = tpu.matmul %22, %23, %cst_16 {dimension_numbers = #tpu.dot_dimension_numbers<[1], [0], [0], [1], [0, 0, 1, 1], [], []>} : vector<8x512xbf16>, vector<512x1024xbf16>, vector<8x1024xf32> -> vector<8x1024xf32>
    %c0_17 = arith.constant 0 : index
    %c0_18 = arith.constant 0 : index
    %25 = vector.load %arg7[%c0_17, %c0_18] : memref<1x1024xf32, #tpu.memory_space<vmem>>, vector<1x1024xf32>
    %26 = vector.broadcast %25 : vector<1x1024xf32> to vector<8x1024xf32>
    %27 = arith.addf %24, %26 : vector<8x1024xf32>
    %cst_19 = arith.constant 0.000000e+00 : f32
    %28 = vector.broadcast %cst_19 : f32 to vector<8x1024xf32>
    %29 = arith.cmpf ogt, %27, %28 : vector<8x1024xf32>
    %cst_20 = arith.constant 2.000000e-01 : f32
    %30 = vector.broadcast %cst_20 : f32 to vector<8x1024xf32>
    %31 = arith.mulf %30, %27 : vector<8x1024xf32>
    %32 = arith.select %29, %27, %31 : vector<8x1024xi1>, vector<8x1024xf32>
    %33 = arith.truncf %32 : vector<8x1024xf32> to vector<8x1024xbf16>
    %c0_21 = arith.constant 0 : index
    %c0_22 = arith.constant 0 : index
    %34 = vector.load %arg8[%c0_21, %c0_22] : memref<1024x784xbf16, #tpu.memory_space<vmem>>, vector<1024x784xbf16>
    %cst_23 = arith.constant dense<0.000000e+00> : vector<8x784xf32>
    %35 = tpu.matmul %33, %34, %cst_23 {dimension_numbers = #tpu.dot_dimension_numbers<[1], [0], [0], [1], [0, 0, 1, 1], [], []>} : vector<8x1024xbf16>, vector<1024x784xbf16>, vector<8x784xf32> -> vector<8x784xf32>
    %c0_24 = arith.constant 0 : index
    %c0_25 = arith.constant 0 : index
    %36 = vector.load %arg9[%c0_24, %c0_25] : memref<1x784xf32, #tpu.memory_space<vmem>>, vector<1x784xf32>
    %37 = vector.broadcast %36 : vector<1x784xf32> to vector<8x784xf32>
    %38 = arith.addf %35, %37 : vector<8x784xf32>
    %39 = math.tanh %38 : vector<8x784xf32>
    %c0_26 = arith.constant 0 : index
    %c0_27 = arith.constant 0 : index
    %40 = vector.load %arg10[%c0_26, %c0_27] : memref<8x784xf32, #tpu.memory_space<vmem>>, vector<8x784xf32>
    tpu.vector_store %arg10[%c0_26, %c0_27], %39 {strides = array<i32>} : memref<8x784xf32, #tpu.memory_space<vmem>>, vector<8x784xf32>,
    return
  }
  func.func @transform_0(%arg0: i32) -> (i32, i32) {
    %c0_i32 = arith.constant 0 : i32
    %c0_i32_0 = arith.constant 0 : i32
    return %arg0, %c0_i32 : i32, i32
  }
  func.func @transform_1(%arg0: i32) -> (i32, i32) {
    %c0_i32 = arith.constant 0 : i32
    %c0_i32_0 = arith.constant 0 : i32
    %c0_i32_1 = arith.constant 0 : i32
    return %c0_i32, %c0_i32_0 : i32, i32
  }
  func.func @transform_2(%arg0: i32) -> (i32, i32) {
    %c0_i32 = arith.constant 0 : i32
    %c0_i32_0 = arith.constant 0 : i32
    %c0_i32_1 = arith.constant 0 : i32
    return %c0_i32, %c0_i32_0 : i32, i32
  }
  func.func @transform_3(%arg0: i32) -> (i32, i32) {
    %c0_i32 = arith.constant 0 : i32
    %c0_i32_0 = arith.constant 0 : i32
    %c0_i32_1 = arith.constant 0 : i32
    return %c0_i32, %c0_i32_0 : i32, i32
  }
  func.func @transform_4(%arg0: i32) -> (i32, i32) {
    %c0_i32 = arith.constant 0 : i32
    %c0_i32_0 = arith.constant 0 : i32
    %c0_i32_1 = arith.constant 0 : i32
    return %c0_i32, %c0_i32_0 : i32, i32
  }
  func.func @transform_5(%arg0: i32) -> (i32, i32) {
    %c0_i32 = arith.constant 0 : i32
    %c0_i32_0 = arith.constant 0 : i32
    %c0_i32_1 = arith.constant 0 : i32
    return %c0_i32, %c0_i32_0 : i32, i32
  }
  func.func @transform_6(%arg0: i32) -> (i32, i32) {
    %c0_i32 = arith.constant 0 : i32
    %c0_i32_0 = arith.constant 0 : i32
    %c0_i32_1 = arith.constant 0 : i32
    return %c0_i32, %c0_i32_0 : i32, i32
  }
  func.func @transform_7(%arg0: i32) -> (i32, i32) {
    %c0_i32 = arith.constant 0 : i32
    %c0_i32_0 = arith.constant 0 : i32
    %c0_i32_1 = arith.constant 0 : i32
    return %c0_i32, %c0_i32_0 : i32, i32
  }
  func.func @transform_8(%arg0: i32) -> (i32, i32) {
    %c0_i32 = arith.constant 0 : i32
    %c0_i32_0 = arith.constant 0 : i32
    %c0_i32_1 = arith.constant 0 : i32
    return %c0_i32, %c0_i32_0 : i32, i32
  }
  func.func @transform_9(%arg0: i32) -> (i32, i32) {
    %c0_i32 = arith.constant 0 : i32
    %c0_i32_0 = arith.constant 0 : i32
    return %arg0, %c0_i32 : i32, i32
  }
}

</mosaic_0001>

<llo_original>
// kernel: tpu_custom_call.1
$region0: #{tpu_custom_call.1}
  #allocation0 [shape = 'u32[]', space=smem, size = 0x4, offset = 0x4, fixed_abs, tag = 'smem constant byte address 0x4 - core index']
  #allocation1 [shape = 'u32[144,128]{1,0:T(1,128)}', space=vmem, size = 0x12000, scoped, tag = 'internal scratch']
  %s0 = inlined_call_operand.hbm [shape: f32[16,128], index: 0, kind: input, shape index: {}]
  %s1 = inlined_call_operand.hbm [shape: f32[8,128], index: 1, kind: input, shape index: {}]
  %s2 = inlined_call_operand.hbm [shape: f32[16,128], index: 2, kind: output, shape index: {}]
  %s3 = sld [smem:[#allocation0]]
  $region49: #{tpu_custom_call.1} parent=0
    _
  %s5 = ssub.s32 1, %s3
  %s6 = scalar_select 0, %s5, %s3
  $region1: #{tpu_custom_call.1} parent=0
    #allocation2 [shape = 'u8[8192]{0}', space=vmem, size = 0x2000, scoped, tag = 'input window, operand 0']
    #allocation3 [shape = 's32[2]{0}', space=sflag, size = 0x8, scoped, tag = 'scoped memory for tpu_custom_call.1']
    #allocation4 [shape = 's32[2]{0}', space=sflag, size = 0x8, scoped, tag = 'scoped memory for tpu_custom_call.1']
    #allocation5 [shape = 'u8[4096]{0}', space=vmem, size = 0x1000, scoped, tag = 'input window, operand 1, single buffered']
    #allocation6 [shape = 's32[1]{0}', space=sflag, size = 0x4, scoped, tag = 'scoped memory for tpu_custom_call.1']
    #allocation7 [shape = 'u8[8192]{0}', space=vmem, size = 0x2000, scoped, tag = 'output window, operand 0']
    %7 = vsyncpa [#allocation3], 0
    %s8 = scalar_lea.sflag [#allocation3], 1
    %9 = vsyncpa %s8, 0
    %10 = vsyncpa [#allocation6], 0
    %11 = vsyncpa [#allocation4], 0
    %s12 = scalar_lea.sflag [#allocation4], 1
    %13 = vsyncpa %s12, 0
    loop: start=0, step=1, limit=4
    $region2: #{tpu_custom_call.1} parent=1 // loop_pre_header
      _
    $region3: #{tpu_custom_call.1} parent=1 // loop_header
      %s15 = sphi 0, %s19
      %p16 = scmp.ge.s32.totalorder %s15, 4
      %s25 = sphi 0, %s27
      %s28 = sphi 0, %s25
      %s29 = sphi 0, %s28
      %s45 = sphi 0, %s29
      %s49 = sphi 0, %s49
      %s51 = sphi 0, %s49
      %s52 = sphi 0, %s51
      %s66 = sphi 0, %s52
      %s72 = sphi 0, %s74
      %s75 = sphi 0, %s72
      %s76 = sphi 0, %s75
      %s92 = sphi 0, %s76
    $region4: #{tpu_custom_call.1} parent=1 // loop_header_branch
      %18 = sbr.rel (%p16) target = $region8
    $region5: #{tpu_custom_call.1} parent=1 // loop_body
      %s20 = ssub.s32 %s15, 1
      %s21 = ssub.s32 %s15, 2
      %s22 = sadd.s32 %s15, 1
      %s23 = ssub.s32 %s15, %s22
      %p24 = scmp.eq.s32.totalorder %s23, 0
      %s26 = sadd.s32 %s25, 1
      %s27 = scalar_select %p24, %s25, %s26
      %p30 = pneg %p24
      %p31 = scmp.eq.s32.totalorder %s15, 1
      %p32 = por %p30, %p31
      %p33 = scmp.ne.s32.totalorder %s25, %s28
      %p34 = scmp.eq.s32.totalorder %s15, 0
      %p35 = por %p33, %p34
      %p36 = scmp.ne.s32.totalorder %s25, %s28
      %p37 = scmp.eq.s32.totalorder %s20, 1
      %p38 = por %p36, %p37
      %p39 = scmp.ne.s32.totalorder %s28, %s29
      %p40 = scmp.eq.s32.totalorder %s20, 0
      %p41 = por %p39, %p40
      %p42 = scmp.ne.s32.totalorder %s28, %s29
      %p43 = scmp.eq.s32.totalorder %s21, 1
      %p44 = por %p42, %p43
      %p46 = scmp.ne.s32.totalorder %s29, %s45
      %p47 = scmp.eq.s32.totalorder %s21, 0
      %p48 = por %p46, %p47
      %s50 = sadd.s32 %s49, 1
      %p53 = scmp.eq.s32.totalorder %s15, 1
      %p54 = scmp.ne.s32.totalorder %s49, %s51
      %p55 = scmp.eq.s32.totalorder %s15, 0
      %p56 = por %p54, %p55
      %p57 = scmp.ne.s32.totalorder %s49, %s51
      %p58 = scmp.eq.s32.totalorder %s20, 1
      %p59 = por %p57, %p58
      %p60 = scmp.ne.s32.totalorder %s51, %s52
      %p61 = scmp.eq.s32.totalorder %s20, 0
      %p62 = por %p60, %p61
      %p63 = scmp.ne.s32.totalorder %s51, %s52
      %p64 = scmp.eq.s32.totalorder %s21, 1
      %p65 = por %p63, %p64
      %p67 = scmp.ne.s32.totalorder %s52, %s66
      %p68 = scmp.eq.s32.totalorder %s21, 0
      %p69 = por %p67, %p68
      %s70 = ssub.s32 %s15, %s22
      %p71 = scmp.eq.s32.totalorder %s70, 0
      %s73 = sadd.s32 %s72, 1
      %s74 = scalar_select %p71, %s72, %s73
      %p77 = pneg %p71
      %p78 = scmp.eq.s32.totalorder %s15, 1
      %p79 = por %p77, %p78
      %p80 = scmp.ne.s32.totalorder %s72, %s75
      %p81 = scmp.eq.s32.totalorder %s15, 0
      %p82 = por %p80, %p81
      %p83 = scmp.ne.s32.totalorder %s72, %s75
      %p84 = scmp.eq.s32.totalorder %s20, 1
      %p85 = por %p83, %p84
      %p86 = scmp.ne.s32.totalorder %s75, %s76
      %p87 = scmp.eq.s32.totalorder %s20, 0
      %p88 = por %p86, %p87
      %p89 = scmp.ne.s32.totalorder %s75, %s76
      %p90 = scmp.eq.s32.totalorder %s21, 1
      %p91 = por %p89, %p90
      %p93 = scmp.ne.s32.totalorder %s76, %s92
      %p94 = scmp.eq.s32.totalorder %s21, 0
      %p95 = por %p93, %p94
      %p96 = scmp.le.s32.totalorder 1, %s15
      %p97 = scmp.lt.s32.totalorder %s15, 3
      %p98 = pnand %p96, %p97
      %p99 = pneg %p98
      // Predicated region
      $region9: #{tpu_custom_call.1} parent=5 // pred_check
        _
      $region10: #{tpu_custom_call.1} parent=5 // pred_check_branch
        %101 = sbr.rel (%p98) target = $region12
      $region11: #{tpu_custom_call.1} parent=5 // pred_region
        %s102 = ssub.s32 %s15, 1
        // Predicated region
        $region13: #{tpu_custom_call.1} parent=11 // pred_check
          %p103 = pneg %p62
        $region14: #{tpu_custom_call.1} parent=11 // pred_check_branch
          %105 = sbr.rel (%p103) target = $region16
        $region15: #{tpu_custom_call.1} parent=11 // pred_region
          %s107 = ssub.s32 128, 128
          %108 = vsyncadd [#allocation6], %s107
          %s110 = sshll.u32 [#allocation5], 4
          %s111 = int_to_ptr.vmem [resolvable:$true] %s110
          %113 = dma.hbm_to_vmem [thread:$0]  %s1, 128, %s111, [#allocation6]
        $region16: #{tpu_custom_call.1} parent=11 // pred_fallthru
          _
      $region12: #{tpu_custom_call.1} parent=5 // pred_fallthru
        _
      %p114 = scmp.lt.s32.totalorder %s15, 2
      // Predicated region
      $region17: #{tpu_custom_call.1} parent=5 // pred_check
        %p115 = pneg %p114
      $region18: #{tpu_custom_call.1} parent=5 // pred_check_branch
        %117 = sbr.rel (%p115) target = $region20
      $region19: #{tpu_custom_call.1} parent=5 // pred_region
        // Predicated region
        $region21: #{tpu_custom_call.1} parent=19 // pred_check
          %p118 = pneg %p35
        $region22: #{tpu_custom_call.1} parent=19 // pred_check_branch
          %120 = sbr.rel (%p118) target = $region24
        $region23: #{tpu_custom_call.1} parent=19 // pred_region
          %s121 = sand.u32 %s25, 1
          %s122 = scalar_lea.sflag [#allocation3], %s121
          %s123 = sand.u32 %s25, 1
          %s124 = smul.addr %s123, 8
          %s125 = scalar_lea.vmem [#allocation2], %s124
          %s127 = ssub.s32 128, 128
          %128 = vsyncadd %s122, %s127
          %s129 = smul.addr %s15, 128
          %s130 = scalar_lea.hbm %s0, %s129
          %s132 = sshll.u32 %s125, 4
          %s133 = int_to_ptr.vmem [resolvable:$true] %s132
          %135 = dma.hbm_to_vmem [thread:$0]  %s130, 128, %s133, %s122
        $region24: #{tpu_custom_call.1} parent=19 // pred_fallthru
          _
      $region20: #{tpu_custom_call.1} parent=5 // pred_fallthru
        _
      %p136 = scmp.le.s32.totalorder 1, %s15
      %p137 = scmp.lt.s32.totalorder %s15, 3
      %p138 = pnand %p136, %p137
      %p139 = pneg %p138
      // Predicated region
      $region25: #{tpu_custom_call.1} parent=5 // pred_check
        _
      $region26: #{tpu_custom_call.1} parent=5 // pred_check_branch
        %141 = sbr.rel (%p138) target = $region28
      $region27: #{tpu_custom_call.1} parent=5 // pred_region
        %s142 = ssub.s32 %s15, 1
        %s143 = sand.u32 %s28, 1
        %s144 = scalar_lea.sflag [#allocation3], %s143
        %s145 = sand.u32 %s28, 1
        %s146 = smul.addr %s145, 8
        %s147 = scalar_lea.vmem [#allocation2], %s146
        // Predicated region
        $region29: #{tpu_custom_call.1} parent=27 // pred_check
          %p148 = pneg %p41
        $region30: #{tpu_custom_call.1} parent=27 // pred_check_branch
          %150 = sbr.rel (%p148) target = $region32
        $region31: #{tpu_custom_call.1} parent=27 // pred_region
          %151 = dma.done %s144, 128
        $region32: #{tpu_custom_call.1} parent=27 // pred_fallthru
          _
        // Predicated region
        $region33: #{tpu_custom_call.1} parent=27 // pred_check
          %p152 = pneg %p62
        $region34: #{tpu_custom_call.1} parent=27 // pred_check_branch
          %154 = sbr.rel (%p152) target = $region36
        $region35: #{tpu_custom_call.1} parent=27 // pred_region
          %155 = dma.done [#allocation6], 128
        $region36: #{tpu_custom_call.1} parent=27 // pred_fallthru
          _
        %s156 = sand.u32 %s28, 1
        %s157 = scalar_lea.sflag [#allocation3], %s156
        %s158 = sand.u32 %s28, 1
        %s159 = smul.addr %s158, 8
        %s160 = scalar_lea.vmem [#allocation2], %s159
        %p161 = pneg %p41
        %p162 = pneg %p38
        %p163 = pneg %p62
        %p164 = pneg %p59
        %p165 = pneg %p88
        %p166 = pneg %p85
        %s167 = sand.u32 %s75, 1
        %s168 = scalar_lea.sflag [#allocation4], %s167
        %s169 = sand.u32 %s75, 1
        %s170 = smul.addr %s169, 8
        %s171 = scalar_lea.vmem [#allocation7], %s170
        %v172 = vld [vmem:[%s147] sm:$0xff]
        %v173 = vld [vmem:[#allocation5] sm:$0xff]
        %v174 = vadd.f32 %v172, %v173
        %175 = vst [vmem:[%s171] sm:$0xff] %v174
        %s176 = sand.u32 %s75, 1
        %s177 = scalar_lea.sflag [#allocation4], %s176
        %s178 = sand.u32 %s75, 1
        %s179 = smul.addr %s178, 8
        %s180 = scalar_lea.vmem [#allocation7], %s179
        // Predicated region
        $region37: #{tpu_custom_call.1} parent=27 // pred_check
          %p181 = pneg %p85
        $region38: #{tpu_custom_call.1} parent=27 // pred_check_branch
          %183 = sbr.rel (%p181) target = $region40
        $region39: #{tpu_custom_call.1} parent=27 // pred_region
          %s185 = ssub.s32 128, 128
          %186 = vsyncadd %s177, %s185
          %s187 = smul.addr %s20, 128
          %s188 = scalar_lea.hbm %s2, %s187
          %s190 = sshll.u32 %s180, 4
          %s191 = int_to_ptr.vmem [resolvable:$true] %s190
          %193 = dma.vmem_to_hbm [thread:$0]  %s191, 128, %s188, %s177
        $region40: #{tpu_custom_call.1} parent=27 // pred_fallthru
          _
      $region28: #{tpu_custom_call.1} parent=5 // pred_fallthru
        _
      %p194 = scmp.le.s32.totalorder 2, %s15
      // Predicated region
      $region41: #{tpu_custom_call.1} parent=5 // pred_check
        %p195 = pneg %p194
      $region42: #{tpu_custom_call.1} parent=5 // pred_check_branch
        %197 = sbr.rel (%p195) target = $region44
      $region43: #{tpu_custom_call.1} parent=5 // pred_region
        %s198 = ssub.s32 %s15, 2
        // Predicated region
        $region45: #{tpu_custom_call.1} parent=43 // pred_check
          %p199 = pneg %p91
        $region46: #{tpu_custom_call.1} parent=43 // pred_check_branch
          %201 = sbr.rel (%p199) target = $region48
        $region47: #{tpu_custom_call.1} parent=43 // pred_region
          %s202 = sand.u32 %s76, 1
          %s203 = scalar_lea.sflag [#allocation4], %s202
          %s204 = sand.u32 %s76, 1
          %s205 = smul.addr %s204, 8
          %s206 = scalar_lea.vmem [#allocation7], %s205
          %207 = dma.done %s203, 128
        $region48: #{tpu_custom_call.1} parent=43 // pred_fallthru
          _
      $region44: #{tpu_custom_call.1} parent=5 // pred_fallthru
        _
    $region6: #{tpu_custom_call.1} parent=1 // loop_footer
      %s19 = sadd.s32 1, %s15
    $region7: #{tpu_custom_call.1} parent=1 // loop_footer_branch
      %14 = sbr.rel target = $region3
    $region8: #{tpu_custom_call.1} parent=1 // loop_exit
      _
    %208 = vsyncpa [#allocation3], 1
    %s209 = scalar_lea.sflag [#allocation3], 1
    %210 = vsyncpa %s209, 1
    %211 = vsyncpa [#allocation6], 1
    %212 = vsyncpa [#allocation4], 1
    %s213 = scalar_lea.sflag [#allocation4], 1
    %214 = vsyncpa %s213, 1

// kernel: tpu_custom_call.1
$region0: #{tpu_custom_call.1}
  #allocation0 [shape = 'u32[]', space=smem, size = 0x4, offset = 0x4, fixed_abs, tag = 'smem constant byte address 0x4 - core index']
  #allocation1 [shape = 'u32[144,128]{1,0:T(1,128)}', space=vmem, size = 0x12000, scoped, tag = 'internal scratch']
  %s0 = inlined_call_operand.vmem [shape: bf16[8,128], index: 0, kind: input, shape index: {}]
  %s1 = inlined_call_operand.vmem [shape: bf16[128,256], index: 1, kind: input, shape index: {}]
  %s2 = inlined_call_operand.vmem [shape: f32[1,256], index: 2, kind: input, shape index: {}]
  %s3 = inlined_call_operand.vmem [shape: bf16[256,512], index: 3, kind: input, shape index: {}]
  %s4 = inlined_call_operand.vmem [shape: f32[1,512], index: 4, kind: input, shape index: {}]
  %s5 = inlined_call_operand.vmem [shape: bf16[512,1024], index: 5, kind: input, shape index: {}]
  %s6 = inlined_call_operand.vmem [shape: f32[1,1024], index: 6, kind: input, shape index: {}]
  %s7 = inlined_call_operand.vmem [shape: bf16[1024,784], index: 7, kind: input, shape index: {}]
  %s8 = inlined_call_operand.vmem [shape: f32[1,784], index: 8, kind: input, shape index: {}]
  %s9 = inlined_call_operand.hbm [shape: f32[8,784], index: 9, kind: output, shape index: {}]
  %s10 = sld [smem:[#allocation0]]
  $region46: #{tpu_custom_call.1} parent=0
    _
  %s12 = ssub.s32 1, %s10
  %s13 = scalar_select 0, %s12, %s10
  $region1: #{tpu_custom_call.1} parent=0
    #allocation2 [shape = 'u8[28672]{0}', space=vmem, size = 0x7000, scoped, tag = 'output window, operand 0, single buffered']
    #allocation3 [shape = 's32[1]{0}', space=sflag, size = 0x4, scoped, tag = 'scoped memory for tpu_custom_call.1']
    %14 = vsyncpa [#allocation3], 0
    // Predicated region
    $region2: #{tpu_custom_call.1} parent=1 // pred_check
      _
    $region3: #{tpu_custom_call.1} parent=1 // pred_check_branch
      %16 = sbr.rel (0) target = $region5
    $region4: #{tpu_custom_call.1} parent=1 // pred_region
      _
    $region5: #{tpu_custom_call.1} parent=1 // pred_fallthru
      _
    // Predicated region
    $region6: #{tpu_custom_call.1} parent=1 // pred_check
      _
    $region7: #{tpu_custom_call.1} parent=1 // pred_check_branch
      %18 = sbr.rel (0) target = $region9
    $region8: #{tpu_custom_call.1} parent=1 // pred_region
      _
    $region9: #{tpu_custom_call.1} parent=1 // pred_fallthru
      _
    // Predicated region
    $region10: #{tpu_custom_call.1} parent=1 // pred_check
      _
    $region11: #{tpu_custom_call.1} parent=1 // pred_check_branch
      %20 = sbr.rel (0) target = $region13
    $region12: #{tpu_custom_call.1} parent=1 // pred_region
      _
    $region13: #{tpu_custom_call.1} parent=1 // pred_fallthru
      _
    // Predicated region
    $region14: #{tpu_custom_call.1} parent=1 // pred_check
      _
    $region15: #{tpu_custom_call.1} parent=1 // pred_check_branch
      %22 = sbr.rel (0) target = $region17
    $region16: #{tpu_custom_call.1} parent=1 // pred_region
      _
    $region17: #{tpu_custom_call.1} parent=1 // pred_fallthru
      _
    // Predicated region
    $region18: #{tpu_custom_call.1} parent=1 // pred_check
      _
    $region19: #{tpu_custom_call.1} parent=1 // pred_check_branch
      %24 = sbr.rel (0) target = $region21
    $region20: #{tpu_custom_call.1} parent=1 // pred_region
      _
    $region21: #{tpu_custom_call.1} parent=1 // pred_fallthru
      _
    // Predicated region
    $region22: #{tpu_custom_call.1} parent=1 // pred_check
      _
    $region23: #{tpu_custom_call.1} parent=1 // pred_check_branch
      %26 = sbr.rel (0) target = $region25
    $region24: #{tpu_custom_call.1} parent=1 // pred_region
      _
    $region25: #{tpu_custom_call.1} parent=1 // pred_fallthru
      _
    // Predicated region
    $region26: #{tpu_custom_call.1} parent=1 // pred_check
      _
    $region27: #{tpu_custom_call.1} parent=1 // pred_check_branch
      %28 = sbr.rel (0) target = $region29
    $region28: #{tpu_custom_call.1} parent=1 // pred_region
      _
    $region29: #{tpu_custom_call.1} parent=1 // pred_fallthru
      _
    // Predicated region
    $region30: #{tpu_custom_call.1} parent=1 // pred_check
      _
    $region31: #{tpu_custom_call.1} parent=1 // pred_check_branch
      %30 = sbr.rel (0) target = $region33
    $region32: #{tpu_custom_call.1} parent=1 // pred_region
      _
    $region33: #{tpu_custom_call.1} parent=1 // pred_fallthru
      _
    // Predicated region
    $region34: #{tpu_custom_call.1} parent=1 // pred_check
      _
    $region35: #{tpu_custom_call.1} parent=1 // pred_check_branch
      %32 = sbr.rel (0) target = $region37
    $region36: #{tpu_custom_call.1} parent=1 // pred_region
      _
    $region37: #{tpu_custom_call.1} parent=1 // pred_fallthru
      _
    %v34 = vld [vmem:[%s0] sm:$0xf]
    %v35 = vld [vmem:[%s1] sm:$0xff]
    %v36 = vld [vmem:[%s1 + $0x8] sm:$0xff]
    %v37 = vld [vmem:[%s1 + $0x10] sm:$0xff]
    %v38 = vld [vmem:[%s1 + $0x18] sm:$0xff]
    %v39 = vld [vmem:[%s1 + $0x20] sm:$0xff]
    %v40 = vld [vmem:[%s1 + $0x28] sm:$0xff]
    %v41 = vld [vmem:[%s1 + $0x30] sm:$0xff]
    %v42 = vld [vmem:[%s1 + $0x38] sm:$0xff]
    %v43 = vld [vmem:[%s1 + $0x40] sm:$0xff]
    %v44 = vld [vmem:[%s1 + $0x48] sm:$0xff]
    %v45 = vld [vmem:[%s1 + $0x50] sm:$0xff]
    %v46 = vld [vmem:[%s1 + $0x58] sm:$0xff]
    %v47 = vld [vmem:[%s1 + $0x60] sm:$0xff]
    %v48 = vld [vmem:[%s1 + $0x68] sm:$0xff]
    %v49 = vld [vmem:[%s1 + $0x70] sm:$0xff]
    %v50 = vld [vmem:[%s1 + $0x78] sm:$0xff]
    %v51 = vld [vmem:[%s2] sm:$0x3]
    %v53 = vlaneseq
    %v54 = vshrl.u32 %v53, 7
    %v55 = vsub.s32 0, %v54
    %v56 = vrot.slane %v51, %v55
    %v57 = vlaneseq
    %v58 = vshrl.u32 %v57, 7
    %v59 = vsub.s32 1, %v58
    %v60 = vrot.slane %v51, %v59
    %v79 = vunpack.c.l.b16 %v35
    %v80 = vunpack.c.h.b16 %v35
    %v81 = vunpack.c.l.b16 %v36
    %v82 = vunpack.c.h.b16 %v36
    %v83 = vunpack.c.l.b16 %v37
    %v84 = vunpack.c.h.b16 %v37
    %v85 = vunpack.c.l.b16 %v38
    %v86 = vunpack.c.h.b16 %v38
    %v87 = vunpack.c.l.b16 %v39
    %v88 = vunpack.c.h.b16 %v39
    %v89 = vunpack.c.l.b16 %v40
    %v90 = vunpack.c.h.b16 %v40
    %v91 = vunpack.c.l.b16 %v41
    %v92 = vunpack.c.h.b16 %v41
    %v93 = vunpack.c.l.b16 %v42
    %v94 = vunpack.c.h.b16 %v42
    %v95 = vunpack.c.l.b16 %v43
    %v96 = vunpack.c.h.b16 %v43
    %v97 = vunpack.c.l.b16 %v44
    %v98 = vunpack.c.h.b16 %v44
    %v99 = vunpack.c.l.b16 %v45
    %v100 = vunpack.c.h.b16 %v45
    %v101 = vunpack.c.l.b16 %v46
    %v102 = vunpack.c.h.b16 %v46
    %v103 = vunpack.c.l.b16 %v47
    %v104 = vunpack.c.h.b16 %v47
    %v105 = vunpack.c.l.b16 %v48
    %v106 = vunpack.c.h.b16 %v48
    %v107 = vunpack.c.l.b16 %v49
    %v108 = vunpack.c.h.b16 %v49
    %v109 = vunpack.c.l.b16 %v50
    %v110 = vunpack.c.h.b16 %v50
    %v111 = vpack.c.b16 %v81, %v79
    %v112 = vpack.c.b16 %v82, %v80
    %v113 = vpack.c.b16 %v85, %v83
    %v114 = vpack.c.b16 %v86, %v84
    %v115 = vpack.c.b16 %v89, %v87
    %v116 = vpack.c.b16 %v90, %v88
    %v117 = vpack.c.b16 %v93, %v91
    %v118 = vpack.c.b16 %v94, %v92
    %v119 = vpack.c.b16 %v97, %v95
    %v120 = vpack.c.b16 %v98, %v96
    %v121 = vpack.c.b16 %v101, %v99
    %v122 = vpack.c.b16 %v102, %v100
    %v123 = vpack.c.b16 %v105, %v103
    %v124 = vpack.c.b16 %v106, %v104
    %v125 = vpack.c.b16 %v109, %v107
    %v126 = vpack.c.b16 %v110, %v108
    %143 = vmatprep.subr.bf16.mxu0 %v112
    %144 = vmatpush1.bf16.msra.mxu0 %v111
    %145 = vmatprep.subr.bf16.mxu0 %v114
    %146 = vmatpush1.bf16.msra.mxu0 %v113
    %147 = vmatprep.subr.bf16.mxu0 %v116
    %148 = vmatpush1.bf16.msra.mxu0 %v115
    %149 = vmatprep.subr.bf16.mxu0 %v118
    %150 = vmatpush1.bf16.msra.mxu0 %v117
    %151 = vmatprep.subr.bf16.mxu0 %v120
    %152 = vmatpush1.bf16.msra.mxu0 %v119
    %153 = vmatprep.subr.bf16.mxu0 %v122
    %154 = vmatpush1.bf16.msra.mxu0 %v121
    %155 = vmatprep.subr.bf16.mxu0 %v124
    %156 = vmatpush1.bf16.msra.mxu0 %v123
    %157 = vmatprep.subr.bf16.mxu0 %v126
    %158 = vmatpush1.bf16.msra.mxu0 %v125
    %159 = vmatprep.subr.bf16.mxu0 0
    %160 = vmatpush1.bf16.msra.mxu0 0
    %161 = vmatprep.subr.bf16.mxu0 0
    %162 = vmatpush1.bf16.msra.mxu0 0
    %163 = vmatprep.subr.bf16.mxu0 0
    %164 = vmatpush1.bf16.msra.mxu0 0
    %165 = vmatprep.subr.bf16.mxu0 0
    %166 = vmatpush1.bf16.msra.mxu0 0
    %167 = vmatprep.subr.bf16.mxu0 0
    %168 = vmatpush1.bf16.msra.mxu0 0
    %169 = vmatprep.subr.bf16.mxu0 0
    %170 = vmatpush1.bf16.msra.mxu0 0
    %171 = vmatprep.subr.bf16.mxu0 0
    %172 = vmatpush1.bf16.msra.mxu0 0
    %173 = vmatprep.subr.bf16.mxu0 0
    %174 = vmatpush1.bf16.msra.mxu0 0
    %175 = vmatprep.mubr.bf16.mxu0 0
    %176 = vmatmul.mubr.bf16.gmra.mrb[0].mxu0 %v34
    %v177 = vpop.f32.mrb[0].mxu0
    %v178 = vadd.f32 %v56, %v177
    %v179 = vpop.f32.mrb[0].mxu0
    %v180 = vadd.f32 %v60, %v179
    %v181 = vpop.f32.mrb[0].mxu0
    %v182 = vpop.f32.mrb[0].mxu0
    %183 = vdwg.mxu0
    %vm184 = vcmp.gt.f32.partialorder %v178, 0.0
    %vm185 = vcmp.gt.f32.partialorder %v180, 0.0
    %v186 = vmul.f32 %v178, 0.2
    %v187 = vmul.f32 %v180, 0.2
    %v188 = vsel %vm184, %v178, %v186
    %v189 = vsel %vm185, %v180, %v187
    %v190 = vpack.c.bf16 %v188, %v188
    %v191 = vpack.c.bf16 %v189, %v189
    %v192 = vld [vmem:[%s3] sm:$0xff]
    %v193 = vld [vmem:[%s3 + $0x8] sm:$0xff]
    %v194 = vld [vmem:[%s3 + $0x10] sm:$0xff]
    %v195 = vld [vmem:[%s3 + $0x18] sm:$0xff]
    %v196 = vld [vmem:[%s3 + $0x20] sm:$0xff]
    %v197 = vld [vmem:[%s3 + $0x28] sm:$0xff]
    %v198 = vld [vmem:[%s3 + $0x30] sm:$0xff]
    %v199 = vld [vmem:[%s3 + $0x38] sm:$0xff]
    %v200 = vld [vmem:[%s3 + $0x40] sm:$0xff]
    %v201 = vld [vmem:[%s3 + $0x48] sm:$0xff]
    %v202 = vld [vmem:[%s3 + $0x50] sm:$0xff]
    %v203 = vld [vmem:[%s3 + $0x58] sm:$0xff]
    %v204 = vld [vmem:[%s3 + $0x60] sm:$0xff]
    %v205 = vld [vmem:[%s3 + $0x68] sm:$0xff]
    %v206 = vld [vmem:[%s3 + $0x70] sm:$0xff]
    %v207 = vld [vmem:[%s3 + $0x78] sm:$0xff]
    %v208 = vld [vmem:[%s3 + $0x80] sm:$0xff]
    %v209 = vld [vmem:[%s3 + $0x88] sm:$0xff]
    %v210 = vld [vmem:[%s3 + $0x90] sm:$0xff]
    %v211 = vld [vmem:[%s3 + $0x98] sm:$0xff]
    %v212 = vld [vmem:[%s3 + $0xa0] sm:$0xff]
    %v213 = vld [vmem:[%s3 + $0xa8] sm:$0xff]
    %v214 = vld [vmem:[%s3 + $0xb0] sm:$0xff]
    %v215 = vld [vmem:[%s3 + $0xb8] sm:$0xff]
    %v216 = vld [vmem:[%s3 + $0xc0] sm:$0xff]
    %v217 = vld [vmem:[%s3 + $0xc8] sm:$0xff]
    %v218 = vld [vmem:[%s3 + $0xd0] sm:$0xff]
    %v219 = vld [vmem:[%s3 + $0xd8] sm:$0xff]
    %v220 = vld [vmem:[%s3 + $0xe0] sm:$0xff]
    %v221 = vld [vmem:[%s3 + $0xe8] sm:$0xff]
    %v222 = vld [vmem:[%s3 + $0xf0] sm:$0xff]
    %v223 = vld [vmem:[%s3 + $0xf8] sm:$0xff]
    %v224 = vld [vmem:[%s3 + $0x100] sm:$0xff]
    %v225 = vld [vmem:[%s3 + $0x108] sm:$0xff]
    %v226 = vld [vmem:[%s3 + $0x110] sm:$0xff]
    %v227 = vld [vmem:[%s3 + $0x118] sm:$0xff]
    %v228 = vld [vmem:[%s3 + $0x120] sm:$0xff]
    %v229 = vld [vmem:[%s3 + $0x128] sm:$0xff]
    %v230 = vld [vmem:[%s3 + $0x130] sm:$0xff]
    %v231 = vld [vmem:[%s3 + $0x138] sm:$0xff]
    %v232 = vld [vmem:[%s3 + $0x140] sm:$0xff]
    %v233 = vld [vmem:[%s3 + $0x148] sm:$0xff]
    %v234 = vld [vmem:[%s3 + $0x150] sm:$0xff]
    %v235 = vld [vmem:[%s3 + $0x158] sm:$0xff]
    %v236 = vld [vmem:[%s3 + $0x160] sm:$0xff]
    %v237 = vld [vmem:[%s3 + $0x168] sm:$0xff]
    %v238 = vld [vmem:[%s3 + $0x170] sm:$0xff]
    %v239 = vld [vmem:[%s3 + $0x178] sm:$0xff]
    %v240 = vld [vmem:[%s3 + $0x180] sm:$0xff]
    %v241 = vld [vmem:[%s3 + $0x188] sm:$0xff]
    %v242 = vld [vmem:[%s3 + $0x190] sm:$0xff]
    %v243 = vld [vmem:[%s3 + $0x198] sm:$0xff]
    %v244 = vld [vmem:[%s3 + $0x1a0] sm:$0xff]
    %v245 = vld [vmem:[%s3 + $0x1a8] sm:$0xff]
    %v246 = vld [vmem:[%s3 + $0x1b0] sm:$0xff]
    %v247 = vld [vmem:[%s3 + $0x1b8] sm:$0xff]
    %v248 = vld [vmem:[%s3 + $0x1c0] sm:$0xff]
    %v249 = vld [vmem:[%s3 + $0x1c8] sm:$0xff]
    %v250 = vld [vmem:[%s3 + $0x1d0] sm:$0xff]
    %v251 = vld [vmem:[%s3 + $0x1d8] sm:$0xff]
    %v252 = vld [vmem:[%s3 + $0x1e0] sm:$0xff]
    %v253 = vld [vmem:[%s3 + $0x1e8] sm:$0xff]
    %v254 = vld [vmem:[%s3 + $0x1f0] sm:$0xff]
    %v255 = vld [vmem:[%s3 + $0x1f8] sm:$0xff]
    %v256 = vld [vmem:[%s4] sm:$0xf]
    %v258 = vlaneseq
    %v259 = vshrl.u32 %v258, 7
    %v260 = vsub.s32 0, %v259
    %v261 = vrot.slane %v256, %v260
    %v262 = vlaneseq
    %v263 = vshrl.u32 %v262, 7
    %v264 = vsub.s32 1, %v263
    %v265 = vrot.slane %v256, %v264
    %v266 = vlaneseq
    %v267 = vshrl.u32 %v266, 7
    %v268 = vsub.s32 2, %v267
    %v269 = vrot.slane %v256, %v268
    %v270 = vlaneseq
    %v271 = vshrl.u32 %v270, 7
    %v272 = vsub.s32 3, %v271
    %v273 = vrot.slane %v256, %v272
    %v342 = vunpack.c.l.b16 %v192
    %v343 = vunpack.c.h.b16 %v192
    %v344 = vunpack.c.l.b16 %v193
    %v345 = vunpack.c.h.b16 %v193
    %v346 = vunpack.c.l.b16 %v194
    %v347 = vunpack.c.h.b16 %v194
    %v348 = vunpack.c.l.b16 %v195
    %v349 = vunpack.c.h.b16 %v195
    %v350 = vunpack.c.l.b16 %v196
    %v351 = vunpack.c.h.b16 %v196
    %v352 = vunpack.c.l.b16 %v197
    %v353 = vunpack.c.h.b16 %v197
    %v354 = vunpack.c.l.b16 %v198
    %v355 = vunpack.c.h.b16 %v198
    %v356 = vunpack.c.l.b16 %v199
    %v357 = vunpack.c.h.b16 %v199
    %v358 = vunpack.c.l.b16 %v200
    %v359 = vunpack.c.h.b16 %v200
    %v360 = vunpack.c.l.b16 %v201
    %v361 = vunpack.c.h.b16 %v201
    %v362 = vunpack.c.l.b16 %v202
    %v363 = vunpack.c.h.b16 %v202
    %v364 = vunpack.c.l.b16 %v203
    %v365 = vunpack.c.h.b16 %v203
    %v366 = vunpack.c.l.b16 %v204
    %v367 = vunpack.c.h.b16 %v204
    %v368 = vunpack.c.l.b16 %v205
    %v369 = vunpack.c.h.b16 %v205
    %v370 = vunpack.c.l.b16 %v206
    %v371 = vunpack.c.h.b16 %v206
    %v372 = vunpack.c.l.b16 %v207
    %v373 = vunpack.c.h.b16 %v207
    %v374 = vunpack.c.l.b16 %v208
    %v375 = vunpack.c.h.b16 %v208
    %v376 = vunpack.c.l.b16 %v209
    %v377 = vunpack.c.h.b16 %v209
    %v378 = vunpack.c.l.b16 %v210
    %v379 = vunpack.c.h.b16 %v210
    %v380 = vunpack.c.l.b16 %v211
    %v381 = vunpack.c.h.b16 %v211
    %v382 = vunpack.c.l.b16 %v212
    %v383 = vunpack.c.h.b16 %v212
    %v384 = vunpack.c.l.b16 %v213
    %v385 = vunpack.c.h.b16 %v213
    %v386 = vunpack.c.l.b16 %v214
    %v387 = vunpack.c.h.b16 %v214
    %v388 = vunpack.c.l.b16 %v215
    %v389 = vunpack.c.h.b16 %v215
    %v390 = vunpack.c.l.b16 %v216
    %v391 = vunpack.c.h.b16 %v216
    %v392 = vunpack.c.l.b16 %v217
    %v393 = vunpack.c.h.b16 %v217
    %v394 = vunpack.c.l.b16 %v218
    %v395 = vunpack.c.h.b16 %v218
    %v396 = vunpack.c.l.b16 %v219
    %v397 = vunpack.c.h.b16 %v219
    %v398 = vunpack.c.l.b16 %v220
    %v399 = vunpack.c.h.b16 %v220
    %v400 = vunpack.c.l.b16 %v221
    %v401 = vunpack.c.h.b16 %v221
    %v402 = vunpack.c.l.b16 %v222
    %v403 = vunpack.c.h.b16 %v222
    %v404 = vunpack.c.l.b16 %v223
    %v405 = vunpack.c.h.b16 %v223
    %v406 = vunpack.c.l.b16 %v224
    %v407 = vunpack.c.h.b16 %v224
    %v408 = vunpack.c.l.b16 %v225
    %v409 = vunpack.c.h.b16 %v225
    %v410 = vunpack.c.l.b16 %v226
    %v411 = vunpack.c.h.b16 %v226
    %v412 = vunpack.c.l.b16 %v227
    %v413 = vunpack.c.h.b16 %v227
    %v414 = vunpack.c.l.b16 %v228
    %v415 = vunpack.c.h.b16 %v228
    %v416 = vunpack.c.l.b16 %v229
    %v417 = vunpack.c.h.b16 %v229
    %v418 = vunpack.c.l.b16 %v230
    %v419 = vunpack.c.h.b16 %v230
    %v420 = vunpack.c.l.b16 %v231
    %v421 = vunpack.c.h.b16 %v231
    %v422 = vunpack.c.l.b16 %v232
    %v423 = vunpack.c.h.b16 %v232
    %v424 = vunpack.c.l.b16 %v233
    %v425 = vunpack.c.h.b16 %v233
    %v426 = vunpack.c.l.b16 %v234
    %v427 = vunpack.c.h.b16 %v234
    %v428 = vunpack.c.l.b16 %v235
    %v429 = vunpack.c.h.b16 %v235
    %v430 = vunpack.c.l.b16 %v236
    %v431 = vunpack.c.h.b16 %v236
    %v432 = vunpack.c.l.b16 %v237
    %v433 = vunpack.c.h.b16 %v237
    %v434 = vunpack.c.l.b16 %v238
    %v435 = vunpack.c.h.b16 %v238
    %v436 = vunpack.c.l.b16 %v239
    %v437 = vunpack.c.h.b16 %v239
    %v438 = vunpack.c.l.b16 %v240
    %v439 = vunpack.c.h.b16 %v240
    %v440 = vunpack.c.l.b16 %v241
    %v441 = vunpack.c.h.b16 %v241
    %v442 = vunpack.c.l.b16 %v242
    %v443 = vunpack.c.h.b16 %v242
    %v444 = vunpack.c.l.b16 %v243
    %v445 = vunpack.c.h.b16 %v243
    %v446 = vunpack.c.l.b16 %v244
    %v447 = vunpack.c.h.b16 %v244
    %v448 = vunpack.c.l.b16 %v245
    %v449 = vunpack.c.h.b16 %v245
    %v450 = vunpack.c.l.b16 %v246
    %v451 = vunpack.c.h.b16 %v246
    %v452 = vunpack.c.l.b16 %v247
    %v453 = vunpack.c.h.b16 %v247
    %v454 = vunpack.c.l.b16 %v248
    %v455 = vunpack.c.h.b16 %v248
    %v456 = vunpack.c.l.b16 %v249
    %v457 = vunpack.c.h.b16 %v249
    %v458 = vunpack.c.l.b16 %v250
    %v459 = vunpack.c.h.b16 %v250
    %v460 = vunpack.c.l.b16 %v251
    %v461 = vunpack.c.h.b16 %v251
    %v462 = vunpack.c.l.b16 %v252
    %v463 = vunpack.c.h.b16 %v252
    %v464 = vunpack.c.l.b16 %v253
    %v465 = vunpack.c.h.b16 %v253
    %v466 = vunpack.c.l.b16 %v254
    %v467 = vunpack.c.h.b16 %v254
    %v468 = vunpack.c.l.b16 %v255
    %v469 = vunpack.c.h.b16 %v255
    %v470 = vpack.c.b16 %v346, %v342
    %v471 = vpack.c.b16 %v347, %v343
    %v472 = vpack.c.b16 %v348, %v344
    %v473 = vpack.c.b16 %v349, %v345
    %v474 = vpack.c.b16 %v354, %v350
    %v475 = vpack.c.b16 %v355, %v351
    %v476 = vpack.c.b16 %v356, %v352
    %v477 = vpack.c.b16 %v357, %v353
    %v478 = vpack.c.b16 %v362, %v358
    %v479 = vpack.c.b16 %v363, %v359
    %v480 = vpack.c.b16 %v364, %v360
    %v481 = vpack.c.b16 %v365, %v361
    %v482 = vpack.c.b16 %v370, %v366
    %v483 = vpack.c.b16 %v371, %v367
    %v484 = vpack.c.b16 %v372, %v368
    %v485 = vpack.c.b16 %v373, %v369
    %v486 = vpack.c.b16 %v378, %v374
    %v487 = vpack.c.b16 %v379, %v375
    %v488 = vpack.c.b16 %v380, %v376
    %v489 = vpack.c.b16 %v381, %v377
    %v490 = vpack.c.b16 %v386, %v382
    %v491 = vpack.c.b16 %v387, %v383
    %v492 = vpack.c.b16 %v388, %v384
    %v493 = vpack.c.b16 %v389, %v385
    %v494 = vpack.c.b16 %v394, %v390
    %v495 = vpack.c.b16 %v395, %v391
    %v496 = vpack.c.b16 %v396, %v392
    %v497 = vpack.c.b16 %v397, %v393
    %v498 = vpack.c.b16 %v402, %v398
    %v499 = vpack.c.b16 %v403, %v399
    %v500 = vpack.c.b16 %v404, %v400
    %v501 = vpack.c.b16 %v405, %v401
    %v502 = vpack.c.b16 %v410, %v406
    %v503 = vpack.c.b16 %v411, %v407
    %v504 = vpack.c.b16 %v412, %v408
    %v505 = vpack.c.b16 %v413, %v409
    %v506 = vpack.c.b16 %v418, %v414
    %v507 = vpack.c.b16 %v419, %v415
    %v508 = vpack.c.b16 %v420, %v416
    %v509 = vpack.c.b16 %v421, %v417
    %v510 = vpack.c.b16 %v426, %v422
    %v511 = vpack.c.b16 %v427, %v423
    %v512 = vpack.c.b16 %v428, %v424
    %v513 = vpack.c.b16 %v429, %v425
    %v514 = vpack.c.b16 %v434, %v430
    %v515 = vpack.c.b16 %v435, %v431
    %v516 = vpack.c.b16 %v436, %v432
    %v517 = vpack.c.b16 %v437, %v433
    %v518 = vpack.c.b16 %v442, %v438
    %v519 = vpack.c.b16 %v443, %v439
    %v520 = vpack.c.b16 %v444, %v440
    %v521 = vpack.c.b16 %v445, %v441
    %v522 = vpack.c.b16 %v450, %v446
    %v523 = vpack.c.b16 %v451, %v447
    %v524 = vpack.c.b16 %v452, %v448
    %v525 = vpack.c.b16 %v453, %v449
    %v526 = vpack.c.b16 %v458, %v454
    %v527 = vpack.c.b16 %v459, %v455
    %v528 = vpack.c.b16 %v460, %v456
    %v529 = vpack.c.b16 %v461, %v457
    %v530 = vpack.c.b16 %v466, %v462
    %v531 = vpack.c.b16 %v467, %v463
    %v532 = vpack.c.b16 %v468, %v464
    %v533 = vpack.c.b16 %v469, %v465
    %598 = vmatprep.subr.bf16.mxu0 %v471
    %599 = vmatpush1.bf16.msra.mxu0 %v470
    %600 = vmatprep.subr.bf16.mxu0 %v475
    %601 = vmatpush1.bf16.msra.mxu0 %v474
    %602 = vmatprep.subr.bf16.mxu0 %v479
    %603 = vmatpush1.bf16.msra.mxu0 %v478
    %604 = vmatprep.subr.bf16.mxu0 %v483
    %605 = vmatpush1.bf16.msra.mxu0 %v482
    %606 = vmatprep.subr.bf16.mxu0 %v487
    %607 = vmatpush1.bf16.msra.mxu0 %v486
    %608 = vmatprep.subr.bf16.mxu0 %v491
    %609 = vmatpush1.bf16.msra.mxu0 %v490
    %610 = vmatprep.subr.bf16.mxu0 %v495
    %611 = vmatpush1.bf16.msra.mxu0 %v494
    %612 = vmatprep.subr.bf16.mxu0 %v499
    %613 = vmatpush1.bf16.msra.mxu0 %v498
    %614 = vmatprep.subr.bf16.mxu0 %v503
    %615 = vmatpush1.bf16.msra.mxu0 %v502
    %616 = vmatprep.subr.bf16.mxu0 %v507
    %617 = vmatpush1.bf16.msra.mxu0 %v506
    %618 = vmatprep.subr.bf16.mxu0 %v511
    %619 = vmatpush1.bf16.msra.mxu0 %v510
    %620 = vmatprep.subr.bf16.mxu0 %v515
    %621 = vmatpush1.bf16.msra.mxu0 %v514
    %622 = vmatprep.subr.bf16.mxu0 %v519
    %623 = vmatpush1.bf16.msra.mxu0 %v518
    %624 = vmatprep.subr.bf16.mxu0 %v523
    %625 = vmatpush1.bf16.msra.mxu0 %v522
    %626 = vmatprep.subr.bf16.mxu0 %v527
    %627 = vmatpush1.bf16.msra.mxu0 %v526
    %628 = vmatprep.subr.bf16.mxu0 %v531
    %629 = vmatpush1.bf16.msra.mxu0 %v530
    %630 = vmatprep.mubr.bf16.mxu0 %v191
    %631 = vmatmul.mubr.bf16.gmra.mrb[0].mxu0 %v190
    %v632 = vpop.f32.mrb[0].mxu0
    %v633 = vadd.f32 %v261, %v632
    %v634 = vpop.f32.mrb[0].mxu0
    %v635 = vadd.f32 %v265, %v634
    %v636 = vpop.f32.mrb[0].mxu0
    %v637 = vpop.f32.mrb[0].mxu0
    %638 = vdwg.mxu0
    %639 = vmatprep.subr.bf16.mxu0 %v473
    %640 = vmatpush1.bf16.msra.mxu0 %v472
    %641 = vmatprep.subr.bf16.mxu0 %v477
    %642 = vmatpush1.bf16.msra.mxu0 %v476
    %643 = vmatprep.subr.bf16.mxu0 %v481
    %644 = vmatpush1.bf16.msra.mxu0 %v480
    %645 = vmatprep.subr.bf16.mxu0 %v485
    %646 = vmatpush1.bf16.msra.mxu0 %v484
    %647 = vmatprep.subr.bf16.mxu0 %v489
    %648 = vmatpush1.bf16.msra.mxu0 %v488
    %649 = vmatprep.subr.bf16.mxu0 %v493
    %650 = vmatpush1.bf16.msra.mxu0 %v492
    %651 = vmatprep.subr.bf16.mxu0 %v497
    %652 = vmatpush1.bf16.msra.mxu0 %v496
    %653 = vmatprep.subr.bf16.mxu0 %v501
    %654 = vmatpush1.bf16.msra.mxu0 %v500
    %655 = vmatprep.subr.bf16.mxu0 %v505
    %656 = vmatpush1.bf16.msra.mxu0 %v504
    %657 = vmatprep.subr.bf16.mxu0 %v509
    %658 = vmatpush1.bf16.msra.mxu0 %v508
    %659 = vmatprep.subr.bf16.mxu0 %v513
    %660 = vmatpush1.bf16.msra.mxu0 %v512
    %661 = vmatprep.subr.bf16.mxu0 %v517
    %662 = vmatpush1.bf16.msra.mxu0 %v516
    %663 = vmatprep.subr.bf16.mxu0 %v521
    %664 = vmatpush1.bf16.msra.mxu0 %v520
    %665 = vmatprep.subr.bf16.mxu0 %v525
    %666 = vmatpush1.bf16.msra.mxu0 %v524
    %667 = vmatprep.subr.bf16.mxu0 %v529
    %668 = vmatpush1.bf16.msra.mxu0 %v528
    %669 = vmatprep.subr.bf16.mxu0 %v533
    %670 = vmatpush1.bf16.msra.mxu0 %v532
    %671 = vmatprep.mubr.bf16.mxu0 %v191
    %672 = vmatmul.mubr.bf16.gmra.mrb[0].mxu0 %v190
    %v673 = vpop.f32.mrb[0].mxu0
    %v674 = vadd.f32 %v269, %v673
    %v675 = vpop.f32.mrb[0].mxu0
    %v676 = vadd.f32 %v273, %v675
    %v677 = vpop.f32.mrb[0].mxu0
    %v678 = vpop.f32.mrb[0].mxu0
    %679 = vdwg.mxu0
    %vm680 = vcmp.gt.f32.partialorder %v633, 0.0
    %vm681 = vcmp.gt.f32.partialorder %v635, 0.0
    %vm682 = vcmp.gt.f32.partialorder %v674, 0.0
    %vm683 = vcmp.gt.f32.partialorder %v676, 0.0
    %v684 = vmul.f32 %v633, 0.2
    %v685 = vmul.f32 %v635, 0.2
    %v686 = vmul.f32 %v674, 0.2
    %v687 = vmul.f32 %v676, 0.2
    %v688 = vsel %vm680, %v633, %v684
    %v689 = vsel %vm681, %v635, %v685
    %v690 = vsel %vm682, %v674, %v686
    %v691 = vsel %vm683, %v676, %v687
    %v692 = vpack.c.bf16 %v688, %v688
    %v693 = vpack.c.bf16 %v689, %v689
    %v694 = vpack.c.bf16 %v690, %v690
    %v695 = vpack.c.bf16 %v691, %v691
    %v696 = vld [vmem:[%s5] sm:$0xff]
    %v697 = vld [vmem:[%s5 + $0x8] sm:$0xff]
    %v698 = vld [vmem:[%s5 + $0x10] sm:$0xff]
    %v699 = vld [vmem:[%s5 + $0x18] sm:$0xff]
    %v700 = vld [vmem:[%s5 + $0x20] sm:$0xff]
    %v701 = vld [vmem:[%s5 + $0x28] sm:$0xff]
    %v702 = vld [vmem:[%s5 + $0x30] sm:$0xff]
    %v703 = vld [vmem:[%s5 + $0x38] sm:$0xff]
    %v704 = vld [vmem:[%s5 + $0x40] sm:$0xff]
    %v705 = vld [vmem:[%s5 + $0x48] sm:$0xff]
    %v706 = vld [vmem:[%s5 + $0x50] sm:$0xff]
    %v707 = vld [vmem:[%s5 + $0x58] sm:$0xff]
    %v708 = vld [vmem:[%s5 + $0x60] sm:$0xff]
    %v709 = vld [vmem:[%s5 + $0x68] sm:$0xff]
    %v710 = vld [vmem:[%s5 + $0x70] sm:$0xff]
    %v711 = vld [vmem:[%s5 + $0x78] sm:$0xff]
    %v712 = vld [vmem:[%s5 + $0x80] sm:$0xff]
    %v713 = vld [vmem:[%s5 + $0x88] sm:$0xff]
    %v714 = vld [vmem:[%s5 + $0x90] sm:$0xff]
    %v715 = vld [vmem:[%s5 + $0x98] sm:$0xff]
    %v716 = vld [vmem:[%s5 + $0xa0] sm:$0xff]
    %v717 = vld [vmem:[%s5 + $0xa8] sm:$0xff]
    %v718 = vld [vmem:[%s5 + $0xb0] sm:$0xff]
    %v719 = vld [vmem:[%s5 + $0xb8] sm:$0xff]
    %v720 = vld [vmem:[%s5 + $0xc0] sm:$0xff]
    %v721 = vld [vmem:[%s5 + $0xc8] sm:$0xff]
    %v722 = vld [vmem:[%s5 + $0xd0] sm:$0xff]
    %v723 = vld [vmem:[%s5 + $0xd8] sm:$0xff]
    %v724 = vld [vmem:[%s5 + $0xe0] sm:$0xff]
    %v725 = vld [vmem:[%s5 + $0xe8] sm:$0xff]
    %v726 = vld [vmem:[%s5 + $0xf0] sm:$0xff]
    %v727 = vld [vmem:[%s5 + $0xf8] sm:$0xff]
    %v728 = vld [vmem:[%s5 + $0x100] sm:$0xff]
    %v729 = vld [vmem:[%s5 + $0x108] sm:$0xff]
    %v730 = vld [vmem:[%s5 + $0x110] sm:$0xff]
    %v731 = vld [vmem:[%s5 + $0x118] sm:$0xff]
    %v732 = vld [vmem:[%s5 + $0x120] sm:$0xff]
    %v733 = vld [vmem:[%s5 + $0x128] sm:$0xff]
    %v734 = vld [vmem:[%s5 + $0x130] sm:$0xff]
    %v735 = vld [vmem:[%s5 + $0x138] sm:$0xff]
    %v736 = vld [vmem:[%s5 + $0x140] sm:$0xff]
    %v737 = vld [vmem:[%s5 + $0x148] sm:$0xff]
    %v738 = vld [vmem:[%s5 + $0x150] sm:$0xff]
    %v739 = vld [vmem:[%s5 + $0x158] sm:$0xff]
    %v740 = vld [vmem:[%s5 + $0x160] sm:$0xff]
    %v741 = vld [vmem:[%s5 + $0x168] sm:$0xff]
    %v742 = vld [vmem:[%s5 + $0x170] sm:$0xff]
    %v743 = vld [vmem:[%s5 + $0x178] sm:$0xff]
    %v744 = vld [vmem:[%s5 + $0x180] sm:$0xff]
    %v745 = vld [vmem:[%s5 + $0x188] sm:$0xff]
    %v746 = vld [vmem:[%s5 + $0x190] sm:$0xff]
    %v747 = vld [vmem:[%s5 + $0x198] sm:$0xff]
    %v748 = vld [vmem:[%s5 + $0x1a0] sm:$0xff]
    %v749 = vld [vmem:[%s5 + $0x1a8] sm:$0xff]
    %v750 = vld [vmem:[%s5 + $0x1b0] sm:$0xff]
    %v751 = vld [vmem:[%s5 + $0x1b8] sm:$0xff]
    %v752 = vld [vmem:[%s5 + $0x1c0] sm:$0xff]
    %v753 = vld [vmem:[%s5 + $0x1c8] sm:$0xff]
    %v754 = vld [vmem:[%s5 + $0x1d0] sm:$0xff]
    %v755 = vld [vmem:[%s5 + $0x1d8] sm:$0xff]
    %v756 = vld [vmem:[%s5 + $0x1e0] sm:$0xff]
    %v757 = vld [vmem:[%s5 + $0x1e8] sm:$0xff]
    %v758 = vld [vmem:[%s5 + $0x1f0] sm:$0xff]
    %v759 = vld [vmem:[%s5 + $0x1f8] sm:$0xff]
    %v760 = vld [vmem:[%s5 + $0x200] sm:$0xff]
    %v761 = vld [vmem:[%s5 + $0x208] sm:$0xff]
    %v762 = vld [vmem:[%s5 + $0x210] sm:$0xff]
    %v763 = vld [vmem:[%s5 + $0x218] sm:$0xff]
    %v764 = vld [vmem:[%s5 + $0x220] sm:$0xff]
    %v765 = vld [vmem:[%s5 + $0x228] sm:$0xff]
    %v766 = vld [vmem:[%s5 + $0x230] sm:$0xff]
    %v767 = vld [vmem:[%s5 + $0x238] sm:$0xff]
    %v768 = vld [vmem:[%s5 + $0x240] sm:$0xff]
    %v769 = vld [vmem:[%s5 + $0x248] sm:$0xff]
    %v770 = vld [vmem:[%s5 + $0x250] sm:$0xff]
    %v771 = vld [vmem:[%s5 + $0x258] sm:$0xff]
    %v772 = vld [vmem:[%s5 + $0x260] sm:$0xff]
    %v773 = vld [vmem:[%s5 + $0x268] sm:$0xff]
    %v774 = vld [vmem:[%s5 + $0x270] sm:$0xff]
    %v775 = vld [vmem:[%s5 + $0x278] sm:$0xff]
    %v776 = vld [vmem:[%s5 + $0x280] sm:$0xff]
    %v777 = vld [vmem:[%s5 + $0x288] sm:$0xff]
    %v778 = vld [vmem:[%s5 + $0x290] sm:$0xff]
    %v779 = vld [vmem:[%s5 + $0x298] sm:$0xff]
    %v780 = vld [vmem:[%s5 + $0x2a0] sm:$0xff]
    %v781 = vld [vmem:[%s5 + $0x2a8] sm:$0xff]
    %v782 = vld [vmem:[%s5 + $0x2b0] sm:$0xff]
    %v783 = vld [vmem:[%s5 + $0x2b8] sm:$0xff]
    %v784 = vld [vmem:[%s5 + $0x2c0] sm:$0xff]
    %v785 = vld [vmem:[%s5 + $0x2c8] sm:$0xff]
    %v786 = vld [vmem:[%s5 + $0x2d0] sm:$0xff]
    %v787 = vld [vmem:[%s5 + $0x2d8] sm:$0xff]
    %v788 = vld [vmem:[%s5 + $0x2e0] sm:$0xff]
    %v789 = vld [vmem:[%s5 + $0x2e8] sm:$0xff]
    %v790 = vld [vmem:[%s5 + $0x2f0] sm:$0xff]
    %v791 = vld [vmem:[%s5 + $0x2f8] sm:$0xff]
    %v792 = vld [vmem:[%s5 + $0x300] sm:$0xff]
    %v793 = vld [vmem:[%s5 + $0x308] sm:$0xff]
    %v794 = vld [vmem:[%s5 + $0x310] sm:$0xff]
    %v795 = vld [vmem:[%s5 + $0x318] sm:$0xff]
    %v796 = vld [vmem:[%s5 + $0x320] sm:$0xff]
    %v797 = vld [vmem:[%s5 + $0x328] sm:$0xff]
    %v798 = vld [vmem:[%s5 + $0x330] sm:$0xff]
    %v799 = vld [vmem:[%s5 + $0x338] sm:$0xff]
    %v800 = vld [vmem:[%s5 + $0x340] sm:$0xff]
    %v801 = vld [vmem:[%s5 + $0x348] sm:$0xff]
    %v802 = vld [vmem:[%s5 + $0x350] sm:$0xff]
    %v803 = vld [vmem:[%s5 + $0x358] sm:$0xff]
    %v804 = vld [vmem:[%s5 + $0x360] sm:$0xff]
    %v805 = vld [vmem:[%s5 + $0x368] sm:$0xff]
    %v806 = vld [vmem:[%s5 + $0x370] sm:$0xff]
    %v807 = vld [vmem:[%s5 + $0x378] sm:$0xff]
    %v808 = vld [vmem:[%s5 + $0x380] sm:$0xff]
    %v809 = vld [vmem:[%s5 + $0x388] sm:$0xff]
    %v810 = vld [vmem:[%s5 + $0x390] sm:$0xff]
    %v811 = vld [vmem:[%s5 + $0x398] sm:$0xff]
    %v812 = vld [vmem:[%s5 + $0x3a0] sm:$0xff]
    %v813 = vld [vmem:[%s5 + $0x3a8] sm:$0xff]
    %v814 = vld [vmem:[%s5 + $0x3b0] sm:$0xff]
    %v815 = vld [vmem:[%s5 + $0x3b8] sm:$0xff]
    %v816 = vld [vmem:[%s5 + $0x3c0] sm:$0xff]
    %v817 = vld [vmem:[%s5 + $0x3c8] sm:$0xff]
    %v818 = vld [vmem:[%s5 + $0x3d0] sm:$0xff]
    %v819 = vld [vmem:[%s5 + $0x3d8] sm:$0xff]
    %v820 = vld [vmem:[%s5 + $0x3e0] sm:$0xff]
    %v821 = vld [vmem:[%s5 + $0x3e8] sm:$0xff]
    %v822 = vld [vmem:[%s5 + $0x3f0] sm:$0xff]
    %v823 = vld [vmem:[%s5 + $0x3f8] sm:$0xff]
    %v824 = vld [vmem:[%s5 + $0x400] sm:$0xff]
    %v825 = vld [vmem:[%s5 + $0x408] sm:$0xff]
    %v826 = vld [vmem:[%s5 + $0x410] sm:$0xff]
    %v827 = vld [vmem:[%s5 + $0x418] sm:$0xff]
    %v828 = vld [vmem:[%s5 + $0x420] sm:$0xff]
    %v829 = vld [vmem:[%s5 + $0x428] sm:$0xff]
    %v830 = vld [vmem:[%s5 + $0x430] sm:$0xff]
    %v831 = vld [vmem:[%s5 + $0x438] sm:$0xff]
    %v832 = vld [vmem:[%s5 + $0x440] sm:$0xff]
    %v833 = vld [vmem:[%s5 + $0x448] sm:$0xff]
    %v834 = vld [vmem:[%s5 + $0x450] sm:$0xff]
    %v835 = vld [vmem:[%s5 + $0x458] sm:$0xff]
    %v836 = vld [vmem:[%s5 + $0x460] sm:$0xff]
    %v837 = vld [vmem:[%s5 + $0x468] sm:$0xff]
    %v838 = vld [vmem:[%s5 + $0x470] sm:$0xff]
    %v839 = vld [vmem:[%s5 + $0x478] sm:$0xff]
    %v840 = vld [vmem:[%s5 + $0x480] sm:$0xff]
    %v841 = vld [vmem:[%s5 + $0x488] sm:$0xff]
    %v842 = vld [vmem:[%s5 + $0x490] sm:$0xff]
    %v843 = vld [vmem:[%s5 + $0x498] sm:$0xff]
    %v844 = vld [vmem:[%s5 + $0x4a0] sm:$0xff]
    %v845 = vld [vmem:[%s5 + $0x4a8] sm:$0xff]
    %v846 = vld [vmem:[%s5 + $0x4b0] sm:$0xff]
    %v847 = vld [vmem:[%s5 + $0x4b8] sm:$0xff]
    %v848 = vld [vmem:[%s5 + $0x4c0] sm:$0xff]
    %v849 = vld [vmem:[%s5 + $0x4c8] sm:$0xff]
    %v850 = vld [vmem:[%s5 + $0x4d0] sm:$0xff]
    %v851 = vld [vmem:[%s5 + $0x4d8] sm:$0xff]
    %v852 = vld [vmem:[%s5 + $0x4e0] sm:$0xff]
    %v853 = vld [vmem:[%s5 + $0x4e8] sm:$0xff]
    %v854 = vld [vmem:[%s5 + $0x4f0] sm:$0xff]
    %v855 = vld [vmem:[%s5 + $0x4f8] sm:$0xff]
    %v856 = vld [vmem:[%s5 + $0x500] sm:$0xff]
    %v857 = vld [vmem:[%s5 + $0x508] sm:$0xff]
    %v858 = vld [vmem:[%s5 + $0x510] sm:$0xff]
    %v859 = vld [vmem:[%s5 + $0x518] sm:$0xff]
    %v860 = vld [vmem:[%s5 + $0x520] sm:$0xff]
    %v861 = vld [vmem:[%s5 + $0x528] sm:$0xff]
    %v862 = vld [vmem:[%s5 + $0x530] sm:$0xff]
    %v863 = vld [vmem:[%s5 + $0x538] sm:$0xff]
    %v864 = vld [vmem:[%s5 + $0x540] sm:$0xff]
    %v865 = vld [vmem:[%s5 + $0x548] sm:$0xff]
    %v866 = vld [vmem:[%s5 + $0x550] sm:$0xff]
    %v867 = vld [vmem:[%s5 + $0x558] sm:$0xff]
    %v868 = vld [vmem:[%s5 + $0x560] sm:$0xff]
    %v869 = vld [vmem:[%s5 + $0x568] sm:$0xff]
    %v870 = vld [vmem:[%s5 + $0x570] sm:$0xff]
    %v871 = vld [vmem:[%s5 + $0x578] sm:$0xff]
    %v872 = vld [vmem:[%s5 + $0x580] sm:$0xff]
    %v873 = vld [vmem:[%s5 + $0x588] sm:$0xff]
    %v874 = vld [vmem:[%s5 + $0x590] sm:$0xff]
    %v875 = vld [vmem:[%s5 + $0x598] sm:$0xff]
    %v876 = vld [vmem:[%s5 + $0x5a0] sm:$0xff]
    %v877 = vld [vmem:[%s5 + $0x5a8] sm:$0xff]
    %v878 = vld [vmem:[%s5 + $0x5b0] sm:$0xff]
    %v879 = vld [vmem:[%s5 + $0x5b8] sm:$0xff]
    %v880 = vld [vmem:[%s5 + $0x5c0] sm:$0xff]
    %v881 = vld [vmem:[%s5 + $0x5c8] sm:$0xff]
    %v882 = vld [vmem:[%s5 + $0x5d0] sm:$0xff]
    %v883 = vld [vmem:[%s5 + $0x5d8] sm:$0xff]
    %v884 = vld [vmem:[%s5 + $0x5e0] sm:$0xff]
    %v885 = vld [vmem:[%s5 + $0x5e8] sm:$0xff]
    %v886 = vld [vmem:[%s5 + $0x5f0] sm:$0xff]
    %v887 = vld [vmem:[%s5 + $0x5f8] sm:$0xff]
    %v888 = vld [vmem:[%s5 + $0x600] sm:$0xff]
    %v889 = vld [vmem:[%s5 + $0x608] sm:$0xff]
    %v890 = vld [vmem:[%s5 + $0x610] sm:$0xff]
    %v891 = vld [vmem:[%s5 + $0x618] sm:$0xff]
    %v892 = vld [vmem:[%s5 + $0x620] sm:$0xff]
    %v893 = vld [vmem:[%s5 + $0x628] sm:$0xff]
    %v894 = vld [vmem:[%s5 + $0x630] sm:$0xff]
    %v895 = vld [vmem:[%s5 + $0x638] sm:$0xff]
    %v896 = vld [vmem:[%s5 + $0x640] sm:$0xff]
    %v897 = vld [vmem:[%s5 + $0x648] sm:$0xff]
    %v898 = vld [vmem:[%s5 + $0x650] sm:$0xff]
    %v899 = vld [vmem:[%s5 + $0x658] sm:$0xff]
    %v900 = vld [vmem:[%s5 + $0x660] sm:$0xff]
    %v901 = vld [vmem:[%s5 + $0x668] sm:$0xff]
    %v902 = vld [vmem:[%s5 + $0x670] sm:$0xff]
    %v903 = vld [vmem:[%s5 + $0x678] sm:$0xff]
    %v904 = vld [vmem:[%s5 + $0x680] sm:$0xff]
    %v905 = vld [vmem:[%s5 + $0x688] sm:$0xff]
    %v906 = vld [vmem:[%s5 + $0x690] sm:$0xff]
    %v907 = vld [vmem:[%s5 + $0x698] sm:$0xff]
    %v908 = vld [vmem:[%s5 + $0x6a0] sm:$0xff]
    %v909 = vld [vmem:[%s5 + $0x6a8] sm:$0xff]
    %v910 = vld [vmem:[%s5 + $0x6b0] sm:$0xff]
    %v911 = vld [vmem:[%s5 + $0x6b8] sm:$0xff]
    %v912 = vld [vmem:[%s5 + $0x6c0] sm:$0xff]
    %v913 = vld [vmem:[%s5 + $0x6c8] sm:$0xff]
    %v914 = vld [vmem:[%s5 + $0x6d0] sm:$0xff]
    %v915 = vld [vmem:[%s5 + $0x6d8] sm:$0xff]
    %v916 = vld [vmem:[%s5 + $0x6e0] sm:$0xff]
    %v917 = vld [vmem:[%s5 + $0x6e8] sm:$0xff]
    %v918 = vld [vmem:[%s5 + $0x6f0] sm:$0xff]
    %v919 = vld [vmem:[%s5 + $0x6f8] sm:$0xff]
    %v920 = vld [vmem:[%s5 + $0x700] sm:$0xff]
    %v921 = vld [vmem:[%s5 + $0x708] sm:$0xff]
    %v922 = vld [vmem:[%s5 + $0x710] sm:$0xff]
    %v923 = vld [vmem:[%s5 + $0x718] sm:$0xff]
    %v924 = vld [vmem:[%s5 + $0x720] sm:$0xff]
    %v925 = vld [vmem:[%s5 + $0x728] sm:$0xff]
    %v926 = vld [vmem:[%s5 + $0x730] sm:$0xff]
    %v927 = vld [vmem:[%s5 + $0x738] sm:$0xff]
    %v928 = vld [vmem:[%s5 + $0x740] sm:$0xff]
    %v929 = vld [vmem:[%s5 + $0x748] sm:$0xff]
    %v930 = vld [vmem:[%s5 + $0x750] sm:$0xff]
    %v931 = vld [vmem:[%s5 + $0x758] sm:$0xff]
    %v932 = vld [vmem:[%s5 + $0x760] sm:$0xff]
    %v933 = vld [vmem:[%s5 + $0x768] sm:$0xff]
    %v934 = vld [vmem:[%s5 + $0x770] sm:$0xff]
    %v935 = vld [vmem:[%s5 + $0x778] sm:$0xff]
    %v936 = vld [vmem:[%s5 + $0x780] sm:$0xff]
    %v937 = vld [vmem:[%s5 + $0x788] sm:$0xff]
    %v938 = vld [vmem:[%s5 + $0x790] sm:$0xff]
    %v939 = vld [vmem:[%s5 + $0x798] sm:$0xff]
    %v940 = vld [vmem:[%s5 + $0x7a0] sm:$0xff]
    %v941 = vld [vmem:[%s5 + $0x7a8] sm:$0xff]
    %v942 = vld [vmem:[%s5 + $0x7b0] sm:$0xff]
    %v943 = vld [vmem:[%s5 + $0x7b8] sm:$0xff]
    %v944 = vld [vmem:[%s5 + $0x7c0] sm:$0xff]
    %v945 = vld [vmem:[%s5 + $0x7c8] sm:$0xff]
    %v946 = vld [vmem:[%s5 + $0x7d0] sm:$0xff]
    %v947 = vld [vmem:[%s5 + $0x7d8] sm:$0xff]
    %v948 = vld [vmem:[%s5 + $0x7e0] sm:$0xff]
    %v949 = vld [vmem:[%s5 + $0x7e8] sm:$0xff]
    %v950 = vld [vmem:[%s5 + $0x7f0] sm:$0xff]
    %v951 = vld [vmem:[%s5 + $0x7f8] sm:$0xff]
    %v952 = vld [vmem:[%s6] sm:$0xff]
    %v954 = vlaneseq
    %v955 = vshrl.u32 %v954, 7
    %v956 = vsub.s32 0, %v955
    %v957 = vrot.slane %v952, %v956
    %v958 = vlaneseq
    %v959 = vshrl.u32 %v958, 7
    %v960 = vsub.s32 1, %v959
    %v961 = vrot.slane %v952, %v960
    %v962 = vlaneseq
    %v963 = vshrl.u32 %v962, 7
    %v964 = vsub.s32 2, %v963
    %v965 = vrot.slane %v952, %v964
    %v966 = vlaneseq
    %v967 = vshrl.u32 %v966, 7
    %v968 = vsub.s32 3, %v967
    %v969 = vrot.slane %v952, %v968
    %v970 = vlaneseq
    %v971 = vshrl.u32 %v970, 7
    %v972 = vsub.s32 4, %v971
    %v973 = vrot.slane %v952, %v972
    %v974 = vlaneseq
    %v975 = vshrl.u32 %v974, 7
    %v976 = vsub.s32 5, %v975
    %v977 = vrot.slane %v952, %v976
    %v978 = vlaneseq
    %v979 = vshrl.u32 %v978, 7
    %v980 = vsub.s32 6, %v979
    %v981 = vrot.slane %v952, %v980
    %v982 = vlaneseq
    %v983 = vshrl.u32 %v982, 7
    %v984 = vsub.s32 7, %v983
    %v985 = vrot.slane %v952, %v984
    %v1250 = vunpack.c.l.b16 %v696
    %v1251 = vunpack.c.h.b16 %v696
    %v1252 = vunpack.c.l.b16 %v697
    %v1253 = vunpack.c.h.b16 %v697
    %v1254 = vunpack.c.l.b16 %v698
    %v1255 = vunpack.c.h.b16 %v698
    %v1256 = vunpack.c.l.b16 %v699
    %v1257 = vunpack.c.h.b16 %v699
    %v1258 = vunpack.c.l.b16 %v700
    %v1259 = vunpack.c.h.b16 %v700
    %v1260 = vunpack.c.l.b16 %v701
    %v1261 = vunpack.c.h.b16 %v701
    %v1262 = vunpack.c.l.b16 %v702
    %v1263 = vunpack.c.h.b16 %v702
    %v1264 = vunpack.c.l.b16 %v703
    %v1265 = vunpack.c.h.b16 %v703
    %v1266 = vunpack.c.l.b16 %v704
    %v1267 = vunpack.c.h.b16 %v704
    %v1268 = vunpack.c.l.b16 %v705
    %v1269 = vunpack.c.h.b16 %v705
    %v1270 = vunpack.c.l.b16 %v706
    %v1271 = vunpack.c.h.b16 %v706
    %v1272 = vunpack.c.l.b16 %v707
    %v1273 = vunpack.c.h.b16 %v707
    %v1274 = vunpack.c.l.b16 %v708
    %v1275 = vunpack.c.h.b16 %v708
    %v1276 = vunpack.c.l.b16 %v709
    %v1277 = vunpack.c.h.b16 %v709
    %v1278 = vunpack.c.l.b16 %v710
    %v1279 = vunpack.c.h.b16 %v710
    %v1280 = vunpack.c.l.b16 %v711
    %v1281 = vunpack.c.h.b16 %v711
    %v1282 = vunpack.c.l.b16 %v712
    %v1283 = vunpack.c.h.b16 %v712
    %v1284 = vunpack.c.l.b16 %v713
    %v1285 = vunpack.c.h.b16 %v713
    %v1286 = vunpack.c.l.b16 %v714
    %v1287 = vunpack.c.h.b16 %v714
    %v1288 = vunpack.c.l.b16 %v715
    %v1289 = vunpack.c.h.b16 %v715
    %v1290 = vunpack.c.l.b16 %v716
    %v1291 = vunpack.c.h.b16 %v716
    %v1292 = vunpack.c.l.b16 %v717
    %v1293 = vunpack.c.h.b16 %v717
    %v1294 = vunpack.c.l.b16 %v718
    %v1295 = vunpack.c.h.b16 %v718
    %v1296 = vunpack.c.l.b16 %v719
    %v1297 = vunpack.c.h.b16 %v719
    %v1298 = vunpack.c.l.b16 %v720
    %v1299 = vunpack.c.h.b16 %v720
    %v1300 = vunpack.c.l.b16 %v721
    %v1301 = vunpack.c.h.b16 %v721
    %v1302 = vunpack.c.l.b16 %v722
    %v1303 = vunpack.c.h.b16 %v722
    %v1304 = vunpack.c.l.b16 %v723
    %v1305 = vunpack.c.h.b16 %v723
    %v1306 = vunpack.c.l.b16 %v724
    %v1307 = vunpack.c.h.b16 %v724
    %v1308 = vunpack.c.l.b16 %v725
    %v1309 = vunpack.c.h.b16 %v725
    %v1310 = vunpack.c.l.b16 %v726
    %v1311 = vunpack.c.h.b16 %v726
    %v1312 = vunpack.c.l.b16 %v727
    %v1313 = vunpack.c.h.b16 %v727
    %v1314 = vunpack.c.l.b16 %v728
    %v1315 = vunpack.c.h.b16 %v728
    %v1316 = vunpack.c.l.b16 %v729
    %v1317 = vunpack.c.h.b16 %v729
    %v1318 = vunpack.c.l.b16 %v730
    %v1319 = vunpack.c.h.b16 %v730
    %v1320 = vunpack.c.l.b16 %v731
    %v1321 = vunpack.c.h.b16 %v731
    %v1322 = vunpack.c.l.b16 %v732
    %v1323 = vunpack.c.h.b16 %v732
    %v1324 = vunpack.c.l.b16 %v733
    %v1325 = vunpack.c.h.b16 %v733
    %v1326 = vunpack.c.l.b16 %v734
    %v1327 = vunpack.c.h.b16 %v734
    %v1328 = vunpack.c.l.b16 %v735
    %v1329 = vunpack.c.h.b16 %v735
    %v1330 = vunpack.c.l.b16 %v736
    %v1331 = vunpack.c.h.b16 %v736
    %v1332 = vunpack.c.l.b16 %v737
    %v1333 = vunpack.c.h.b16 %v737
    %v1334 = vunpack.c.l.b16 %v738
    %v1335 = vunpack.c.h.b16 %v738
    %v1336 = vunpack.c.l.b16 %v739
    %v1337 = vunpack.c.h.b16 %v739
    %v1338 = vunpack.c.l.b16 %v740
    %v1339 = vunpack.c.h.b16 %v740
    %v1340 = vunpack.c.l.b16 %v741
    %v1341 = vunpack.c.h.b16 %v741
    %v1342 = vunpack.c.l.b16 %v742
    %v1343 = vunpack.c.h.b16 %v742
    %v1344 = vunpack.c.l.b16 %v743
    %v1345 = vunpack.c.h.b16 %v743
    %v1346 = vunpack.c.l.b16 %v744
    %v1347 = vunpack.c.h.b16 %v744
    %v1348 = vunpack.c.l.b16 %v745
    %v1349 = vunpack.c.h.b16 %v745
    %v1350 = vunpack.c.l.b16 %v746
    %v1351 = vunpack.c.h.b16 %v746
    %v1352 = vunpack.c.l.b16 %v747
    %v1353 = vunpack.c.h.b16 %v747
    %v1354 = vunpack.c.l.b16 %v748
    %v1355 = vunpack.c.h.b16 %v748
    %v1356 = vunpack.c.l.b16 %v749
    %v1357 = vunpack.c.h.b16 %v749
    %v1358 = vunpack.c.l.b16 %v750
    %v1359 = vunpack.c.h.b16 %v750
    %v1360 = vunpack.c.l.b16 %v751
    %v1361 = vunpack.c.h.b16 %v751
    %v1362 = vunpack.c.l.b16 %v752
    %v1363 = vunpack.c.h.b16 %v752
    %v1364 = vunpack.c.l.b16 %v753
    %v1365 = vunpack.c.h.b16 %v753
    %v1366 = vunpack.c.l.b16 %v754
    %v1367 = vunpack.c.h.b16 %v754
    %v1368 = vunpack.c.l.b16 %v755
    %v1369 = vunpack.c.h.b16 %v755
    %v1370 = vunpack.c.l.b16 %v756
    %v1371 = vunpack.c.h.b16 %v756
    %v1372 = vunpack.c.l.b16 %v757
    %v1373 = vunpack.c.h.b16 %v757
    %v1374 = vunpack.c.l.b16 %v758
    %v1375 = vunpack.c.h.b16 %v758
    %v1376 = vunpack.c.l.b16 %v759
    %v1377 = vunpack.c.h.b16 %v759
    %v1378 = vunpack.c.l.b16 %v760
    %v1379 = vunpack.c.h.b16 %v760
    %v1380 = vunpack.c.l.b16 %v761
    %v1381 = vunpack.c.h.b16 %v761
    %v1382 = vunpack.c.l.b16 %v762
    %v1383 = vunpack.c.h.b16 %v762
    %v1384 = vunpack.c.l.b16 %v763
    %v1385 = vunpack.c.h.b16 %v763
    %v1386 = vunpack.c.l.b16 %v764
    %v1387 = vunpack.c.h.b16 %v764
    %v1388 = vunpack.c.l.b16 %v765
    %v1389 = vunpack.c.h.b16 %v765
    %v1390 = vunpack.c.l.b16 %v766
    %v1391 = vunpack.c.h.b16 %v766
    %v1392 = vunpack.c.l.b16 %v767
    %v1393 = vunpack.c.h.b16 %v767
    %v1394 = vunpack.c.l.b16 %v768
    %v1395 = vunpack.c.h.b16 %v768
    %v1396 = vunpack.c.l.b16 %v769
    %v1397 = vunpack.c.h.b16 %v769
    %v1398 = vunpack.c.l.b16 %v770
    %v1399 = vunpack.c.h.b16 %v770
    %v1400 = vunpack.c.l.b16 %v771
    %v1401 = vunpack.c.h.b16 %v771
    %v1402 = vunpack.c.l.b16 %v772
    %v1403 = vunpack.c.h.b16 %v772
    %v1404 = vunpack.c.l.b16 %v773
    %v1405 = vunpack.c.h.b16 %v773
    %v1406 = vunpack.c.l.b16 %v774
    %v1407 = vunpack.c.h.b16 %v774
    %v1408 = vunpack.c.l.b16 %v775
    %v1409 = vunpack.c.h.b16 %v775
    %v1410 = vunpack.c.l.b16 %v776
    %v1411 = vunpack.c.h.b16 %v776
    %v1412 = vunpack.c.l.b16 %v777
    %v1413 = vunpack.c.h.b16 %v777
    %v1414 = vunpack.c.l.b16 %v778
    %v1415 = vunpack.c.h.b16 %v778
    %v1416 = vunpack.c.l.b16 %v779
    %v1417 = vunpack.c.h.b16 %v779
    %v1418 = vunpack.c.l.b16 %v780
    %v1419 = vunpack.c.h.b16 %v780
    %v1420 = vunpack.c.l.b16 %v781
    %v1421 = vunpack.c.h.b16 %v781
    %v1422 = vunpack.c.l.b16 %v782
    %v1423 = vunpack.c.h.b16 %v782
    %v1424 = vunpack.c.l.b16 %v783
    %v1425 = vunpack.c.h.b16 %v783
    %v1426 = vunpack.c.l.b16 %v784
    %v1427 = vunpack.c.h.b16 %v784
    %v1428 = vunpack.c.l.b16 %v785
    %v1429 = vunpack.c.h.b16 %v785
    %v1430 = vunpack.c.l.b16 %v786
    %v1431 = vunpack.c.h.b16 %v786
    %v1432 = vunpack.c.l.b16 %v787
    %v1433 = vunpack.c.h.b16 %v787
    %v1434 = vunpack.c.l.b16 %v788
    %v1435 = vunpack.c.h.b16 %v788
    %v1436 = vunpack.c.l.b16 %v789
    %v1437 = vunpack.c.h.b16 %v789
    %v1438 = vunpack.c.l.b16 %v790
    %v1439 = vunpack.c.h.b16 %v790
    %v1440 = vunpack.c.l.b16 %v791
    %v1441 = vunpack.c.h.b16 %v791
    %v1442 = vunpack.c.l.b16 %v792
    %v1443 = vunpack.c.h.b16 %v792
    %v1444 = vunpack.c.l.b16 %v793
    %v1445 = vunpack.c.h.b16 %v793
    %v1446 = vunpack.c.l.b16 %v794
    %v1447 = vunpack.c.h.b16 %v794
    %v1448 = vunpack.c.l.b16 %v795
    %v1449 = vunpack.c.h.b16 %v795
    %v1450 = vunpack.c.l.b16 %v796
    %v1451 = vunpack.c.h.b16 %v796
    %v1452 = vunpack.c.l.b16 %v797
    %v1453 = vunpack.c.h.b16 %v797
    %v1454 = vunpack.c.l.b16 %v798
    %v1455 = vunpack.c.h.b16 %v798
    %v1456 = vunpack.c.l.b16 %v799
    %v1457 = vunpack.c.h.b16 %v799
    %v1458 = vunpack.c.l.b16 %v800
    %v1459 = vunpack.c.h.b16 %v800
    %v1460 = vunpack.c.l.b16 %v801
    %v1461 = vunpack.c.h.b16 %v801
    %v1462 = vunpack.c.l.b16 %v802
    %v1463 = vunpack.c.h.b16 %v802
    %v1464 = vunpack.c.l.b16 %v803
    %v1465 = vunpack.c.h.b16 %v803
    %v1466 = vunpack.c.l.b16 %v804
    %v1467 = vunpack.c.h.b16 %v804
    %v1468 = vunpack.c.l.b16 %v805
    %v1469 = vunpack.c.h.b16 %v805
    %v1470 = vunpack.c.l.b16 %v806
    %v1471 = vunpack.c.h.b16 %v806
    %v1472 = vunpack.c.l.b16 %v807
    %v1473 = vunpack.c.h.b16 %v807
    %v1474 = vunpack.c.l.b16 %v808
    %v1475 = vunpack.c.h.b16 %v808
    %v1476 = vunpack.c.l.b16 %v809
    %v1477 = vunpack.c.h.b16 %v809
    %v1478 = vunpack.c.l.b16 %v810
    %v1479 = vunpack.c.h.b16 %v810
    %v1480 = vunpack.c.l.b16 %v811
    %v1481 = vunpack.c.h.b16 %v811
    %v1482 = vunpack.c.l.b16 %v812
    %v1483 = vunpack.c.h.b16 %v812
    %v1484 = vunpack.c.l.b16 %v813
    %v1485 = vunpack.c.h.b16 %v813
    %v1486 = vunpack.c.l.b16 %v814
    %v1487 = vunpack.c.h.b16 %v814
    %v1488 = vunpack.c.l.b16 %v815
    %v1489 = vunpack.c.h.b16 %v815
    %v1490 = vunpack.c.l.b16 %v816
    %v1491 = vunpack.c.h.b16 %v816
    %v1492 = vunpack.c.l.b16 %v817
    %v1493 = vunpack.c.h.b16 %v817
    %v1494 = vunpack.c.l.b16 %v818
    %v1495 = vunpack.c.h.b16 %v818
    %v1496 = vunpack.c.l.b16 %v819
    %v1497 = vunpack.c.h.b16 %v819
    %v1498 = vunpack.c.l.b16 %v820
    %v1499 = vunpack.c.h.b16 %v820
    %v1500 = vunpack.c.l.b16 %v821
    %v1501 = vunpack.c.h.b16 %v821
    %v1502 = vunpack.c.l.b16 %v822
    %v1503 = vunpack.c.h.b16 %v822
    %v1504 = vunpack.c.l.b16 %v823
    %v1505 = vunpack.c.h.b16 %v823
    %v1506 = vunpack.c.l.b16 %v824
    %v1507 = vunpack.c.h.b16 %v824
    %v1508 = vunpack.c.l.b16 %v825
    %v1509 = vunpack.c.h.b16 %v825
    %v1510 = vunpack.c.l.b16 %v826
    %v1511 = vunpack.c.h.b16 %v826
    %v1512 = vunpack.c.l.b16 %v827
    %v1513 = vunpack.c.h.b16 %v827
    %v1514 = vunpack.c.l.b16 %v828
    %v1515 = vunpack.c.h.b16 %v828
    %v1516 = vunpack.c.l.b16 %v829
    %v1517 = vunpack.c.h.b16 %v829
    %v1518 = vunpack.c.l.b16 %v830
    %v1519 = vunpack.c.h.b16 %v830
    %v1520 = vunpack.c.l.b16 %v831
    %v1521 = vunpack.c.h.b16 %v831
    %v1522 = vunpack.c.l.b16 %v832
    %v1523 = vunpack.c.h.b16 %v832
    %v1524 = vunpack.c.l.b16 %v833
    %v1525 = vunpack.c.h.b16 %v833
    %v1526 = vunpack.c.l.b16 %v834
    %v1527 = vunpack.c.h.b16 %v834
    %v1528 = vunpack.c.l.b16 %v835
    %v1529 = vunpack.c.h.b16 %v835
    %v1530 = vunpack.c.l.b16 %v836
    %v1531 = vunpack.c.h.b16 %v836
    %v1532 = vunpack.c.l.b16 %v837
    %v1533 = vunpack.c.h.b16 %v837
    %v1534 = vunpack.c.l.b16 %v838
    %v1535 = vunpack.c.h.b16 %v838
    %v1536 = vunpack.c.l.b16 %v839
    %v1537 = vunpack.c.h.b16 %v839
    %v1538 = vunpack.c.l.b16 %v840
    %v1539 = vunpack.c.h.b16 %v840
    %v1540 = vunpack.c.l.b16 %v841
    %v1541 = vunpack.c.h.b16 %v841
    %v1542 = vunpack.c.l.b16 %v842
    %v1543 = vunpack.c.h.b16 %v842
    %v1544 = vunpack.c.l.b16 %v843
    %v1545 = vunpack.c.h.b16 %v843
    %v1546 = vunpack.c.l.b16 %v844
    %v1547 = vunpack.c.h.b16 %v844
    %v1548 = vunpack.c.l.b16 %v845
    %v1549 = vunpack.c.h.b16 %v845
    %v1550 = vunpack.c.l.b16 %v846
    %v1551 = vunpack.c.h.b16 %v846
    %v1552 = vunpack.c.l.b16 %v847
    %v1553 = vunpack.c.h.b16 %v847
    %v1554 = vunpack.c.l.b16 %v848
    %v1555 = vunpack.c.h.b16 %v848
    %v1556 = vunpack.c.l.b16 %v849
    %v1557 = vunpack.c.h.b16 %v849
    %v1558 = vunpack.c.l.b16 %v850
    %v1559 = vunpack.c.h.b16 %v850
    %v1560 = vunpack.c.l.b16 %v851
    %v1561 = vunpack.c.h.b16 %v851
    %v1562 = vunpack.c.l.b16 %v852
    %v1563 = vunpack.c.h.b16 %v852
    %v1564 = vunpack.c.l.b16 %v853
    %v1565 = vunpack.c.h.b16 %v853
    %v1566 = vunpack.c.l.b16 %v854
    %v1567 = vunpack.c.h.b16 %v854
    %v1568 = vunpack.c.l.b16 %v855
    %v1569 = vunpack.c.h.b16 %v855
    %v1570 = vunpack.c.l.b16 %v856
    %v1571 = vunpack.c.h.b16 %v856
    %v1572 = vunpack.c.l.b16 %v857
    %v1573 = vunpack.c.h.b16 %v857
    %v1574 = vunpack.c.l.b16 %v858
    %v1575 = vunpack.c.h.b16 %v858
    %v1576 = vunpack.c.l.b16 %v859
    %v1577 = vunpack.c.h.b16 %v859
    %v1578 = vunpack.c.l.b16 %v860
    %v1579 = vunpack.c.h.b16 %v860
    %v1580 = vunpack.c.l.b16 %v861
    %v1581 = vunpack.c.h.b16 %v861
    %v1582 = vunpack.c.l.b16 %v862
    %v1583 = vunpack.c.h.b16 %v862
    %v1584 = vunpack.c.l.b16 %v863
    %v1585 = vunpack.c.h.b16 %v863
    %v1586 = vunpack.c.l.b16 %v864
    %v1587 = vunpack.c.h.b16 %v864
    %v1588 = vunpack.c.l.b16 %v865
    %v1589 = vunpack.c.h.b16 %v865
    %v1590 = vunpack.c.l.b16 %v866
    %v1591 = vunpack.c.h.b16 %v866
    %v1592 = vunpack.c.l.b16 %v867
    %v1593 = vunpack.c.h.b16 %v867
    %v1594 = vunpack.c.l.b16 %v868
    %v1595 = vunpack.c.h.b16 %v868
    %v1596 = vunpack.c.l.b16 %v869
    %v1597 = vunpack.c.h.b16 %v869
    %v1598 = vunpack.c.l.b16 %v870
    %v1599 = vunpack.c.h.b16 %v870
    %v1600 = vunpack.c.l.b16 %v871
    %v1601 = vunpack.c.h.b16 %v871
    %v1602 = vunpack.c.l.b16 %v872
    %v1603 = vunpack.c.h.b16 %v872
    %v1604 = vunpack.c.l.b16 %v873
    %v1605 = vunpack.c.h.b16 %v873
    %v1606 = vunpack.c.l.b16 %v874
    %v1607 = vunpack.c.h.b16 %v874
    %v1608 = vunpack.c.l.b16 %v875
    %v1609 = vunpack.c.h.b16 %v875
    %v1610 = vunpack.c.l.b16 %v876
    %v1611 = vunpack.c.h.b16 %v876
    %v1612 = vunpack.c.l.b16 %v877
    %v1613 = vunpack.c.h.b16 %v877
    %v1614 = vunpack.c.l.b16 %v878
    %v1615 = vunpack.c.h.b16 %v878
    %v1616 = vunpack.c.l.b16 %v879
    %v1617 = vunpack.c.h.b16 %v879
    %v1618 = vunpack.c.l.b16 %v880
    %v1619 = vunpack.c.h.b16 %v880
    %v1620 = vunpack.c.l.b16 %v881
    %v1621 = vunpack.c.h.b16 %v881
    %v1622 = vunpack.c.l.b16 %v882
    %v1623 = vunpack.c.h.b16 %v882
    %v1624 = vunpack.c.l.b16 %v883
    %v1625 = vunpack.c.h.b16 %v883
    %v1626 = vunpack.c.l.b16 %v884
    %v1627 = vunpack.c.h.b16 %v884
    %v1628 = vunpack.c.l.b16 %v885
    %v1629 = vunpack.c.h.b16 %v885
    %v1630 = vunpack.c.l.b16 %v886
    %v1631 = vunpack.c.h.b16 %v886
    %v1632 = vunpack.c.l.b16 %v887
    %v1633 = vunpack.c.h.b16 %v887
    %v1634 = vunpack.c.l.b16 %v888
    %v1635 = vunpack.c.h.b16 %v888
    %v1636 = vunpack.c.l.b16 %v889
    %v1637 = vunpack.c.h.b16 %v889
    %v1638 = vunpack.c.l.b16 %v890
    %v1639 = vunpack.c.h.b16 %v890
    %v1640 = vunpack.c.l.b16 %v891
    %v1641 = vunpack.c.h.b16 %v891
    %v1642 = vunpack.c.l.b16 %v892
    %v1643 = vunpack.c.h.b16 %v892
    %v1644 = vunpack.c.l.b16 %v893
    %v1645 = vunpack.c.h.b16 %v893
    %v1646 = vunpack.c.l.b16 %v894
    %v1647 = vunpack.c.h.b16 %v894
    %v1648 = vunpack.c.l.b16 %v895
    %v1649 = vunpack.c.h.b16 %v895
    %v1650 = vunpack.c.l.b16 %v896
    %v1651 = vunpack.c.h.b16 %v896
    %v1652 = vunpack.c.l.b16 %v897
    %v1653 = vunpack.c.h.b16 %v897
    %v1654 = vunpack.c.l.b16 %v898
    %v1655 = vunpack.c.h.b16 %v898
    %v1656 = vunpack.c.l.b16 %v899
    %v1657 = vunpack.c.h.b16 %v899
    %v1658 = vunpack.c.l.b16 %v900
    %v1659 = vunpack.c.h.b16 %v900
    %v1660 = vunpack.c.l.b16 %v901
    %v1661 = vunpack.c.h.b16 %v901
    %v1662 = vunpack.c.l.b16 %v902
    %v1663 = vunpack.c.h.b16 %v902
    %v1664 = vunpack.c.l.b16 %v903
    %v1665 = vunpack.c.h.b16 %v903
    %v1666 = vunpack.c.l.b16 %v904
    %v1667 = vunpack.c.h.b16 %v904
    %v1668 = vunpack.c.l.b16 %v905
    %v1669 = vunpack.c.h.b16 %v905
    %v1670 = vunpack.c.l.b16 %v906
    %v1671 = vunpack.c.h.b16 %v906
    %v1672 = vunpack.c.l.b16 %v907
    %v1673 = vunpack.c.h.b16 %v907
    %v1674 = vunpack.c.l.b16 %v908
    %v1675 = vunpack.c.h.b16 %v908
    %v1676 = vunpack.c.l.b16 %v909
    %v1677 = vunpack.c.h.b16 %v909
    %v1678 = vunpack.c.l.b16 %v910
    %v1679 = vunpack.c.h.b16 %v910
    %v1680 = vunpack.c.l.b16 %v911
    %v1681 = vunpack.c.h.b16 %v911
    %v1682 = vunpack.c.l.b16 %v912
    %v1683 = vunpack.c.h.b16 %v912
    %v1684 = vunpack.c.l.b16 %v913
    %v1685 = vunpack.c.h.b16 %v913
    %v1686 = vunpack.c.l.b16 %v914
    %v1687 = vunpack.c.h.b16 %v914
    %v1688 = vunpack.c.l.b16 %v915
    %v1689 = vunpack.c.h.b16 %v915
    %v1690 = vunpack.c.l.b16 %v916
    %v1691 = vunpack.c.h.b16 %v916
    %v1692 = vunpack.c.l.b16 %v917
    %v1693 = vunpack.c.h.b16 %v917
    %v1694 = vunpack.c.l.b16 %v918
    %v1695 = vunpack.c.h.b16 %v918
    %v1696 = vunpack.c.l.b16 %v919
    %v1697 = vunpack.c.h.b16 %v919
    %v1698 = vunpack.c.l.b16 %v920
    %v1699 = vunpack.c.h.b16 %v920
    %v1700 = vunpack.c.l.b16 %v921
    %v1701 = vunpack.c.h.b16 %v921
    %v1702 = vunpack.c.l.b16 %v922
    %v1703 = vunpack.c.h.b16 %v922
    %v1704 = vunpack.c.l.b16 %v923
    %v1705 = vunpack.c.h.b16 %v923
    %v1706 = vunpack.c.l.b16 %v924
    %v1707 = vunpack.c.h.b16 %v924
    %v1708 = vunpack.c.l.b16 %v925
    %v1709 = vunpack.c.h.b16 %v925
    %v1710 = vunpack.c.l.b16 %v926
    %v1711 = vunpack.c.h.b16 %v926
    %v1712 = vunpack.c.l.b16 %v927
    %v1713 = vunpack.c.h.b16 %v927
    %v1714 = vunpack.c.l.b16 %v928
    %v1715 = vunpack.c.h.b16 %v928
    %v1716 = vunpack.c.l.b16 %v929
    %v1717 = vunpack.c.h.b16 %v929
    %v1718 = vunpack.c.l.b16 %v930
    %v1719 = vunpack.c.h.b16 %v930
    %v1720 = vunpack.c.l.b16 %v931
    %v1721 = vunpack.c.h.b16 %v931
    %v1722 = vunpack.c.l.b16 %v932
    %v1723 = vunpack.c.h.b16 %v932
    %v1724 = vunpack.c.l.b16 %v933
    %v1725 = vunpack.c.h.b16 %v933
    %v1726 = vunpack.c.l.b16 %v934
    %v1727 = vunpack.c.h.b16 %v934
    %v1728 = vunpack.c.l.b16 %v935
    %v1729 = vunpack.c.h.b16 %v935
    %v1730 = vunpack.c.l.b16 %v936
    %v1731 = vunpack.c.h.b16 %v936
    %v1732 = vunpack.c.l.b16 %v937
    %v1733 = vunpack.c.h.b16 %v937
    %v1734 = vunpack.c.l.b16 %v938
    %v1735 = vunpack.c.h.b16 %v938
    %v1736 = vunpack.c.l.b16 %v939
    %v1737 = vunpack.c.h.b16 %v939
    %v1738 = vunpack.c.l.b16 %v940
    %v1739 = vunpack.c.h.b16 %v940
    %v1740 = vunpack.c.l.b16 %v941
    %v1741 = vunpack.c.h.b16 %v941
    %v1742 = vunpack.c.l.b16 %v942
    %v1743 = vunpack.c.h.b16 %v942
    %v1744 = vunpack.c.l.b16 %v943
    %v1745 = vunpack.c.h.b16 %v943
    %v1746 = vunpack.c.l.b16 %v944
    %v1747 = vunpack.c.h.b16 %v944
    %v1748 = vunpack.c.l.b16 %v945
    %v1749 = vunpack.c.h.b16 %v945
    %v1750 = vunpack.c.l.b16 %v946
    %v1751 = vunpack.c.h.b16 %v946
    %v1752 = vunpack.c.l.b16 %v947
    %v1753 = vunpack.c.h.b16 %v947
    %v1754 = vunpack.c.l.b16 %v948
    %v1755 = vunpack.c.h.b16 %v948
    %v1756 = vunpack.c.l.b16 %v949
    %v1757 = vunpack.c.h.b16 %v949
    %v1758 = vunpack.c.l.b16 %v950
    %v1759 = vunpack.c.h.b16 %v950
    %v1760 = vunpack.c.l.b16 %v951
    %v1761 = vunpack.c.h.b16 %v951
    %v1762 = vpack.c.b16 %v1258, %v1250
    %v1763 = vpack.c.b16 %v1259, %v1251
    %v1764 = vpack.c.b16 %v1260, %v1252
    %v1765 = vpack.c.b16 %v1261, %v1253
    %v1766 = vpack.c.b16 %v1262, %v1254
    %v1767 = vpack.c.b16 %v1263, %v1255
    %v1768 = vpack.c.b16 %v1264, %v1256
    %v1769 = vpack.c.b16 %v1265, %v1257
    %v1770 = vpack.c.b16 %v1274, %v1266
    %v1771 = vpack.c.b16 %v1275, %v1267
    %v1772 = vpack.c.b16 %v1276, %v1268
    %v1773 = vpack.c.b16 %v1277, %v1269
    %v1774 = vpack.c.b16 %v1278, %v1270
    %v1775 = vpack.c.b16 %v1279, %v1271
    %v1776 = vpack.c.b16 %v1280, %v1272
    %v1777 = vpack.c.b16 %v1281, %v1273
    %v1778 = vpack.c.b16 %v1290, %v1282
    %v1779 = vpack.c.b16 %v1291, %v1283
    %v1780 = vpack.c.b16 %v1292, %v1284
    %v1781 = vpack.c.b16 %v1293, %v1285
    %v1782 = vpack.c.b16 %v1294, %v1286
    %v1783 = vpack.c.b16 %v1295, %v1287
    %v1784 = vpack.c.b16 %v1296, %v1288
    %v1785 = vpack.c.b16 %v1297, %v1289
    %v1786 = vpack.c.b16 %v1306, %v1298
    %v1787 = vpack.c.b16 %v1307, %v1299
    %v1788 = vpack.c.b16 %v1308, %v1300
    %v1789 = vpack.c.b16 %v1309, %v1301
    %v1790 = vpack.c.b16 %v1310, %v1302
    %v1791 = vpack.c.b16 %v1311, %v1303
    %v1792 = vpack.c.b16 %v1312, %v1304
    %v1793 = vpack.c.b16 %v1313, %v1305
    %v1794 = vpack.c.b16 %v1322, %v1314
    %v1795 = vpack.c.b16 %v1323, %v1315
    %v1796 = vpack.c.b16 %v1324, %v1316
    %v1797 = vpack.c.b16 %v1325, %v1317
    %v1798 = vpack.c.b16 %v1326, %v1318
    %v1799 = vpack.c.b16 %v1327, %v1319
    %v1800 = vpack.c.b16 %v1328, %v1320
    %v1801 = vpack.c.b16 %v1329, %v1321
    %v1802 = vpack.c.b16 %v1338, %v1330
    %v1803 = vpack.c.b16 %v1339, %v1331
    %v1804 = vpack.c.b16 %v1340, %v1332
    %v1805 = vpack.c.b16 %v1341, %v1333
    %v1806 = vpack.c.b16 %v1342, %v1334
    %v1807 = vpack.c.b16 %v1343, %v1335
    %v1808 = vpack.c.b16 %v1344, %v1336
    %v1809 = vpack.c.b16 %v1345, %v1337
    %v1810 = vpack.c.b16 %v1354, %v1346
    %v1811 = vpack.c.b16 %v1355, %v1347
    %v1812 = vpack.c.b16 %v1356, %v1348
    %v1813 = vpack.c.b16 %v1357, %v1349
    %v1814 = vpack.c.b16 %v1358, %v1350
    %v1815 = vpack.c.b16 %v1359, %v1351
    %v1816 = vpack.c.b16 %v1360, %v1352
    %v1817 = vpack.c.b16 %v1361, %v1353
    %v1818 = vpack.c.b16 %v1370, %v1362
    %v1819 = vpack.c.b16 %v1371, %v1363
    %v1820 = vpack.c.b16 %v1372, %v1364
    %v1821 = vpack.c.b16 %v1373, %v1365
    %v1822 = vpack.c.b16 %v1374, %v1366
    %v1823 = vpack.c.b16 %v1375, %v1367
    %v1824 = vpack.c.b16 %v1376, %v1368
    %v1825 = vpack.c.b16 %v1377, %v1369
    %v1826 = vpack.c.b16 %v1386, %v1378
    %v1827 = vpack.c.b16 %v1387, %v1379
    %v1828 = vpack.c.b16 %v1388, %v1380
    %v1829 = vpack.c.b16 %v1389, %v1381
    %v1830 = vpack.c.b16 %v1390, %v1382
    %v1831 = vpack.c.b16 %v1391, %v1383
    %v1832 = vpack.c.b16 %v1392, %v1384
    %v1833 = vpack.c.b16 %v1393, %v1385
    %v1834 = vpack.c.b16 %v1402, %v1394
    %v1835 = vpack.c.b16 %v1403, %v1395
    %v1836 = vpack.c.b16 %v1404, %v1396
    %v1837 = vpack.c.b16 %v1405, %v1397
    %v1838 = vpack.c.b16 %v1406, %v1398
    %v1839 = vpack.c.b16 %v1407, %v1399
    %v1840 = vpack.c.b16 %v1408, %v1400
    %v1841 = vpack.c.b16 %v1409, %v1401
    %v1842 = vpack.c.b16 %v1418, %v1410
    %v1843 = vpack.c.b16 %v1419, %v1411
    %v1844 = vpack.c.b16 %v1420, %v1412
    %v1845 = vpack.c.b16 %v1421, %v1413
    %v1846 = vpack.c.b16 %v1422, %v1414
    %v1847 = vpack.c.b16 %v1423, %v1415
    %v1848 = vpack.c.b16 %v1424, %v1416
    %v1849 = vpack.c.b16 %v1425, %v1417
    %v1850 = vpack.c.b16 %v1434, %v1426
    %v1851 = vpack.c.b16 %v1435, %v1427
    %v1852 = vpack.c.b16 %v1436, %v1428
    %v1853 = vpack.c.b16 %v1437, %v1429
    %v1854 = vpack.c.b16 %v1438, %v1430
    %v1855 = vpack.c.b16 %v1439, %v1431
    %v1856 = vpack.c.b16 %v1440, %v1432
    %v1857 = vpack.c.b16 %v1441, %v1433
    %v1858 = vpack.c.b16 %v1450, %v1442
    %v1859 = vpack.c.b16 %v1451, %v1443
    %v1860 = vpack.c.b16 %v1452, %v1444
    %v1861 = vpack.c.b16 %v1453, %v1445
    %v1862 = vpack.c.b16 %v1454, %v1446
    %v1863 = vpack.c.b16 %v1455, %v1447
    %v1864 = vpack.c.b16 %v1456, %v1448
    %v1865 = vpack.c.b16 %v1457, %v1449
    %v1866 = vpack.c.b16 %v1466, %v1458
    %v1867 = vpack.c.b16 %v1467, %v1459
    %v1868 = vpack.c.b16 %v1468, %v1460
    %v1869 = vpack.c.b16 %v1469, %v1461
    %v1870 = vpack.c.b16 %v1470, %v1462
    %v1871 = vpack.c.b16 %v1471, %v1463
    %v1872 = vpack.c.b16 %v1472, %v1464
    %v1873 = vpack.c.b16 %v1473, %v1465
    %v1874 = vpack.c.b16 %v1482, %v1474
    %v1875 = vpack.c.b16 %v1483, %v1475
    %v1876 = vpack.c.b16 %v1484, %v1476
    %v1877 = vpack.c.b16 %v1485, %v1477
    %v1878 = vpack.c.b16 %v1486, %v1478
    %v1879 = vpack.c.b16 %v1487, %v1479
    %v1880 = vpack.c.b16 %v1488, %v1480
    %v1881 = vpack.c.b16 %v1489, %v1481
    %v1882 = vpack.c.b16 %v1498, %v1490
    %v1883 = vpack.c.b16 %v1499, %v1491
    %v1884 = vpack.c.b16 %v1500, %v1492
    %v1885 = vpack.c.b16 %v1501, %v1493
    %v1886 = vpack.c.b16 %v1502, %v1494
    %v1887 = vpack.c.b16 %v1503, %v1495
    %v1888 = vpack.c.b16 %v1504, %v1496
    %v1889 = vpack.c.b16 %v1505, %v1497
    %v1890 = vpack.c.b16 %v1514, %v1506
    %v1891 = vpack.c.b16 %v1515, %v1507
    %v1892 = vpack.c.b16 %v1516, %v1508
    %v1893 = vpack.c.b16 %v1517, %v1509
    %v1894 = vpack.c.b16 %v1518, %v1510
    %v1895 = vpack.c.b16 %v1519, %v1511
    %v1896 = vpack.c.b16 %v1520, %v1512
    %v1897 = vpack.c.b16 %v1521, %v1513
    %v1898 = vpack.c.b16 %v1530, %v1522
    %v1899 = vpack.c.b16 %v1531, %v1523
    %v1900 = vpack.c.b16 %v1532, %v1524
    %v1901 = vpack.c.b16 %v1533, %v1525
    %v1902 = vpack.c.b16 %v1534, %v1526
    %v1903 = vpack.c.b16 %v1535, %v1527
    %v1904 = vpack.c.b16 %v1536, %v1528
    %v1905 = vpack.c.b16 %v1537, %v1529
    %v1906 = vpack.c.b16 %v1546, %v1538
    %v1907 = vpack.c.b16 %v1547, %v1539
    %v1908 = vpack.c.b16 %v1548, %v1540
    %v1909 = vpack.c.b16 %v1549, %v1541
    %v1910 = vpack.c.b16 %v1550, %v1542
    %v1911 = vpack.c.b16 %v1551, %v1543
    %v1912 = vpack.c.b16 %v1552, %v1544
    %v1913 = vpack.c.b16 %v1553, %v1545
    %v1914 = vpack.c.b16 %v1562, %v1554
    %v1915 = vpack.c.b16 %v1563, %v1555
    %v1916 = vpack.c.b16 %v1564, %v1556
    %v1917 = vpack.c.b16 %v1565, %v1557
    %v1918 = vpack.c.b16 %v1566, %v1558
    %v1919 = vpack.c.b16 %v1567, %v1559
    %v1920 = vpack.c.b16 %v1568, %v1560
    %v1921 = vpack.c.b16 %v1569, %v1561
    %v1922 = vpack.c.b16 %v1578, %v1570
    %v1923 = vpack.c.b16 %v1579, %v1571
    %v1924 = vpack.c.b16 %v1580, %v1572
    %v1925 = vpack.c.b16 %v1581, %v1573
    %v1926 = vpack.c.b16 %v1582, %v1574
    %v1927 = vpack.c.b16 %v1583, %v1575
    %v1928 = vpack.c.b16 %v1584, %v1576
    %v1929 = vpack.c.b16 %v1585, %v1577
    %v1930 = vpack.c.b16 %v1594, %v1586
    %v1931 = vpack.c.b16 %v1595, %v1587
    %v1932 = vpack.c.b16 %v1596, %v1588
    %v1933 = vpack.c.b16 %v1597, %v1589
    %v1934 = vpack.c.b16 %v1598, %v1590
    %v1935 = vpack.c.b16 %v1599, %v1591
    %v1936 = vpack.c.b16 %v1600, %v1592
    %v1937 = vpack.c.b16 %v1601, %v1593
    %v1938 = vpack.c.b16 %v1610, %v1602
    %v1939 = vpack.c.b16 %v1611, %v1603
    %v1940 = vpack.c.b16 %v1612, %v1604
    %v1941 = vpack.c.b16 %v1613, %v1605
    %v1942 = vpack.c.b16 %v1614, %v1606
    %v1943 = vpack.c.b16 %v1615, %v1607
    %v1944 = vpack.c.b16 %v1616, %v1608
    %v1945 = vpack.c.b16 %v1617, %v1609
    %v1946 = vpack.c.b16 %v1626, %v1618
    %v1947 = vpack.c.b16 %v1627, %v1619
    %v1948 = vpack.c.b16 %v1628, %v1620
    %v1949 = vpack.c.b16 %v1629, %v1621
    %v1950 = vpack.c.b16 %v1630, %v1622
    %v1951 = vpack.c.b16 %v1631, %v1623
    %v1952 = vpack.c.b16 %v1632, %v1624
    %v1953 = vpack.c.b16 %v1633, %v1625
    %v1954 = vpack.c.b16 %v1642, %v1634
    %v1955 = vpack.c.b16 %v1643, %v1635
    %v1956 = vpack.c.b16 %v1644, %v1636
    %v1957 = vpack.c.b16 %v1645, %v1637
    %v1958 = vpack.c.b16 %v1646, %v1638
    %v1959 = vpack.c.b16 %v1647, %v1639
    %v1960 = vpack.c.b16 %v1648, %v1640
    %v1961 = vpack.c.b16 %v1649, %v1641
    %v1962 = vpack.c.b16 %v1658, %v1650
    %v1963 = vpack.c.b16 %v1659, %v1651
    %v1964 = vpack.c.b16 %v1660, %v1652
    %v1965 = vpack.c.b16 %v1661, %v1653
    %v1966 = vpack.c.b16 %v1662, %v1654
    %v1967 = vpack.c.b16 %v1663, %v1655
    %v1968 = vpack.c.b16 %v1664, %v1656
    %v1969 = vpack.c.b16 %v1665, %v1657
    %v1970 = vpack.c.b16 %v1674, %v1666
    %v1971 = vpack.c.b16 %v1675, %v1667
    %v1972 = vpack.c.b16 %v1676, %v1668
    %v1973 = vpack.c.b16 %v1677, %v1669
    %v1974 = vpack.c.b16 %v1678, %v1670
    %v1975 = vpack.c.b16 %v1679, %v1671
    %v1976 = vpack.c.b16 %v1680, %v1672
    %v1977 = vpack.c.b16 %v1681, %v1673
    %v1978 = vpack.c.b16 %v1690, %v1682
    %v1979 = vpack.c.b16 %v1691, %v1683
    %v1980 = vpack.c.b16 %v1692, %v1684
    %v1981 = vpack.c.b16 %v1693, %v1685
    %v1982 = vpack.c.b16 %v1694, %v1686
    %v1983 = vpack.c.b16 %v1695, %v1687
    %v1984 = vpack.c.b16 %v1696, %v1688
    %v1985 = vpack.c.b16 %v1697, %v1689
    %v1986 = vpack.c.b16 %v1706, %v1698
    %v1987 = vpack.c.b16 %v1707, %v1699
    %v1988 = vpack.c.b16 %v1708, %v1700
    %v1989 = vpack.c.b16 %v1709, %v1701
    %v1990 = vpack.c.b16 %v1710, %v1702
    %v1991 = vpack.c.b16 %v1711, %v1703
    %v1992 = vpack.c.b16 %v1712, %v1704
    %v1993 = vpack.c.b16 %v1713, %v1705
    %v1994 = vpack.c.b16 %v1722, %v1714
    %v1995 = vpack.c.b16 %v1723, %v1715
    %v1996 = vpack.c.b16 %v1724, %v1716
    %v1997 = vpack.c.b16 %v1725, %v1717
    %v1998 = vpack.c.b16 %v1726, %v1718
    %v1999 = vpack.c.b16 %v1727, %v1719
    %v2000 = vpack.c.b16 %v1728, %v1720
    %v2001 = vpack.c.b16 %v1729, %v1721
    %v2002 = vpack.c.b16 %v1738, %v1730
    %v2003 = vpack.c.b16 %v1739, %v1731
    %v2004 = vpack.c.b16 %v1740, %v1732
    %v2005 = vpack.c.b16 %v1741, %v1733
    %v2006 = vpack.c.b16 %v1742, %v1734
    %v2007 = vpack.c.b16 %v1743, %v1735
    %v2008 = vpack.c.b16 %v1744, %v1736
    %v2009 = vpack.c.b16 %v1745, %v1737
    %v2010 = vpack.c.b16 %v1754, %v1746
    %v2011 = vpack.c.b16 %v1755, %v1747
    %v2012 = vpack.c.b16 %v1756, %v1748
    %v2013 = vpack.c.b16 %v1757, %v1749
    %v2014 = vpack.c.b16 %v1758, %v1750
    %v2015 = vpack.c.b16 %v1759, %v1751
    %v2016 = vpack.c.b16 %v1760, %v1752
    %v2017 = vpack.c.b16 %v1761, %v1753
    %2274 = vmatprep.subr.bf16.mxu0 %v1763
    %2275 = vmatpush1.bf16.msra.mxu0 %v1762
    %2276 = vmatprep.subr.bf16.mxu0 %v1771
    %2277 = vmatpush1.bf16.msra.mxu0 %v1770
    %2278 = vmatprep.subr.bf16.mxu0 %v1779
    %2279 = vmatpush1.bf16.msra.mxu0 %v1778
    %2280 = vmatprep.subr.bf16.mxu0 %v1787
    %2281 = vmatpush1.bf16.msra.mxu0 %v1786
    %2282 = vmatprep.subr.bf16.mxu0 %v1795
    %2283 = vmatpush1.bf16.msra.mxu0 %v1794
    %2284 = vmatprep.subr.bf16.mxu0 %v1803
    %2285 = vmatpush1.bf16.msra.mxu0 %v1802
    %2286 = vmatprep.subr.bf16.mxu0 %v1811
    %2287 = vmatpush1.bf16.msra.mxu0 %v1810
    %2288 = vmatprep.subr.bf16.mxu0 %v1819
    %2289 = vmatpush1.bf16.msra.mxu0 %v1818
    %2290 = vmatprep.subr.bf16.mxu0 %v1827
    %2291 = vmatpush1.bf16.msra.mxu0 %v1826
    %2292 = vmatprep.subr.bf16.mxu0 %v1835
    %2293 = vmatpush1.bf16.msra.mxu0 %v1834
    %2294 = vmatprep.subr.bf16.mxu0 %v1843
    %2295 = vmatpush1.bf16.msra.mxu0 %v1842
    %2296 = vmatprep.subr.bf16.mxu0 %v1851
    %2297 = vmatpush1.bf16.msra.mxu0 %v1850
    %2298 = vmatprep.subr.bf16.mxu0 %v1859
    %2299 = vmatpush1.bf16.msra.mxu0 %v1858
    %2300 = vmatprep.subr.bf16.mxu0 %v1867
    %2301 = vmatpush1.bf16.msra.mxu0 %v1866
    %2302 = vmatprep.subr.bf16.mxu0 %v1875
    %2303 = vmatpush1.bf16.msra.mxu0 %v1874
    %2304 = vmatprep.subr.bf16.mxu0 %v1883
    %2305 = vmatpush1.bf16.msra.mxu0 %v1882
    %2306 = vmatprep.mubr.bf16.mxu0 %v693
    %2307 = vmatmul.mubr.bf16.gmra.mrb[0].mxu0 %v692
    %v2308 = vpop.f32.mrb[0].mxu0
    %v2309 = vadd.f32 %v957, %v2308
    %v2310 = vpop.f32.mrb[0].mxu0
    %v2311 = vadd.f32 %v961, %v2310
    %v2312 = vpop.f32.mrb[0].mxu0
    %v2313 = vpop.f32.mrb[0].mxu0
    %2314 = vdwg.mxu0
    %2315 = vmatprep.subr.bf16.mxu0 %v1891
    %2316 = vmatpush1.bf16.msra.mxu0 %v1890
    %2317 = vmatprep.subr.bf16.mxu0 %v1899
    %2318 = vmatpush1.bf16.msra.mxu0 %v1898
    %2319 = vmatprep.subr.bf16.mxu0 %v1907
    %2320 = vmatpush1.bf16.msra.mxu0 %v1906
    %2321 = vmatprep.subr.bf16.mxu0 %v1915
    %2322 = vmatpush1.bf16.msra.mxu0 %v1914
    %2323 = vmatprep.subr.bf16.mxu0 %v1923
    %2324 = vmatpush1.bf16.msra.mxu0 %v1922
    %2325 = vmatprep.subr.bf16.mxu0 %v1931
    %2326 = vmatpush1.bf16.msra.mxu0 %v1930
    %2327 = vmatprep.subr.bf16.mxu0 %v1939
    %2328 = vmatpush1.bf16.msra.mxu0 %v1938
    %2329 = vmatprep.subr.bf16.mxu0 %v1947
    %2330 = vmatpush1.bf16.msra.mxu0 %v1946
    %2331 = vmatprep.subr.bf16.mxu0 %v1955
    %2332 = vmatpush1.bf16.msra.mxu0 %v1954
    %2333 = vmatprep.subr.bf16.mxu0 %v1963
    %2334 = vmatpush1.bf16.msra.mxu0 %v1962
    %2335 = vmatprep.subr.bf16.mxu0 %v1971
    %2336 = vmatpush1.bf16.msra.mxu0 %v1970
    %2337 = vmatprep.subr.bf16.mxu0 %v1979
    %2338 = vmatpush1.bf16.msra.mxu0 %v1978
    %2339 = vmatprep.subr.bf16.mxu0 %v1987
    %2340 = vmatpush1.bf16.msra.mxu0 %v1986
    %2341 = vmatprep.subr.bf16.mxu0 %v1995
    %2342 = vmatpush1.bf16.msra.mxu0 %v1994
    %2343 = vmatprep.subr.bf16.mxu0 %v2003
    %2344 = vmatpush1.bf16.msra.mxu0 %v2002
    %2345 = vmatprep.subr.bf16.mxu0 %v2011
    %2346 = vmatpush1.bf16.msra.mxu0 %v2010
    %2347 = vmatprep.mubr.bf16.mxu0 %v695
    %2348 = vmatmul.mubr.bf16.gmra.mrb[0].mxu0 %v694
    %v2349 = vpop.f32.mrb[0].mxu0
    %v2350 = vadd.f32 %v2309, %v2349
    %v2351 = vpop.f32.mrb[0].mxu0
    %v2352 = vadd.f32 %v2311, %v2351
    %v2353 = vpop.f32.mrb[0].mxu0
    %v2354 = vpop.f32.mrb[0].mxu0
    %2355 = vdwg.mxu0
    %2356 = vmatprep.subr.bf16.mxu0 %v1765
    %2357 = vmatpush1.bf16.msra.mxu0 %v1764
    %2358 = vmatprep.subr.bf16.mxu0 %v1773
    %2359 = vmatpush1.bf16.msra.mxu0 %v1772
    %2360 = vmatprep.subr.bf16.mxu0 %v1781
    %2361 = vmatpush1.bf16.msra.mxu0 %v1780
    %2362 = vmatprep.subr.bf16.mxu0 %v1789
    %2363 = vmatpush1.bf16.msra.mxu0 %v1788
    %2364 = vmatprep.subr.bf16.mxu0 %v1797
    %2365 = vmatpush1.bf16.msra.mxu0 %v1796
    %2366 = vmatprep.subr.bf16.mxu0 %v1805
    %2367 = vmatpush1.bf16.msra.mxu0 %v1804
    %2368 = vmatprep.subr.bf16.mxu0 %v1813
    %2369 = vmatpush1.bf16.msra.mxu0 %v1812
    %2370 = vmatprep.subr.bf16.mxu0 %v1821
    %2371 = vmatpush1.bf16.msra.mxu0 %v1820
    %2372 = vmatprep.subr.bf16.mxu0 %v1829
    %2373 = vmatpush1.bf16.msra.mxu0 %v1828
    %2374 = vmatprep.subr.bf16.mxu0 %v1837
    %2375 = vmatpush1.bf16.msra.mxu0 %v1836
    %2376 = vmatprep.subr.bf16.mxu0 %v1845
    %2377 = vmatpush1.bf16.msra.mxu0 %v1844
    %2378 = vmatprep.subr.bf16.mxu0 %v1853
    %2379 = vmatpush1.bf16.msra.mxu0 %v1852
    %2380 = vmatprep.subr.bf16.mxu0 %v1861
    %2381 = vmatpush1.bf16.msra.mxu0 %v1860
    %2382 = vmatprep.subr.bf16.mxu0 %v1869
    %2383 = vmatpush1.bf16.msra.mxu0 %v1868
    %2384 = vmatprep.subr.bf16.mxu0 %v1877
    %2385 = vmatpush1.bf16.msra.mxu0 %v1876
    %2386 = vmatprep.subr.bf16.mxu0 %v1885
    %2387 = vmatpush1.bf16.msra.mxu0 %v1884
    %2388 = vmatprep.mubr.bf16.mxu0 %v693
    %2389 = vmatmul.mubr.bf16.gmra.mrb[0].mxu0 %v692
    %v2390 = vpop.f32.mrb[0].mxu0
    %v2391 = vadd.f32 %v965, %v2390
    %v2392 = vpop.f32.mrb[0].mxu0
    %v2393 = vadd.f32 %v969, %v2392
    %v2394 = vpop.f32.mrb[0].mxu0
    %v2395 = vpop.f32.mrb[0].mxu0
    %2396 = vdwg.mxu0
    %2397 = vmatprep.subr.bf16.mxu0 %v1893
    %2398 = vmatpush1.bf16.msra.mxu0 %v1892
    %2399 = vmatprep.subr.bf16.mxu0 %v1901
    %2400 = vmatpush1.bf16.msra.mxu0 %v1900
    %2401 = vmatprep.subr.bf16.mxu0 %v1909
    %2402 = vmatpush1.bf16.msra.mxu0 %v1908
    %2403 = vmatprep.subr.bf16.mxu0 %v1917
    %2404 = vmatpush1.bf16.msra.mxu0 %v1916
    %2405 = vmatprep.subr.bf16.mxu0 %v1925
    %2406 = vmatpush1.bf16.msra.mxu0 %v1924
    %2407 = vmatprep.subr.bf16.mxu0 %v1933
    %2408 = vmatpush1.bf16.msra.mxu0 %v1932
    %2409 = vmatprep.subr.bf16.mxu0 %v1941
    %2410 = vmatpush1.bf16.msra.mxu0 %v1940
    %2411 = vmatprep.subr.bf16.mxu0 %v1949
    %2412 = vmatpush1.bf16.msra.mxu0 %v1948
    %2413 = vmatprep.subr.bf16.mxu0 %v1957
    %2414 = vmatpush1.bf16.msra.mxu0 %v1956
    %2415 = vmatprep.subr.bf16.mxu0 %v1965
    %2416 = vmatpush1.bf16.msra.mxu0 %v1964
    %2417 = vmatprep.subr.bf16.mxu0 %v1973
    %2418 = vmatpush1.bf16.msra.mxu0 %v1972
    %2419 = vmatprep.subr.bf16.mxu0 %v1981
    %2420 = vmatpush1.bf16.msra.mxu0 %v1980
    %2421 = vmatprep.subr.bf16.mxu0 %v1989
    %2422 = vmatpush1.bf16.msra.mxu0 %v1988
    %2423 = vmatprep.subr.bf16.mxu0 %v1997
    %2424 = vmatpush1.bf16.msra.mxu0 %v1996
    %2425 = vmatprep.subr.bf16.mxu0 %v2005
    %2426 = vmatpush1.bf16.msra.mxu0 %v2004
    %2427 = vmatprep.subr.bf16.mxu0 %v2013
    %2428 = vmatpush1.bf16.msra.mxu0 %v2012
    %2429 = vmatprep.mubr.bf16.mxu0 %v695
    %2430 = vmatmul.mubr.bf16.gmra.mrb[0].mxu0 %v694
    %v2431 = vpop.f32.mrb[0].mxu0
    %v2432 = vadd.f32 %v2391, %v2431
    %v2433 = vpop.f32.mrb[0].mxu0
    %v2434 = vadd.f32 %v2393, %v2433
    %v2435 = vpop.f32.mrb[0].mxu0
    %v2436 = vpop.f32.mrb[0].mxu0
    %2437 = vdwg.mxu0
    %2438 = vmatprep.subr.bf16.mxu0 %v1767
    %2439 = vmatpush1.bf16.msra.mxu0 %v1766
    %2440 = vmatprep.subr.bf16.mxu0 %v1775
    %2441 = vmatpush1.bf16.msra.mxu0 %v1774
    %2442 = vmatprep.subr.bf16.mxu0 %v1783
    %2443 = vmatpush1.bf16.msra.mxu0 %v1782
    %2444 = vmatprep.subr.bf16.mxu0 %v1791
    %2445 = vmatpush1.bf16.msra.mxu0 %v1790
    %2446 = vmatprep.subr.bf16.mxu0 %v1799
    %2447 = vmatpush1.bf16.msra.mxu0 %v1798
    %2448 = vmatprep.subr.bf16.mxu0 %v1807
    %2449 = vmatpush1.bf16.msra.mxu0 %v1806
    %2450 = vmatprep.subr.bf16.mxu0 %v1815
    %2451 = vmatpush1.bf16.msra.mxu0 %v1814
    %2452 = vmatprep.subr.bf16.mxu0 %v1823
    %2453 = vmatpush1.bf16.msra.mxu0 %v1822
    %2454 = vmatprep.subr.bf16.mxu0 %v1831
    %2455 = vmatpush1.bf16.msra.mxu0 %v1830
    %2456 = vmatprep.subr.bf16.mxu0 %v1839
    %2457 = vmatpush1.bf16.msra.mxu0 %v1838
    %2458 = vmatprep.subr.bf16.mxu0 %v1847
    %2459 = vmatpush1.bf16.msra.mxu0 %v1846
    %2460 = vmatprep.subr.bf16.mxu0 %v1855
    %2461 = vmatpush1.bf16.msra.mxu0 %v1854
    %2462 = vmatprep.subr.bf16.mxu0 %v1863
    %2463 = vmatpush1.bf16.msra.mxu0 %v1862
    %2464 = vmatprep.subr.bf16.mxu0 %v1871
    %2465 = vmatpush1.bf16.msra.mxu0 %v1870
    %2466 = vmatprep.subr.bf16.mxu0 %v1879
    %2467 = vmatpush1.bf16.msra.mxu0 %v1878
    %2468 = vmatprep.subr.bf16.mxu0 %v1887
    %2469 = vmatpush1.bf16.msra.mxu0 %v1886
    %2470 = vmatprep.mubr.bf16.mxu0 %v693
    %2471 = vmatmul.mubr.bf16.gmra.mrb[0].mxu0 %v692
    %v2472 = vpop.f32.mrb[0].mxu0
    %v2473 = vadd.f32 %v973, %v2472
    %v2474 = vpop.f32.mrb[0].mxu0
    %v2475 = vadd.f32 %v977, %v2474
    %v2476 = vpop.f32.mrb[0].mxu0
    %v2477 = vpop.f32.mrb[0].mxu0
    %2478 = vdwg.mxu0
    %2479 = vmatprep.subr.bf16.mxu0 %v1895
    %2480 = vmatpush1.bf16.msra.mxu0 %v1894
    %2481 = vmatprep.subr.bf16.mxu0 %v1903
    %2482 = vmatpush1.bf16.msra.mxu0 %v1902
    %2483 = vmatprep.subr.bf16.mxu0 %v1911
    %2484 = vmatpush1.bf16.msra.mxu0 %v1910
    %2485 = vmatprep.subr.bf16.mxu0 %v1919
    %2486 = vmatpush1.bf16.msra.mxu0 %v1918
    %2487 = vmatprep.subr.bf16.mxu0 %v1927
    %2488 = vmatpush1.bf16.msra.mxu0 %v1926
    %2489 = vmatprep.subr.bf16.mxu0 %v1935
    %2490 = vmatpush1.bf16.msra.mxu0 %v1934
    %2491 = vmatprep.subr.bf16.mxu0 %v1943
    %2492 = vmatpush1.bf16.msra.mxu0 %v1942
    %2493 = vmatprep.subr.bf16.mxu0 %v1951
    %2494 = vmatpush1.bf16.msra.mxu0 %v1950
    %2495 = vmatprep.subr.bf16.mxu0 %v1959
    %2496 = vmatpush1.bf16.msra.mxu0 %v1958
    %2497 = vmatprep.subr.bf16.mxu0 %v1967
    %2498 = vmatpush1.bf16.msra.mxu0 %v1966
    %2499 = vmatprep.subr.bf16.mxu0 %v1975
    %2500 = vmatpush1.bf16.msra.mxu0 %v1974
    %2501 = vmatprep.subr.bf16.mxu0 %v1983
    %2502 = vmatpush1.bf16.msra.mxu0 %v1982
    %2503 = vmatprep.subr.bf16.mxu0 %v1991
    %2504 = vmatpush1.bf16.msra.mxu0 %v1990
    %2505 = vmatprep.subr.bf16.mxu0 %v1999
    %2506 = vmatpush1.bf16.msra.mxu0 %v1998
    %2507 = vmatprep.subr.bf16.mxu0 %v2007
    %2508 = vmatpush1.bf16.msra.mxu0 %v2006
    %2509 = vmatprep.subr.bf16.mxu0 %v2015
    %2510 = vmatpush1.bf16.msra.mxu0 %v2014
    %2511 = vmatprep.mubr.bf16.mxu0 %v695
    %2512 = vmatmul.mubr.bf16.gmra.mrb[0].mxu0 %v694
    %v2513 = vpop.f32.mrb[0].mxu0
    %v2514 = vadd.f32 %v2473, %v2513
    %v2515 = vpop.f32.mrb[0].mxu0
    %v2516 = vadd.f32 %v2475, %v2515
    %v2517 = vpop.f32.mrb[0].mxu0
    %v2518 = vpop.f32.mrb[0].mxu0
    %2519 = vdwg.mxu0
    %2520 = vmatprep.subr.bf16.mxu0 %v1769
    %2521 = vmatpush1.bf16.msra.mxu0 %v1768
    %2522 = vmatprep.subr.bf16.mxu0 %v1777
    %2523 = vmatpush1.bf16.msra.mxu0 %v1776
    %2524 = vmatprep.subr.bf16.mxu0 %v1785
    %2525 = vmatpush1.bf16.msra.mxu0 %v1784
    %2526 = vmatprep.subr.bf16.mxu0 %v1793
    %2527 = vmatpush1.bf16.msra.mxu0 %v1792
    %2528 = vmatprep.subr.bf16.mxu0 %v1801
    %2529 = vmatpush1.bf16.msra.mxu0 %v1800
    %2530 = vmatprep.subr.bf16.mxu0 %v1809
    %2531 = vmatpush1.bf16.msra.mxu0 %v1808
    %2532 = vmatprep.subr.bf16.mxu0 %v1817
    %2533 = vmatpush1.bf16.msra.mxu0 %v1816
    %2534 = vmatprep.subr.bf16.mxu0 %v1825
    %2535 = vmatpush1.bf16.msra.mxu0 %v1824
    %2536 = vmatprep.subr.bf16.mxu0 %v1833
    %2537 = vmatpush1.bf16.msra.mxu0 %v1832
    %2538 = vmatprep.subr.bf16.mxu0 %v1841
    %2539 = vmatpush1.bf16.msra.mxu0 %v1840
    %2540 = vmatprep.subr.bf16.mxu0 %v1849
    %2541 = vmatpush1.bf16.msra.mxu0 %v1848
    %2542 = vmatprep.subr.bf16.mxu0 %v1857
    %2543 = vmatpush1.bf16.msra.mxu0 %v1856
    %2544 = vmatprep.subr.bf16.mxu0 %v1865
    %2545 = vmatpush1.bf16.msra.mxu0 %v1864
    %2546 = vmatprep.subr.bf16.mxu0 %v1873
    %2547 = vmatpush1.bf16.msra.mxu0 %v1872
    %2548 = vmatprep.subr.bf16.mxu0 %v1881
    %2549 = vmatpush1.bf16.msra.mxu0 %v1880
    %2550 = vmatprep.subr.bf16.mxu0 %v1889
    %2551 = vmatpush1.bf16.msra.mxu0 %v1888
    %2552 = vmatprep.mubr.bf16.mxu0 %v693
    %2553 = vmatmul.mubr.bf16.gmra.mrb[0].mxu0 %v692
    %v2554 = vpop.f32.mrb[0].mxu0
    %v2555 = vadd.f32 %v981, %v2554
    %v2556 = vpop.f32.mrb[0].mxu0
    %v2557 = vadd.f32 %v985, %v2556
    %v2558 = vpop.f32.mrb[0].mxu0
    %v2559 = vpop.f32.mrb[0].mxu0
    %2560 = vdwg.mxu0
    %2561 = vmatprep.subr.bf16.mxu0 %v1897
    %2562 = vmatpush1.bf16.msra.mxu0 %v1896
    %2563 = vmatprep.subr.bf16.mxu0 %v1905
    %2564 = vmatpush1.bf16.msra.mxu0 %v1904
    %2565 = vmatprep.subr.bf16.mxu0 %v1913
    %2566 = vmatpush1.bf16.msra.mxu0 %v1912
    %2567 = vmatprep.subr.bf16.mxu0 %v1921
    %2568 = vmatpush1.bf16.msra.mxu0 %v1920
    %2569 = vmatprep.subr.bf16.mxu0 %v1929
    %2570 = vmatpush1.bf16.msra.mxu0 %v1928
    %2571 = vmatprep.subr.bf16.mxu0 %v1937
    %2572 = vmatpush1.bf16.msra.mxu0 %v1936
    %2573 = vmatprep.subr.bf16.mxu0 %v1945
    %2574 = vmatpush1.bf16.msra.mxu0 %v1944
    %2575 = vmatprep.subr.bf16.mxu0 %v1953
    %2576 = vmatpush1.bf16.msra.mxu0 %v1952
    %2577 = vmatprep.subr.bf16.mxu0 %v1961
    %2578 = vmatpush1.bf16.msra.mxu0 %v1960
    %2579 = vmatprep.subr.bf16.mxu0 %v1969
    %2580 = vmatpush1.bf16.msra.mxu0 %v1968
    %2581 = vmatprep.subr.bf16.mxu0 %v1977
    %2582 = vmatpush1.bf16.msra.mxu0 %v1976
    %2583 = vmatprep.subr.bf16.mxu0 %v1985
    %2584 = vmatpush1.bf16.msra.mxu0 %v1984
    %2585 = vmatprep.subr.bf16.mxu0 %v1993
    %2586 = vmatpush1.bf16.msra.mxu0 %v1992
    %2587 = vmatprep.subr.bf16.mxu0 %v2001
    %2588 = vmatpush1.bf16.msra.mxu0 %v2000
    %2589 = vmatprep.subr.bf16.mxu0 %v2009
    %2590 = vmatpush1.bf16.msra.mxu0 %v2008
    %2591 = vmatprep.subr.bf16.mxu0 %v2017
    %2592 = vmatpush1.bf16.msra.mxu0 %v2016
    %2593 = vmatprep.mubr.bf16.mxu0 %v695
    %2594 = vmatmul.mubr.bf16.gmra.mrb[0].mxu0 %v694
    %v2595 = vpop.f32.mrb[0].mxu0
    %v2596 = vadd.f32 %v2555, %v2595
    %v2597 = vpop.f32.mrb[0].mxu0
    %v2598 = vadd.f32 %v2557, %v2597
    %v2599 = vpop.f32.mrb[0].mxu0
    %v2600 = vpop.f32.mrb[0].mxu0
    %2601 = vdwg.mxu0
    %vm2602 = vcmp.gt.f32.partialorder %v2350, 0.0
    %vm2603 = vcmp.gt.f32.partialorder %v2352, 0.0
    %vm2604 = vcmp.gt.f32.partialorder %v2432, 0.0
    %vm2605 = vcmp.gt.f32.partialorder %v2434, 0.0
    %vm2606 = vcmp.gt.f32.partialorder %v2514, 0.0
    %vm2607 = vcmp.gt.f32.partialorder %v2516, 0.0
    %vm2608 = vcmp.gt.f32.partialorder %v2596, 0.0
    %vm2609 = vcmp.gt.f32.partialorder %v2598, 0.0
    %v2610 = vmul.f32 %v2350, 0.2
    %v2611 = vmul.f32 %v2352, 0.2
    %v2612 = vmul.f32 %v2432, 0.2
    %v2613 = vmul.f32 %v2434, 0.2
    %v2614 = vmul.f32 %v2514, 0.2
    %v2615 = vmul.f32 %v2516, 0.2
    %v2616 = vmul.f32 %v2596, 0.2
    %v2617 = vmul.f32 %v2598, 0.2
    %v2618 = vsel %vm2602, %v2350, %v2610
    %v2619 = vsel %vm2603, %v2352, %v2611
    %v2620 = vsel %vm2604, %v2432, %v2612
    %v2621 = vsel %vm2605, %v2434, %v2613
    %v2622 = vsel %vm2606, %v2514, %v2614
    %v2623 = vsel %vm2607, %v2516, %v2615
    %v2624 = vsel %vm2608, %v2596, %v2616
    %v2625 = vsel %vm2609, %v2598, %v2617
    %v2626 = vpack.c.bf16 %v2618, %v2618
    %v2627 = vpack.c.bf16 %v2619, %v2619
    %v2628 = vpack.c.bf16 %v2620, %v2620
    %v2629 = vpack.c.bf16 %v2621, %v2621
    %v2630 = vpack.c.bf16 %v2622, %v2622
    %v2631 = vpack.c.bf16 %v2623, %v2623
    %v2632 = vpack.c.bf16 %v2624, %v2624
    %v2633 = vpack.c.bf16 %v2625, %v2625
    %v2634 = vld [vmem:[%s7] sm:$0xff]
    %v2635 = vld [vmem:[%s7 + $0x8] sm:$0xff]
    %v2636 = vld [vmem:[%s7 + $0x10] sm:$0xff]
    %v2637 = vld [vmem:[%s7 + $0x18] sm:$0xf]
    %v2638 = vld [vmem:[%s7 + $0x1c] sm:$0xff]
    %v2639 = vld [vmem:[%s7 + $0x24] sm:$0xff]
    %v2640 = vld [vmem:[%s7 + $0x2c] sm:$0xff]
    %v2641 = vld [vmem:[%s7 + $0x34] sm:$0xf]
    %v2642 = vld [vmem:[%s7 + $0x38] sm:$0xff]
    %v2643 = vld [vmem:[%s7 + $0x40] sm:$0xff]
    %v2644 = vld [vmem:[%s7 + $0x48] sm:$0xff]
    %v2645 = vld [vmem:[%s7 + $0x50] sm:$0xf]
    %v2646 = vld [vmem:[%s7 + $0x54] sm:$0xff]
    %v2647 = vld [vmem:[%s7 + $0x5c] sm:$0xff]
    %v2648 = vld [vmem:[%s7 + $0x64] sm:$0xff]
    %v2649 = vld [vmem:[%s7 + $0x6c] sm:$0xf]
    %v2650 = vld [vmem:[%s7 + $0x70] sm:$0xff]
    %v2651 = vld [vmem:[%s7 + $0x78] sm:$0xff]
    %v2652 = vld [vmem:[%s7 + $0x80] sm:$0xff]
    %v2653 = vld [vmem:[%s7 + $0x88] sm:$0xf]
    %v2654 = vld [vmem:[%s7 + $0x8c] sm:$0xff]
    %v2655 = vld [vmem:[%s7 + $0x94] sm:$0xff]
    %v2656 = vld [vmem:[%s7 + $0x9c] sm:$0xff]
    %v2657 = vld [vmem:[%s7 + $0xa4] sm:$0xf]
    %v2658 = vld [vmem:[%s7 + $0xa8] sm:$0xff]
    %v2659 = vld [vmem:[%s7 + $0xb0] sm:$0xff]
    %v2660 = vld [vmem:[%s7 + $0xb8] sm:$0xff]
    %v2661 = vld [vmem:[%s7 + $0xc0] sm:$0xf]
    %v2662 = vld [vmem:[%s7 + $0xc4] sm:$0xff]
    %v2663 = vld [vmem:[%s7 + $0xcc] sm:$0xff]
    %v2664 = vld [vmem:[%s7 + $0xd4] sm:$0xff]
    %v2665 = vld [vmem:[%s7 + $0xdc] sm:$0xf]
    %v2666 = vld [vmem:[%s7 + $0xe0] sm:$0xff]
    %v2667 = vld [vmem:[%s7 + $0xe8] sm:$0xff]
    %v2668 = vld [vmem:[%s7 + $0xf0] sm:$0xff]
    %v2669 = vld [vmem:[%s7 + $0xf8] sm:$0xf]
    %v2670 = vld [vmem:[%s7 + $0xfc] sm:$0xff]
    %v2671 = vld [vmem:[%s7 + $0x104] sm:$0xff]
    %v2672 = vld [vmem:[%s7 + $0x10c] sm:$0xff]
    %v2673 = vld [vmem:[%s7 + $0x114] sm:$0xf]
    %v2674 = vld [vmem:[%s7 + $0x118] sm:$0xff]
    %v2675 = vld [vmem:[%s7 + $0x120] sm:$0xff]
    %v2676 = vld [vmem:[%s7 + $0x128] sm:$0xff]
    %v2677 = vld [vmem:[%s7 + $0x130] sm:$0xf]
    %v2678 = vld [vmem:[%s7 + $0x134] sm:$0xff]
    %v2679 = vld [vmem:[%s7 + $0x13c] sm:$0xff]
    %v2680 = vld [vmem:[%s7 + $0x144] sm:$0xff]
    %v2681 = vld [vmem:[%s7 + $0x14c] sm:$0xf]
    %v2682 = vld [vmem:[%s7 + $0x150] sm:$0xff]
    %v2683 = vld [vmem:[%s7 + $0x158] sm:$0xff]
    %v2684 = vld [vmem:[%s7 + $0x160] sm:$0xff]
    %v2685 = vld [vmem:[%s7 + $0x168] sm:$0xf]
    %v2686 = vld [vmem:[%s7 + $0x16c] sm:$0xff]
    %v2687 = vld [vmem:[%s7 + $0x174] sm:$0xff]
    %v2688 = vld [vmem:[%s7 + $0x17c] sm:$0xff]
    %v2689 = vld [vmem:[%s7 + $0x184] sm:$0xf]
    %v2690 = vld [vmem:[%s7 + $0x188] sm:$0xff]
    %v2691 = vld [vmem:[%s7 + $0x190] sm:$0xff]
    %v2692 = vld [vmem:[%s7 + $0x198] sm:$0xff]
    %v2693 = vld [vmem:[%s7 + $0x1a0] sm:$0xf]
    %v2694 = vld [vmem:[%s7 + $0x1a4] sm:$0xff]
    %v2695 = vld [vmem:[%s7 + $0x1ac] sm:$0xff]
    %v2696 = vld [vmem:[%s7 + $0x1b4] sm:$0xff]
    %v2697 = vld [vmem:[%s7 + $0x1bc] sm:$0xf]
    %v2698 = vld [vmem:[%s7 + $0x1c0] sm:$0xff]
    %v2699 = vld [vmem:[%s7 + $0x1c8] sm:$0xff]
    %v2700 = vld [vmem:[%s7 + $0x1d0] sm:$0xff]
    %v2701 = vld [vmem:[%s7 + $0x1d8] sm:$0xf]
    %v2702 = vld [vmem:[%s7 + $0x1dc] sm:$0xff]
    %v2703 = vld [vmem:[%s7 + $0x1e4] sm:$0xff]
    %v2704 = vld [vmem:[%s7 + $0x1ec] sm:$0xff]
    %v2705 = vld [vmem:[%s7 + $0x1f4] sm:$0xf]
    %v2706 = vld [vmem:[%s7 + $0x1f8] sm:$0xff]
    %v2707 = vld [vmem:[%s7 + $0x200] sm:$0xff]
    %v2708 = vld [vmem:[%s7 + $0x208] sm:$0xff]
    %v2709 = vld [vmem:[%s7 + $0x210] sm:$0xf]
    %v2710 = vld [vmem:[%s7 + $0x214] sm:$0xff]
    %v2711 = vld [vmem:[%s7 + $0x21c] sm:$0xff]
    %v2712 = vld [vmem:[%s7 + $0x224] sm:$0xff]
    %v2713 = vld [vmem:[%s7 + $0x22c] sm:$0xf]
    %v2714 = vld [vmem:[%s7 + $0x230] sm:$0xff]
    %v2715 = vld [vmem:[%s7 + $0x238] sm:$0xff]
    %v2716 = vld [vmem:[%s7 + $0x240] sm:$0xff]
    %v2717 = vld [vmem:[%s7 + $0x248] sm:$0xf]
    %v2718 = vld [vmem:[%s7 + $0x24c] sm:$0xff]
    %v2719 = vld [vmem:[%s7 + $0x254] sm:$0xff]
    %v2720 = vld [vmem:[%s7 + $0x25c] sm:$0xff]
    %v2721 = vld [vmem:[%s7 + $0x264] sm:$0xf]
    %v2722 = vld [vmem:[%s7 + $0x268] sm:$0xff]
    %v2723 = vld [vmem:[%s7 + $0x270] sm:$0xff]
    %v2724 = vld [vmem:[%s7 + $0x278] sm:$0xff]
    %v2725 = vld [vmem:[%s7 + $0x280] sm:$0xf]
    %v2726 = vld [vmem:[%s7 + $0x284] sm:$0xff]
    %v2727 = vld [vmem:[%s7 + $0x28c] sm:$0xff]
    %v2728 = vld [vmem:[%s7 + $0x294] sm:$0xff]
    %v2729 = vld [vmem:[%s7 + $0x29c] sm:$0xf]
    %v2730 = vld [vmem:[%s7 + $0x2a0] sm:$0xff]
    %v2731 = vld [vmem:[%s7 + $0x2a8] sm:$0xff]
    %v2732 = vld [vmem:[%s7 + $0x2b0] sm:$0xff]
    %v2733 = vld [vmem:[%s7 + $0x2b8] sm:$0xf]
    %v2734 = vld [vmem:[%s7 + $0x2bc] sm:$0xff]
    %v2735 = vld [vmem:[%s7 + $0x2c4] sm:$0xff]
    %v2736 = vld [vmem:[%s7 + $0x2cc] sm:$0xff]
    %v2737 = vld [vmem:[%s7 + $0x2d4] sm:$0xf]
    %v2738 = vld [vmem:[%s7 + $0x2d8] sm:$0xff]
    %v2739 = vld [vmem:[%s7 + $0x2e0] sm:$0xff]
    %v2740 = vld [vmem:[%s7 + $0x2e8] sm:$0xff]
    %v2741 = vld [vmem:[%s7 + $0x2f0] sm:$0xf]
    %v2742 = vld [vmem:[%s7 + $0x2f4] sm:$0xff]
    %v2743 = vld [vmem:[%s7 + $0x2fc] sm:$0xff]
    %v2744 = vld [vmem:[%s7 + $0x304] sm:$0xff]
    %v2745 = vld [vmem:[%s7 + $0x30c] sm:$0xf]
    %v2746 = vld [vmem:[%s7 + $0x310] sm:$0xff]
    %v2747 = vld [vmem:[%s7 + $0x318] sm:$0xff]
    %v2748 = vld [vmem:[%s7 + $0x320] sm:$0xff]
    %v2749 = vld [vmem:[%s7 + $0x328] sm:$0xf]
    %v2750 = vld [vmem:[%s7 + $0x32c] sm:$0xff]
    %v2751 = vld [vmem:[%s7 + $0x334] sm:$0xff]
    %v2752 = vld [vmem:[%s7 + $0x33c] sm:$0xff]
    %v2753 = vld [vmem:[%s7 + $0x344] sm:$0xf]
    %v2754 = vld [vmem:[%s7 + $0x348] sm:$0xff]
    %v2755 = vld [vmem:[%s7 + $0x350] sm:$0xff]
    %v2756 = vld [vmem:[%s7 + $0x358] sm:$0xff]
    %v2757 = vld [vmem:[%s7 + $0x360] sm:$0xf]
    %v2758 = vld [vmem:[%s7 + $0x364] sm:$0xff]
    %v2759 = vld [vmem:[%s7 + $0x36c] sm:$0xff]
    %v2760 = vld [vmem:[%s7 + $0x374] sm:$0xff]
    %v2761 = vld [vmem:[%s7 + $0x37c] sm:$0xf]
    %v2762 = vld [vmem:[%s7 + $0x380] sm:$0xff]
    %v2763 = vld [vmem:[%s7 + $0x388] sm:$0xff]
    %v2764 = vld [vmem:[%s7 + $0x390] sm:$0xff]
    %v2765 = vld [vmem:[%s7 + $0x398] sm:$0xf]
    %v2766 = vld [vmem:[%s7 + $0x39c] sm:$0xff]
    %v2767 = vld [vmem:[%s7 + $0x3a4] sm:$0xff]
    %v2768 = vld [vmem:[%s7 + $0x3ac] sm:$0xff]
    %v2769 = vld [vmem:[%s7 + $0x3b4] sm:$0xf]
    %v2770 = vld [vmem:[%s7 + $0x3b8] sm:$0xff]
    %v2771 = vld [vmem:[%s7 + $0x3c0] sm:$0xff]
    %v2772 = vld [vmem:[%s7 + $0x3c8] sm:$0xff]
    %v2773 = vld [vmem:[%s7 + $0x3d0] sm:$0xf]
    %v2774 = vld [vmem:[%s7 + $0x3d4] sm:$0xff]
    %v2775 = vld [vmem:[%s7 + $0x3dc] sm:$0xff]
    %v2776 = vld [vmem:[%s7 + $0x3e4] sm:$0xff]
    %v2777 = vld [vmem:[%s7 + $0x3ec] sm:$0xf]
    %v2778 = vld [vmem:[%s7 + $0x3f0] sm:$0xff]
    %v2779 = vld [vmem:[%s7 + $0x3f8] sm:$0xff]
    %v2780 = vld [vmem:[%s7 + $0x400] sm:$0xff]
    %v2781 = vld [vmem:[%s7 + $0x408] sm:$0xf]
    %v2782 = vld [vmem:[%s7 + $0x40c] sm:$0xff]
    %v2783 = vld [vmem:[%s7 + $0x414] sm:$0xff]
    %v2784 = vld [vmem:[%s7 + $0x41c] sm:$0xff]
    %v2785 = vld [vmem:[%s7 + $0x424] sm:$0xf]
    %v2786 = vld [vmem:[%s7 + $0x428] sm:$0xff]
    %v2787 = vld [vmem:[%s7 + $0x430] sm:$0xff]
    %v2788 = vld [vmem:[%s7 + $0x438] sm:$0xff]
    %v2789 = vld [vmem:[%s7 + $0x440] sm:$0xf]
    %v2790 = vld [vmem:[%s7 + $0x444] sm:$0xff]
    %v2791 = vld [vmem:[%s7 + $0x44c] sm:$0xff]
    %v2792 = vld [vmem:[%s7 + $0x454] sm:$0xff]
    %v2793 = vld [vmem:[%s7 + $0x45c] sm:$0xf]
    %v2794 = vld [vmem:[%s7 + $0x460] sm:$0xff]
    %v2795 = vld [vmem:[%s7 + $0x468] sm:$0xff]
    %v2796 = vld [vmem:[%s7 + $0x470] sm:$0xff]
    %v2797 = vld [vmem:[%s7 + $0x478] sm:$0xf]
    %v2798 = vld [vmem:[%s7 + $0x47c] sm:$0xff]
    %v2799 = vld [vmem:[%s7 + $0x484] sm:$0xff]
    %v2800 = vld [vmem:[%s7 + $0x48c] sm:$0xff]
    %v2801 = vld [vmem:[%s7 + $0x494] sm:$0xf]
    %v2802 = vld [vmem:[%s7 + $0x498] sm:$0xff]
    %v2803 = vld [vmem:[%s7 + $0x4a0] sm:$0xff]
    %v2804 = vld [vmem:[%s7 + $0x4a8] sm:$0xff]
    %v2805 = vld [vmem:[%s7 + $0x4b0] sm:$0xf]
    %v2806 = vld [vmem:[%s7 + $0x4b4] sm:$0xff]
    %v2807 = vld [vmem:[%s7 + $0x4bc] sm:$0xff]
    %v2808 = vld [vmem:[%s7 + $0x4c4] sm:$0xff]
    %v2809 = vld [vmem:[%s7 + $0x4cc] sm:$0xf]
    %v2810 = vld [vmem:[%s7 + $0x4d0] sm:$0xff]
    %v2811 = vld [vmem:[%s7 + $0x4d8] sm:$0xff]
    %v2812 = vld [vmem:[%s7 + $0x4e0] sm:$0xff]
    %v2813 = vld [vmem:[%s7 + $0x4e8] sm:$0xf]
    %v2814 = vld [vmem:[%s7 + $0x4ec] sm:$0xff]
    %v2815 = vld [vmem:[%s7 + $0x4f4] sm:$0xff]
    %v2816 = vld [vmem:[%s7 + $0x4fc] sm:$0xff]
    %v2817 = vld [vmem:[%s7 + $0x504] sm:$0xf]
    %v2818 = vld [vmem:[%s7 + $0x508] sm:$0xff]
    %v2819 = vld [vmem:[%s7 + $0x510] sm:$0xff]
    %v2820 = vld [vmem:[%s7 + $0x518] sm:$0xff]
    %v2821 = vld [vmem:[%s7 + $0x520] sm:$0xf]
    %v2822 = vld [vmem:[%s7 + $0x524] sm:$0xff]
    %v2823 = vld [vmem:[%s7 + $0x52c] sm:$0xff]
    %v2824 = vld [vmem:[%s7 + $0x534] sm:$0xff]
    %v2825 = vld [vmem:[%s7 + $0x53c] sm:$0xf]
    %v2826 = vld [vmem:[%s7 + $0x540] sm:$0xff]
    %v2827 = vld [vmem:[%s7 + $0x548] sm:$0xff]
    %v2828 = vld [vmem:[%s7 + $0x550] sm:$0xff]
    %v2829 = vld [vmem:[%s7 + $0x558] sm:$0xf]
    %v2830 = vld [vmem:[%s7 + $0x55c] sm:$0xff]
    %v2831 = vld [vmem:[%s7 + $0x564] sm:$0xff]
    %v2832 = vld [vmem:[%s7 + $0x56c] sm:$0xff]
    %v2833 = vld [vmem:[%s7 + $0x574] sm:$0xf]
    %v2834 = vld [vmem:[%s7 + $0x578] sm:$0xff]
    %v2835 = vld [vmem:[%s7 + $0x580] sm:$0xff]
    %v2836 = vld [vmem:[%s7 + $0x588] sm:$0xff]
    %v2837 = vld [vmem:[%s7 + $0x590] sm:$0xf]
    %v2838 = vld [vmem:[%s7 + $0x594] sm:$0xff]
    %v2839 = vld [vmem:[%s7 + $0x59c] sm:$0xff]
    %v2840 = vld [vmem:[%s7 + $0x5a4] sm:$0xff]
    %v2841 = vld [vmem:[%s7 + $0x5ac] sm:$0xf]
    %v2842 = vld [vmem:[%s7 + $0x5b0] sm:$0xff]
    %v2843 = vld [vmem:[%s7 + $0x5b8] sm:$0xff]
    %v2844 = vld [vmem:[%s7 + $0x5c0] sm:$0xff]
    %v2845 = vld [vmem:[%s7 + $0x5c8] sm:$0xf]
    %v2846 = vld [vmem:[%s7 + $0x5cc] sm:$0xff]
    %v2847 = vld [vmem:[%s7 + $0x5d4] sm:$0xff]
    %v2848 = vld [vmem:[%s7 + $0x5dc] sm:$0xff]
    %v2849 = vld [vmem:[%s7 + $0x5e4] sm:$0xf]
    %v2850 = vld [vmem:[%s7 + $0x5e8] sm:$0xff]
    %v2851 = vld [vmem:[%s7 + $0x5f0] sm:$0xff]
    %v2852 = vld [vmem:[%s7 + $0x5f8] sm:$0xff]
    %v2853 = vld [vmem:[%s7 + $0x600] sm:$0xf]
    %v2854 = vld [vmem:[%s7 + $0x604] sm:$0xff]
    %v2855 = vld [vmem:[%s7 + $0x60c] sm:$0xff]
    %v2856 = vld [vmem:[%s7 + $0x614] sm:$0xff]
    %v2857 = vld [vmem:[%s7 + $0x61c] sm:$0xf]
    %v2858 = vld [vmem:[%s7 + $0x620] sm:$0xff]
    %v2859 = vld [vmem:[%s7 + $0x628] sm:$0xff]
    %v2860 = vld [vmem:[%s7 + $0x630] sm:$0xff]
    %v2861 = vld [vmem:[%s7 + $0x638] sm:$0xf]
    %v2862 = vld [vmem:[%s7 + $0x63c] sm:$0xff]
    %v2863 = vld [vmem:[%s7 + $0x644] sm:$0xff]
    %v2864 = vld [vmem:[%s7 + $0x64c] sm:$0xff]
    %v2865 = vld [vmem:[%s7 + $0x654] sm:$0xf]
    %v2866 = vld [vmem:[%s7 + $0x658] sm:$0xff]
    %v2867 = vld [vmem:[%s7 + $0x660] sm:$0xff]
    %v2868 = vld [vmem:[%s7 + $0x668] sm:$0xff]
    %v2869 = vld [vmem:[%s7 + $0x670] sm:$0xf]
    %v2870 = vld [vmem:[%s7 + $0x674] sm:$0xff]
    %v2871 = vld [vmem:[%s7 + $0x67c] sm:$0xff]
    %v2872 = vld [vmem:[%s7 + $0x684] sm:$0xff]
    %v2873 = vld [vmem:[%s7 + $0x68c] sm:$0xf]
    %v2874 = vld [vmem:[%s7 + $0x690] sm:$0xff]
    %v2875 = vld [vmem:[%s7 + $0x698] sm:$0xff]
    %v2876 = vld [vmem:[%s7 + $0x6a0] sm:$0xff]
    %v2877 = vld [vmem:[%s7 + $0x6a8] sm:$0xf]
    %v2878 = vld [vmem:[%s7 + $0x6ac] sm:$0xff]
    %v2879 = vld [vmem:[%s7 + $0x6b4] sm:$0xff]
    %v2880 = vld [vmem:[%s7 + $0x6bc] sm:$0xff]
    %v2881 = vld [vmem:[%s7 + $0x6c4] sm:$0xf]
    %v2882 = vld [vmem:[%s7 + $0x6c8] sm:$0xff]
    %v2883 = vld [vmem:[%s7 + $0x6d0] sm:$0xff]
    %v2884 = vld [vmem:[%s7 + $0x6d8] sm:$0xff]
    %v2885 = vld [vmem:[%s7 + $0x6e0] sm:$0xf]
    %v2886 = vld [vmem:[%s7 + $0x6e4] sm:$0xff]
    %v2887 = vld [vmem:[%s7 + $0x6ec] sm:$0xff]
    %v2888 = vld [vmem:[%s7 + $0x6f4] sm:$0xff]
    %v2889 = vld [vmem:[%s7 + $0x6fc] sm:$0xf]
    %v2890 = vld [vmem:[%s7 + $0x700] sm:$0xff]
    %v2891 = vld [vmem:[%s7 + $0x708] sm:$0xff]
    %v2892 = vld [vmem:[%s7 + $0x710] sm:$0xff]
    %v2893 = vld [vmem:[%s7 + $0x718] sm:$0xf]
    %v2894 = vld [vmem:[%s7 + $0x71c] sm:$0xff]
    %v2895 = vld [vmem:[%s7 + $0x724] sm:$0xff]
    %v2896 = vld [vmem:[%s7 + $0x72c] sm:$0xff]
    %v2897 = vld [vmem:[%s7 + $0x734] sm:$0xf]
    %v2898 = vld [vmem:[%s7 + $0x738] sm:$0xff]
    %v2899 = vld [vmem:[%s7 + $0x740] sm:$0xff]
    %v2900 = vld [vmem:[%s7 + $0x748] sm:$0xff]
    %v2901 = vld [vmem:[%s7 + $0x750] sm:$0xf]
    %v2902 = vld [vmem:[%s7 + $0x754] sm:$0xff]
    %v2903 = vld [vmem:[%s7 + $0x75c] sm:$0xff]
    %v2904 = vld [vmem:[%s7 + $0x764] sm:$0xff]
    %v2905 = vld [vmem:[%s7 + $0x76c] sm:$0xf]
    %v2906 = vld [vmem:[%s7 + $0x770] sm:$0xff]
    %v2907 = vld [vmem:[%s7 + $0x778] sm:$0xff]
    %v2908 = vld [vmem:[%s7 + $0x780] sm:$0xff]
    %v2909 = vld [vmem:[%s7 + $0x788] sm:$0xf]
    %v2910 = vld [vmem:[%s7 + $0x78c] sm:$0xff]
    %v2911 = vld [vmem:[%s7 + $0x794] sm:$0xff]
    %v2912 = vld [vmem:[%s7 + $0x79c] sm:$0xff]
    %v2913 = vld [vmem:[%s7 + $0x7a4] sm:$0xf]
    %v2914 = vld [vmem:[%s7 + $0x7a8] sm:$0xff]
    %v2915 = vld [vmem:[%s7 + $0x7b0] sm:$0xff]
    %v2916 = vld [vmem:[%s7 + $0x7b8] sm:$0xff]
    %v2917 = vld [vmem:[%s7 + $0x7c0] sm:$0xf]
    %v2918 = vld [vmem:[%s7 + $0x7c4] sm:$0xff]
    %v2919 = vld [vmem:[%s7 + $0x7cc] sm:$0xff]
    %v2920 = vld [vmem:[%s7 + $0x7d4] sm:$0xff]
    %v2921 = vld [vmem:[%s7 + $0x7dc] sm:$0xf]
    %v2922 = vld [vmem:[%s7 + $0x7e0] sm:$0xff]
    %v2923 = vld [vmem:[%s7 + $0x7e8] sm:$0xff]
    %v2924 = vld [vmem:[%s7 + $0x7f0] sm:$0xff]
    %v2925 = vld [vmem:[%s7 + $0x7f8] sm:$0xf]
    %v2926 = vld [vmem:[%s7 + $0x7fc] sm:$0xff]
    %v2927 = vld [vmem:[%s7 + $0x804] sm:$0xff]
    %v2928 = vld [vmem:[%s7 + $0x80c] sm:$0xff]
    %v2929 = vld [vmem:[%s7 + $0x814] sm:$0xf]
    %v2930 = vld [vmem:[%s7 + $0x818] sm:$0xff]
    %v2931 = vld [vmem:[%s7 + $0x820] sm:$0xff]
    %v2932 = vld [vmem:[%s7 + $0x828] sm:$0xff]
    %v2933 = vld [vmem:[%s7 + $0x830] sm:$0xf]
    %v2934 = vld [vmem:[%s7 + $0x834] sm:$0xff]
    %v2935 = vld [vmem:[%s7 + $0x83c] sm:$0xff]
    %v2936 = vld [vmem:[%s7 + $0x844] sm:$0xff]
    %v2937 = vld [vmem:[%s7 + $0x84c] sm:$0xf]
    %v2938 = vld [vmem:[%s7 + $0x850] sm:$0xff]
    %v2939 = vld [vmem:[%s7 + $0x858] sm:$0xff]
    %v2940 = vld [vmem:[%s7 + $0x860] sm:$0xff]
    %v2941 = vld [vmem:[%s7 + $0x868] sm:$0xf]
    %v2942 = vld [vmem:[%s7 + $0x86c] sm:$0xff]
    %v2943 = vld [vmem:[%s7 + $0x874] sm:$0xff]
    %v2944 = vld [vmem:[%s7 + $0x87c] sm:$0xff]
    %v2945 = vld [vmem:[%s7 + $0x884] sm:$0xf]
    %v2946 = vld [vmem:[%s7 + $0x888] sm:$0xff]
    %v2947 = vld [vmem:[%s7 + $0x890] sm:$0xff]
    %v2948 = vld [vmem:[%s7 + $0x898] sm:$0xff]
    %v2949 = vld [vmem:[%s7 + $0x8a0] sm:$0xf]
    %v2950 = vld [vmem:[%s7 + $0x8a4] sm:$0xff]
    %v2951 = vld [vmem:[%s7 + $0x8ac] sm:$0xff]
    %v2952 = vld [vmem:[%s7 + $0x8b4] sm:$0xff]
    %v2953 = vld [vmem:[%s7 + $0x8bc] sm:$0xf]
    %v2954 = vld [vmem:[%s7 + $0x8c0] sm:$0xff]
    %v2955 = vld [vmem:[%s7 + $0x8c8] sm:$0xff]
    %v2956 = vld [vmem:[%s7 + $0x8d0] sm:$0xff]
    %v2957 = vld [vmem:[%s7 + $0x8d8] sm:$0xf]
    %v2958 = vld [vmem:[%s7 + $0x8dc] sm:$0xff]
    %v2959 = vld [vmem:[%s7 + $0x8e4] sm:$0xff]
    %v2960 = vld [vmem:[%s7 + $0x8ec] sm:$0xff]
    %v2961 = vld [vmem:[%s7 + $0x8f4] sm:$0xf]
    %v2962 = vld [vmem:[%s7 + $0x8f8] sm:$0xff]
    %v2963 = vld [vmem:[%s7 + $0x900] sm:$0xff]
    %v2964 = vld [vmem:[%s7 + $0x908] sm:$0xff]
    %v2965 = vld [vmem:[%s7 + $0x910] sm:$0xf]
    %v2966 = vld [vmem:[%s7 + $0x914] sm:$0xff]
    %v2967 = vld [vmem:[%s7 + $0x91c] sm:$0xff]
    %v2968 = vld [vmem:[%s7 + $0x924] sm:$0xff]
    %v2969 = vld [vmem:[%s7 + $0x92c] sm:$0xf]
    %v2970 = vld [vmem:[%s7 + $0x930] sm:$0xff]
    %v2971 = vld [vmem:[%s7 + $0x938] sm:$0xff]
    %v2972 = vld [vmem:[%s7 + $0x940] sm:$0xff]
    %v2973 = vld [vmem:[%s7 + $0x948] sm:$0xf]
    %v2974 = vld [vmem:[%s7 + $0x94c] sm:$0xff]
    %v2975 = vld [vmem:[%s7 + $0x954] sm:$0xff]
    %v2976 = vld [vmem:[%s7 + $0x95c] sm:$0xff]
    %v2977 = vld [vmem:[%s7 + $0x964] sm:$0xf]
    %v2978 = vld [vmem:[%s7 + $0x968] sm:$0xff]
    %v2979 = vld [vmem:[%s7 + $0x970] sm:$0xff]
    %v2980 = vld [vmem:[%s7 + $0x978] sm:$0xff]
    %v2981 = vld [vmem:[%s7 + $0x980] sm:$0xf]
    %v2982 = vld [vmem:[%s7 + $0x984] sm:$0xff]
    %v2983 = vld [vmem:[%s7 + $0x98c] sm:$0xff]
    %v2984 = vld [vmem:[%s7 + $0x994] sm:$0xff]
    %v2985 = vld [vmem:[%s7 + $0x99c] sm:$0xf]
    %v2986 = vld [vmem:[%s7 + $0x9a0] sm:$0xff]
    %v2987 = vld [vmem:[%s7 + $0x9a8] sm:$0xff]
    %v2988 = vld [vmem:[%s7 + $0x9b0] sm:$0xff]
    %v2989 = vld [vmem:[%s7 + $0x9b8] sm:$0xf]
    %v2990 = vld [vmem:[%s7 + $0x9bc] sm:$0xff]
    %v2991 = vld [vmem:[%s7 + $0x9c4] sm:$0xff]
    %v2992 = vld [vmem:[%s7 + $0x9cc] sm:$0xff]
    %v2993 = vld [vmem:[%s7 + $0x9d4] sm:$0xf]
    %v2994 = vld [vmem:[%s7 + $0x9d8] sm:$0xff]
    %v2995 = vld [vmem:[%s7 + $0x9e0] sm:$0xff]
    %v2996 = vld [vmem:[%s7 + $0x9e8] sm:$0xff]
    %v2997 = vld [vmem:[%s7 + $0x9f0] sm:$0xf]
    %v2998 = vld [vmem:[%s7 + $0x9f4] sm:$0xff]
    %v2999 = vld [vmem:[%s7 + $0x9fc] sm:$0xff]
    %v3000 = vld [vmem:[%s7 + $0xa04] sm:$0xff]
    %v3001 = vld [vmem:[%s7 + $0xa0c] sm:$0xf]
    %v3002 = vld [vmem:[%s7 + $0xa10] sm:$0xff]
    %v3003 = vld [vmem:[%s7 + $0xa18] sm:$0xff]
    %v3004 = vld [vmem:[%s7 + $0xa20] sm:$0xff]
    %v3005 = vld [vmem:[%s7 + $0xa28] sm:$0xf]
    %v3006 = vld [vmem:[%s7 + $0xa2c] sm:$0xff]
    %v3007 = vld [vmem:[%s7 + $0xa34] sm:$0xff]
    %v3008 = vld [vmem:[%s7 + $0xa3c] sm:$0xff]
    %v3009 = vld [vmem:[%s7 + $0xa44] sm:$0xf]
    %v3010 = vld [vmem:[%s7 + $0xa48] sm:$0xff]
    %v3011 = vld [vmem:[%s7 + $0xa50] sm:$0xff]
    %v3012 = vld [vmem:[%s7 + $0xa58] sm:$0xff]
    %v3013 = vld [vmem:[%s7 + $0xa60] sm:$0xf]
    %v3014 = vld [vmem:[%s7 + $0xa64] sm:$0xff]
    %v3015 = vld [vmem:[%s7 + $0xa6c] sm:$0xff]
    %v3016 = vld [vmem:[%s7 + $0xa74] sm:$0xff]
    %v3017 = vld [vmem:[%s7 + $0xa7c] sm:$0xf]
    %v3018 = vld [vmem:[%s7 + $0xa80] sm:$0xff]
    %v3019 = vld [vmem:[%s7 + $0xa88] sm:$0xff]
    %v3020 = vld [vmem:[%s7 + $0xa90] sm:$0xff]
    %v3021 = vld [vmem:[%s7 + $0xa98] sm:$0xf]
    %v3022 = vld [vmem:[%s7 + $0xa9c] sm:$0xff]
    %v3023 = vld [vmem:[%s7 + $0xaa4] sm:$0xff]
    %v3024 = vld [vmem:[%s7 + $0xaac] sm:$0xff]
    %v3025 = vld [vmem:[%s7 + $0xab4] sm:$0xf]
    %v3026 = vld [vmem:[%s7 + $0xab8] sm:$0xff]
    %v3027 = vld [vmem:[%s7 + $0xac0] sm:$0xff]
    %v3028 = vld [vmem:[%s7 + $0xac8] sm:$0xff]
    %v3029 = vld [vmem:[%s7 + $0xad0] sm:$0xf]
    %v3030 = vld [vmem:[%s7 + $0xad4] sm:$0xff]
    %v3031 = vld [vmem:[%s7 + $0xadc] sm:$0xff]
    %v3032 = vld [vmem:[%s7 + $0xae4] sm:$0xff]
    %v3033 = vld [vmem:[%s7 + $0xaec] sm:$0xf]
    %v3034 = vld [vmem:[%s7 + $0xaf0] sm:$0xff]
    %v3035 = vld [vmem:[%s7 + $0xaf8] sm:$0xff]
    %v3036 = vld [vmem:[%s7 + $0xb00] sm:$0xff]
    %v3037 = vld [vmem:[%s7 + $0xb08] sm:$0xf]
    %v3038 = vld [vmem:[%s7 + $0xb0c] sm:$0xff]
    %v3039 = vld [vmem:[%s7 + $0xb14] sm:$0xff]
    %v3040 = vld [vmem:[%s7 + $0xb1c] sm:$0xff]
    %v3041 = vld [vmem:[%s7 + $0xb24] sm:$0xf]
    %v3042 = vld [vmem:[%s7 + $0xb28] sm:$0xff]
    %v3043 = vld [vmem:[%s7 + $0xb30] sm:$0xff]
    %v3044 = vld [vmem:[%s7 + $0xb38] sm:$0xff]
    %v3045 = vld [vmem:[%s7 + $0xb40] sm:$0xf]
    %v3046 = vld [vmem:[%s7 + $0xb44] sm:$0xff]
    %v3047 = vld [vmem:[%s7 + $0xb4c] sm:$0xff]
    %v3048 = vld [vmem:[%s7 + $0xb54] sm:$0xff]
    %v3049 = vld [vmem:[%s7 + $0xb5c] sm:$0xf]
    %v3050 = vld [vmem:[%s7 + $0xb60] sm:$0xff]
    %v3051 = vld [vmem:[%s7 + $0xb68] sm:$0xff]
    %v3052 = vld [vmem:[%s7 + $0xb70] sm:$0xff]
    %v3053 = vld [vmem:[%s7 + $0xb78] sm:$0xf]
    %v3054 = vld [vmem:[%s7 + $0xb7c] sm:$0xff]
    %v3055 = vld [vmem:[%s7 + $0xb84] sm:$0xff]
    %v3056 = vld [vmem:[%s7 + $0xb8c] sm:$0xff]
    %v3057 = vld [vmem:[%s7 + $0xb94] sm:$0xf]
    %v3058 = vld [vmem:[%s7 + $0xb98] sm:$0xff]
    %v3059 = vld [vmem:[%s7 + $0xba0] sm:$0xff]
    %v3060 = vld [vmem:[%s7 + $0xba8] sm:$0xff]
    %v3061 = vld [vmem:[%s7 + $0xbb0] sm:$0xf]
    %v3062 = vld [vmem:[%s7 + $0xbb4] sm:$0xff]
    %v3063 = vld [vmem:[%s7 + $0xbbc] sm:$0xff]
    %v3064 = vld [vmem:[%s7 + $0xbc4] sm:$0xff]
    %v3065 = vld [vmem:[%s7 + $0xbcc] sm:$0xf]
    %v3066 = vld [vmem:[%s7 + $0xbd0] sm:$0xff]
    %v3067 = vld [vmem:[%s7 + $0xbd8] sm:$0xff]
    %v3068 = vld [vmem:[%s7 + $0xbe0] sm:$0xff]
    %v3069 = vld [vmem:[%s7 + $0xbe8] sm:$0xf]
    %v3070 = vld [vmem:[%s7 + $0xbec] sm:$0xff]
    %v3071 = vld [vmem:[%s7 + $0xbf4] sm:$0xff]
    %v3072 = vld [vmem:[%s7 + $0xbfc] sm:$0xff]
    %v3073 = vld [vmem:[%s7 + $0xc04] sm:$0xf]
    %v3074 = vld [vmem:[%s7 + $0xc08] sm:$0xff]
    %v3075 = vld [vmem:[%s7 + $0xc10] sm:$0xff]
    %v3076 = vld [vmem:[%s7 + $0xc18] sm:$0xff]
    %v3077 = vld [vmem:[%s7 + $0xc20] sm:$0xf]
    %v3078 = vld [vmem:[%s7 + $0xc24] sm:$0xff]
    %v3079 = vld [vmem:[%s7 + $0xc2c] sm:$0xff]
    %v3080 = vld [vmem:[%s7 + $0xc34] sm:$0xff]
    %v3081 = vld [vmem:[%s7 + $0xc3c] sm:$0xf]
    %v3082 = vld [vmem:[%s7 + $0xc40] sm:$0xff]
    %v3083 = vld [vmem:[%s7 + $0xc48] sm:$0xff]
    %v3084 = vld [vmem:[%s7 + $0xc50] sm:$0xff]
    %v3085 = vld [vmem:[%s7 + $0xc58] sm:$0xf]
    %v3086 = vld [vmem:[%s7 + $0xc5c] sm:$0xff]
    %v3087 = vld [vmem:[%s7 + $0xc64] sm:$0xff]
    %v3088 = vld [vmem:[%s7 + $0xc6c] sm:$0xff]
    %v3089 = vld [vmem:[%s7 + $0xc74] sm:$0xf]
    %v3090 = vld [vmem:[%s7 + $0xc78] sm:$0xff]
    %v3091 = vld [vmem:[%s7 + $0xc80] sm:$0xff]
    %v3092 = vld [vmem:[%s7 + $0xc88] sm:$0xff]
    %v3093 = vld [vmem:[%s7 + $0xc90] sm:$0xf]
    %v3094 = vld [vmem:[%s7 + $0xc94] sm:$0xff]
    %v3095 = vld [vmem:[%s7 + $0xc9c] sm:$0xff]
    %v3096 = vld [vmem:[%s7 + $0xca4] sm:$0xff]
    %v3097 = vld [vmem:[%s7 + $0xcac] sm:$0xf]
    %v3098 = vld [vmem:[%s7 + $0xcb0] sm:$0xff]
    %v3099 = vld [vmem:[%s7 + $0xcb8] sm:$0xff]
    %v3100 = vld [vmem:[%s7 + $0xcc0] sm:$0xff]
    %v3101 = vld [vmem:[%s7 + $0xcc8] sm:$0xf]
    %v3102 = vld [vmem:[%s7 + $0xccc] sm:$0xff]
    %v3103 = vld [vmem:[%s7 + $0xcd4] sm:$0xff]
    %v3104 = vld [vmem:[%s7 + $0xcdc] sm:$0xff]
    %v3105 = vld [vmem:[%s7 + $0xce4] sm:$0xf]
    %v3106 = vld [vmem:[%s7 + $0xce8] sm:$0xff]
    %v3107 = vld [vmem:[%s7 + $0xcf0] sm:$0xff]
    %v3108 = vld [vmem:[%s7 + $0xcf8] sm:$0xff]
    %v3109 = vld [vmem:[%s7 + $0xd00] sm:$0xf]
    %v3110 = vld [vmem:[%s7 + $0xd04] sm:$0xff]
    %v3111 = vld [vmem:[%s7 + $0xd0c] sm:$0xff]
    %v3112 = vld [vmem:[%s7 + $0xd14] sm:$0xff]
    %v3113 = vld [vmem:[%s7 + $0xd1c] sm:$0xf]
    %v3114 = vld [vmem:[%s7 + $0xd20] sm:$0xff]
    %v3115 = vld [vmem:[%s7 + $0xd28] sm:$0xff]
    %v3116 = vld [vmem:[%s7 + $0xd30] sm:$0xff]
    %v3117 = vld [vmem:[%s7 + $0xd38] sm:$0xf]
    %v3118 = vld [vmem:[%s7 + $0xd3c] sm:$0xff]
    %v3119 = vld [vmem:[%s7 + $0xd44] sm:$0xff]
    %v3120 = vld [vmem:[%s7 + $0xd4c] sm:$0xff]
    %v3121 = vld [vmem:[%s7 + $0xd54] sm:$0xf]
    %v3122 = vld [vmem:[%s7 + $0xd58] sm:$0xff]
    %v3123 = vld [vmem:[%s7 + $0xd60] sm:$0xff]
    %v3124 = vld [vmem:[%s7 + $0xd68] sm:$0xff]
    %v3125 = vld [vmem:[%s7 + $0xd70] sm:$0xf]
    %v3126 = vld [vmem:[%s7 + $0xd74] sm:$0xff]
    %v3127 = vld [vmem:[%s7 + $0xd7c] sm:$0xff]
    %v3128 = vld [vmem:[%s7 + $0xd84] sm:$0xff]
    %v3129 = vld [vmem:[%s7 + $0xd8c] sm:$0xf]
    %v3130 = vld [vmem:[%s7 + $0xd90] sm:$0xff]
    %v3131 = vld [vmem:[%s7 + $0xd98] sm:$0xff]
    %v3132 = vld [vmem:[%s7 + $0xda0] sm:$0xff]
    %v3133 = vld [vmem:[%s7 + $0xda8] sm:$0xf]
    %v3134 = vld [vmem:[%s7 + $0xdac] sm:$0xff]
    %v3135 = vld [vmem:[%s7 + $0xdb4] sm:$0xff]
    %v3136 = vld [vmem:[%s7 + $0xdbc] sm:$0xff]
    %v3137 = vld [vmem:[%s7 + $0xdc4] sm:$0xf]
    %v3138 = vld [vmem:[%s7 + $0xdc8] sm:$0xff]
    %v3139 = vld [vmem:[%s7 + $0xdd0] sm:$0xff]
    %v3140 = vld [vmem:[%s7 + $0xdd8] sm:$0xff]
    %v3141 = vld [vmem:[%s7 + $0xde0] sm:$0xf]
    %v3142 = vld [vmem:[%s7 + $0xde4] sm:$0xff]
    %v3143 = vld [vmem:[%s7 + $0xdec] sm:$0xff]
    %v3144 = vld [vmem:[%s7 + $0xdf4] sm:$0xff]
    %v3145 = vld [vmem:[%s7 + $0xdfc] sm:$0xf]
    %v3146 = vld [vmem:[%s8] sm:$0x7f]
    %v3148 = vlaneseq
    %v3149 = vshrl.u32 %v3148, 7
    %v3150 = vsub.s32 0, %v3149
    %v3151 = vrot.slane %v3146, %v3150
    %v3152 = vlaneseq
    %v3153 = vshrl.u32 %v3152, 7
    %v3154 = vsub.s32 1, %v3153
    %v3155 = vrot.slane %v3146, %v3154
    %v3156 = vlaneseq
    %v3157 = vshrl.u32 %v3156, 7
    %v3158 = vsub.s32 2, %v3157
    %v3159 = vrot.slane %v3146, %v3158
    %v3160 = vlaneseq
    %v3161 = vshrl.u32 %v3160, 7
    %v3162 = vsub.s32 3, %v3161
    %v3163 = vrot.slane %v3146, %v3162
    %v3164 = vlaneseq
    %v3165 = vshrl.u32 %v3164, 7
    %v3166 = vsub.s32 4, %v3165
    %v3167 = vrot.slane %v3146, %v3166
    %v3168 = vlaneseq
    %v3169 = vshrl.u32 %v3168, 7
    %v3170 = vsub.s32 5, %v3169
    %v3171 = vrot.slane %v3146, %v3170
    %v3172 = vlaneseq
    %v3173 = vshrl.u32 %v3172, 7
    %v3174 = vsub.s32 6, %v3173
    %v3175 = vrot.slane %v3146, %v3174
    %v3695 = vunpack.c.l.b16 %v2634
    %v3696 = vunpack.c.h.b16 %v2634
    %v3697 = vunpack.c.l.b16 %v2635
    %v3698 = vunpack.c.h.b16 %v2635
    %v3699 = vunpack.c.l.b16 %v2636
    %v3700 = vunpack.c.h.b16 %v2636
    %v3701 = vunpack.c.l.b16 %v2637
    %v3702 = vunpack.c.l.b16 %v2638
    %v3703 = vunpack.c.h.b16 %v2638
    %v3704 = vunpack.c.l.b16 %v2639
    %v3705 = vunpack.c.h.b16 %v2639
    %v3706 = vunpack.c.l.b16 %v2640
    %v3707 = vunpack.c.h.b16 %v2640
    %v3708 = vunpack.c.l.b16 %v2641
    %v3709 = vunpack.c.l.b16 %v2642
    %v3710 = vunpack.c.h.b16 %v2642
    %v3711 = vunpack.c.l.b16 %v2643
    %v3712 = vunpack.c.h.b16 %v2643
    %v3713 = vunpack.c.l.b16 %v2644
    %v3714 = vunpack.c.h.b16 %v2644
    %v3715 = vunpack.c.l.b16 %v2645
    %v3716 = vunpack.c.l.b16 %v2646
    %v3717 = vunpack.c.h.b16 %v2646
    %v3718 = vunpack.c.l.b16 %v2647
    %v3719 = vunpack.c.h.b16 %v2647
    %v3720 = vunpack.c.l.b16 %v2648
    %v3721 = vunpack.c.h.b16 %v2648
    %v3722 = vunpack.c.l.b16 %v2649
    %v3723 = vunpack.c.l.b16 %v2650
    %v3724 = vunpack.c.h.b16 %v2650
    %v3725 = vunpack.c.l.b16 %v2651
    %v3726 = vunpack.c.h.b16 %v2651
    %v3727 = vunpack.c.l.b16 %v2652
    %v3728 = vunpack.c.h.b16 %v2652
    %v3729 = vunpack.c.l.b16 %v2653
    %v3730 = vunpack.c.l.b16 %v2654
    %v3731 = vunpack.c.h.b16 %v2654
    %v3732 = vunpack.c.l.b16 %v2655
    %v3733 = vunpack.c.h.b16 %v2655
    %v3734 = vunpack.c.l.b16 %v2656
    %v3735 = vunpack.c.h.b16 %v2656
    %v3736 = vunpack.c.l.b16 %v2657
    %v3737 = vunpack.c.l.b16 %v2658
    %v3738 = vunpack.c.h.b16 %v2658
    %v3739 = vunpack.c.l.b16 %v2659
    %v3740 = vunpack.c.h.b16 %v2659
    %v3741 = vunpack.c.l.b16 %v2660
    %v3742 = vunpack.c.h.b16 %v2660
    %v3743 = vunpack.c.l.b16 %v2661
    %v3744 = vunpack.c.l.b16 %v2662
    %v3745 = vunpack.c.h.b16 %v2662
    %v3746 = vunpack.c.l.b16 %v2663
    %v3747 = vunpack.c.h.b16 %v2663
    %v3748 = vunpack.c.l.b16 %v2664
    %v3749 = vunpack.c.h.b16 %v2664
    %v3750 = vunpack.c.l.b16 %v2665
    %v3751 = vunpack.c.l.b16 %v2666
    %v3752 = vunpack.c.h.b16 %v2666
    %v3753 = vunpack.c.l.b16 %v2667
    %v3754 = vunpack.c.h.b16 %v2667
    %v3755 = vunpack.c.l.b16 %v2668
    %v3756 = vunpack.c.h.b16 %v2668
    %v3757 = vunpack.c.l.b16 %v2669
    %v3758 = vunpack.c.l.b16 %v2670
    %v3759 = vunpack.c.h.b16 %v2670
    %v3760 = vunpack.c.l.b16 %v2671
    %v3761 = vunpack.c.h.b16 %v2671
    %v3762 = vunpack.c.l.b16 %v2672
    %v3763 = vunpack.c.h.b16 %v2672
    %v3764 = vunpack.c.l.b16 %v2673
    %v3765 = vunpack.c.l.b16 %v2674
    %v3766 = vunpack.c.h.b16 %v2674
    %v3767 = vunpack.c.l.b16 %v2675
    %v3768 = vunpack.c.h.b16 %v2675
    %v3769 = vunpack.c.l.b16 %v2676
    %v3770 = vunpack.c.h.b16 %v2676
    %v3771 = vunpack.c.l.b16 %v2677
    %v3772 = vunpack.c.l.b16 %v2678
    %v3773 = vunpack.c.h.b16 %v2678
    %v3774 = vunpack.c.l.b16 %v2679
    %v3775 = vunpack.c.h.b16 %v2679
    %v3776 = vunpack.c.l.b16 %v2680
    %v3777 = vunpack.c.h.b16 %v2680
    %v3778 = vunpack.c.l.b16 %v2681
    %v3779 = vunpack.c.l.b16 %v2682
    %v3780 = vunpack.c.h.b16 %v2682
    %v3781 = vunpack.c.l.b16 %v2683
    %v3782 = vunpack.c.h.b16 %v2683
    %v3783 = vunpack.c.l.b16 %v2684
    %v3784 = vunpack.c.h.b16 %v2684
    %v3785 = vunpack.c.l.b16 %v2685
    %v3786 = vunpack.c.l.b16 %v2686
    %v3787 = vunpack.c.h.b16 %v2686
    %v3788 = vunpack.c.l.b16 %v2687
    %v3789 = vunpack.c.h.b16 %v2687
    %v3790 = vunpack.c.l.b16 %v2688
    %v3791 = vunpack.c.h.b16 %v2688
    %v3792 = vunpack.c.l.b16 %v2689
    %v3793 = vunpack.c.l.b16 %v2690
    %v3794 = vunpack.c.h.b16 %v2690
    %v3795 = vunpack.c.l.b16 %v2691
    %v3796 = vunpack.c.h.b16 %v2691
    %v3797 = vunpack.c.l.b16 %v2692
    %v3798 = vunpack.c.h.b16 %v2692
    %v3799 = vunpack.c.l.b16 %v2693
    %v3800 = vunpack.c.l.b16 %v2694
    %v3801 = vunpack.c.h.b16 %v2694
    %v3802 = vunpack.c.l.b16 %v2695
    %v3803 = vunpack.c.h.b16 %v2695
    %v3804 = vunpack.c.l.b16 %v2696
    %v3805 = vunpack.c.h.b16 %v2696
    %v3806 = vunpack.c.l.b16 %v2697
    %v3807 = vunpack.c.l.b16 %v2698
    %v3808 = vunpack.c.h.b16 %v2698
    %v3809 = vunpack.c.l.b16 %v2699
    %v3810 = vunpack.c.h.b16 %v2699
    %v3811 = vunpack.c.l.b16 %v2700
    %v3812 = vunpack.c.h.b16 %v2700
    %v3813 = vunpack.c.l.b16 %v2701
    %v3814 = vunpack.c.l.b16 %v2702
    %v3815 = vunpack.c.h.b16 %v2702
    %v3816 = vunpack.c.l.b16 %v2703
    %v3817 = vunpack.c.h.b16 %v2703
    %v3818 = vunpack.c.l.b16 %v2704
    %v3819 = vunpack.c.h.b16 %v2704
    %v3820 = vunpack.c.l.b16 %v2705
    %v3821 = vunpack.c.l.b16 %v2706
    %v3822 = vunpack.c.h.b16 %v2706
    %v3823 = vunpack.c.l.b16 %v2707
    %v3824 = vunpack.c.h.b16 %v2707
    %v3825 = vunpack.c.l.b16 %v2708
    %v3826 = vunpack.c.h.b16 %v2708
    %v3827 = vunpack.c.l.b16 %v2709
    %v3828 = vunpack.c.l.b16 %v2710
    %v3829 = vunpack.c.h.b16 %v2710
    %v3830 = vunpack.c.l.b16 %v2711
    %v3831 = vunpack.c.h.b16 %v2711
    %v3832 = vunpack.c.l.b16 %v2712
    %v3833 = vunpack.c.h.b16 %v2712
    %v3834 = vunpack.c.l.b16 %v2713
    %v3835 = vunpack.c.l.b16 %v2714
    %v3836 = vunpack.c.h.b16 %v2714
    %v3837 = vunpack.c.l.b16 %v2715
    %v3838 = vunpack.c.h.b16 %v2715
    %v3839 = vunpack.c.l.b16 %v2716
    %v3840 = vunpack.c.h.b16 %v2716
    %v3841 = vunpack.c.l.b16 %v2717
    %v3842 = vunpack.c.l.b16 %v2718
    %v3843 = vunpack.c.h.b16 %v2718
    %v3844 = vunpack.c.l.b16 %v2719
    %v3845 = vunpack.c.h.b16 %v2719
    %v3846 = vunpack.c.l.b16 %v2720
    %v3847 = vunpack.c.h.b16 %v2720
    %v3848 = vunpack.c.l.b16 %v2721
    %v3849 = vunpack.c.l.b16 %v2722
    %v3850 = vunpack.c.h.b16 %v2722
    %v3851 = vunpack.c.l.b16 %v2723
    %v3852 = vunpack.c.h.b16 %v2723
    %v3853 = vunpack.c.l.b16 %v2724
    %v3854 = vunpack.c.h.b16 %v2724
    %v3855 = vunpack.c.l.b16 %v2725
    %v3856 = vunpack.c.l.b16 %v2726
    %v3857 = vunpack.c.h.b16 %v2726
    %v3858 = vunpack.c.l.b16 %v2727
    %v3859 = vunpack.c.h.b16 %v2727
    %v3860 = vunpack.c.l.b16 %v2728
    %v3861 = vunpack.c.h.b16 %v2728
    %v3862 = vunpack.c.l.b16 %v2729
    %v3863 = vunpack.c.l.b16 %v2730
    %v3864 = vunpack.c.h.b16 %v2730
    %v3865 = vunpack.c.l.b16 %v2731
    %v3866 = vunpack.c.h.b16 %v2731
    %v3867 = vunpack.c.l.b16 %v2732
    %v3868 = vunpack.c.h.b16 %v2732
    %v3869 = vunpack.c.l.b16 %v2733
    %v3870 = vunpack.c.l.b16 %v2734
    %v3871 = vunpack.c.h.b16 %v2734
    %v3872 = vunpack.c.l.b16 %v2735
    %v3873 = vunpack.c.h.b16 %v2735
    %v3874 = vunpack.c.l.b16 %v2736
    %v3875 = vunpack.c.h.b16 %v2736
    %v3876 = vunpack.c.l.b16 %v2737
    %v3877 = vunpack.c.l.b16 %v2738
    %v3878 = vunpack.c.h.b16 %v2738
    %v3879 = vunpack.c.l.b16 %v2739
    %v3880 = vunpack.c.h.b16 %v2739
    %v3881 = vunpack.c.l.b16 %v2740
    %v3882 = vunpack.c.h.b16 %v2740
    %v3883 = vunpack.c.l.b16 %v2741
    %v3884 = vunpack.c.l.b16 %v2742
    %v3885 = vunpack.c.h.b16 %v2742
    %v3886 = vunpack.c.l.b16 %v2743
    %v3887 = vunpack.c.h.b16 %v2743
    %v3888 = vunpack.c.l.b16 %v2744
    %v3889 = vunpack.c.h.b16 %v2744
    %v3890 = vunpack.c.l.b16 %v2745
    %v3891 = vunpack.c.l.b16 %v2746
    %v3892 = vunpack.c.h.b16 %v2746
    %v3893 = vunpack.c.l.b16 %v2747
    %v3894 = vunpack.c.h.b16 %v2747
    %v3895 = vunpack.c.l.b16 %v2748
    %v3896 = vunpack.c.h.b16 %v2748
    %v3897 = vunpack.c.l.b16 %v2749
    %v3898 = vunpack.c.l.b16 %v2750
    %v3899 = vunpack.c.h.b16 %v2750
    %v3900 = vunpack.c.l.b16 %v2751
    %v3901 = vunpack.c.h.b16 %v2751
    %v3902 = vunpack.c.l.b16 %v2752
    %v3903 = vunpack.c.h.b16 %v2752
    %v3904 = vunpack.c.l.b16 %v2753
    %v3905 = vunpack.c.l.b16 %v2754
    %v3906 = vunpack.c.h.b16 %v2754
    %v3907 = vunpack.c.l.b16 %v2755
    %v3908 = vunpack.c.h.b16 %v2755
    %v3909 = vunpack.c.l.b16 %v2756
    %v3910 = vunpack.c.h.b16 %v2756
    %v3911 = vunpack.c.l.b16 %v2757
    %v3912 = vunpack.c.l.b16 %v2758
    %v3913 = vunpack.c.h.b16 %v2758
    %v3914 = vunpack.c.l.b16 %v2759
    %v3915 = vunpack.c.h.b16 %v2759
    %v3916 = vunpack.c.l.b16 %v2760
    %v3917 = vunpack.c.h.b16 %v2760
    %v3918 = vunpack.c.l.b16 %v2761
    %v3919 = vunpack.c.l.b16 %v2762
    %v3920 = vunpack.c.h.b16 %v2762
    %v3921 = vunpack.c.l.b16 %v2763
    %v3922 = vunpack.c.h.b16 %v2763
    %v3923 = vunpack.c.l.b16 %v2764
    %v3924 = vunpack.c.h.b16 %v2764
    %v3925 = vunpack.c.l.b16 %v2765
    %v3926 = vunpack.c.l.b16 %v2766
    %v3927 = vunpack.c.h.b16 %v2766
    %v3928 = vunpack.c.l.b16 %v2767
    %v3929 = vunpack.c.h.b16 %v2767
    %v3930 = vunpack.c.l.b16 %v2768
    %v3931 = vunpack.c.h.b16 %v2768
    %v3932 = vunpack.c.l.b16 %v2769
    %v3933 = vunpack.c.l.b16 %v2770
    %v3934 = vunpack.c.h.b16 %v2770
    %v3935 = vunpack.c.l.b16 %v2771
    %v3936 = vunpack.c.h.b16 %v2771
    %v3937 = vunpack.c.l.b16 %v2772
    %v3938 = vunpack.c.h.b16 %v2772
    %v3939 = vunpack.c.l.b16 %v2773
    %v3940 = vunpack.c.l.b16 %v2774
    %v3941 = vunpack.c.h.b16 %v2774
    %v3942 = vunpack.c.l.b16 %v2775
    %v3943 = vunpack.c.h.b16 %v2775
    %v3944 = vunpack.c.l.b16 %v2776
    %v3945 = vunpack.c.h.b16 %v2776
    %v3946 = vunpack.c.l.b16 %v2777
    %v3947 = vunpack.c.l.b16 %v2778
    %v3948 = vunpack.c.h.b16 %v2778
    %v3949 = vunpack.c.l.b16 %v2779
    %v3950 = vunpack.c.h.b16 %v2779
    %v3951 = vunpack.c.l.b16 %v2780
    %v3952 = vunpack.c.h.b16 %v2780
    %v3953 = vunpack.c.l.b16 %v2781
    %v3954 = vunpack.c.l.b16 %v2782
    %v3955 = vunpack.c.h.b16 %v2782
    %v3956 = vunpack.c.l.b16 %v2783
    %v3957 = vunpack.c.h.b16 %v2783
    %v3958 = vunpack.c.l.b16 %v2784
    %v3959 = vunpack.c.h.b16 %v2784
    %v3960 = vunpack.c.l.b16 %v2785
    %v3961 = vunpack.c.l.b16 %v2786
    %v3962 = vunpack.c.h.b16 %v2786
    %v3963 = vunpack.c.l.b16 %v2787
    %v3964 = vunpack.c.h.b16 %v2787
    %v3965 = vunpack.c.l.b16 %v2788
    %v3966 = vunpack.c.h.b16 %v2788
    %v3967 = vunpack.c.l.b16 %v2789
    %v3968 = vunpack.c.l.b16 %v2790
    %v3969 = vunpack.c.h.b16 %v2790
    %v3970 = vunpack.c.l.b16 %v2791
    %v3971 = vunpack.c.h.b16 %v2791
    %v3972 = vunpack.c.l.b16 %v2792
    %v3973 = vunpack.c.h.b16 %v2792
    %v3974 = vunpack.c.l.b16 %v2793
    %v3975 = vunpack.c.l.b16 %v2794
    %v3976 = vunpack.c.h.b16 %v2794
    %v3977 = vunpack.c.l.b16 %v2795
    %v3978 = vunpack.c.h.b16 %v2795
    %v3979 = vunpack.c.l.b16 %v2796
    %v3980 = vunpack.c.h.b16 %v2796
    %v3981 = vunpack.c.l.b16 %v2797
    %v3982 = vunpack.c.l.b16 %v2798
    %v3983 = vunpack.c.h.b16 %v2798
    %v3984 = vunpack.c.l.b16 %v2799
    %v3985 = vunpack.c.h.b16 %v2799
    %v3986 = vunpack.c.l.b16 %v2800
    %v3987 = vunpack.c.h.b16 %v2800
    %v3988 = vunpack.c.l.b16 %v2801
    %v3989 = vunpack.c.l.b16 %v2802
    %v3990 = vunpack.c.h.b16 %v2802
    %v3991 = vunpack.c.l.b16 %v2803
    %v3992 = vunpack.c.h.b16 %v2803
    %v3993 = vunpack.c.l.b16 %v2804
    %v3994 = vunpack.c.h.b16 %v2804
    %v3995 = vunpack.c.l.b16 %v2805
    %v3996 = vunpack.c.l.b16 %v2806
    %v3997 = vunpack.c.h.b16 %v2806
    %v3998 = vunpack.c.l.b16 %v2807
    %v3999 = vunpack.c.h.b16 %v2807
    %v4000 = vunpack.c.l.b16 %v2808
    %v4001 = vunpack.c.h.b16 %v2808
    %v4002 = vunpack.c.l.b16 %v2809
    %v4003 = vunpack.c.l.b16 %v2810
    %v4004 = vunpack.c.h.b16 %v2810
    %v4005 = vunpack.c.l.b16 %v2811
    %v4006 = vunpack.c.h.b16 %v2811
    %v4007 = vunpack.c.l.b16 %v2812
    %v4008 = vunpack.c.h.b16 %v2812
    %v4009 = vunpack.c.l.b16 %v2813
    %v4010 = vunpack.c.l.b16 %v2814
    %v4011 = vunpack.c.h.b16 %v2814
    %v4012 = vunpack.c.l.b16 %v2815
    %v4013 = vunpack.c.h.b16 %v2815
    %v4014 = vunpack.c.l.b16 %v2816
    %v4015 = vunpack.c.h.b16 %v2816
    %v4016 = vunpack.c.l.b16 %v2817
    %v4017 = vunpack.c.l.b16 %v2818
    %v4018 = vunpack.c.h.b16 %v2818
    %v4019 = vunpack.c.l.b16 %v2819
    %v4020 = vunpack.c.h.b16 %v2819
    %v4021 = vunpack.c.l.b16 %v2820
    %v4022 = vunpack.c.h.b16 %v2820
    %v4023 = vunpack.c.l.b16 %v2821
    %v4024 = vunpack.c.l.b16 %v2822
    %v4025 = vunpack.c.h.b16 %v2822
    %v4026 = vunpack.c.l.b16 %v2823
    %v4027 = vunpack.c.h.b16 %v2823
    %v4028 = vunpack.c.l.b16 %v2824
    %v4029 = vunpack.c.h.b16 %v2824
    %v4030 = vunpack.c.l.b16 %v2825
    %v4031 = vunpack.c.l.b16 %v2826
    %v4032 = vunpack.c.h.b16 %v2826
    %v4033 = vunpack.c.l.b16 %v2827
    %v4034 = vunpack.c.h.b16 %v2827
    %v4035 = vunpack.c.l.b16 %v2828
    %v4036 = vunpack.c.h.b16 %v2828
    %v4037 = vunpack.c.l.b16 %v2829
    %v4038 = vunpack.c.l.b16 %v2830
    %v4039 = vunpack.c.h.b16 %v2830
    %v4040 = vunpack.c.l.b16 %v2831
    %v4041 = vunpack.c.h.b16 %v2831
    %v4042 = vunpack.c.l.b16 %v2832
    %v4043 = vunpack.c.h.b16 %v2832
    %v4044 = vunpack.c.l.b16 %v2833
    %v4045 = vunpack.c.l.b16 %v2834
    %v4046 = vunpack.c.h.b16 %v2834
    %v4047 = vunpack.c.l.b16 %v2835
    %v4048 = vunpack.c.h.b16 %v2835
    %v4049 = vunpack.c.l.b16 %v2836
    %v4050 = vunpack.c.h.b16 %v2836
    %v4051 = vunpack.c.l.b16 %v2837
    %v4052 = vunpack.c.l.b16 %v2838
    %v4053 = vunpack.c.h.b16 %v2838
    %v4054 = vunpack.c.l.b16 %v2839
    %v4055 = vunpack.c.h.b16 %v2839
    %v4056 = vunpack.c.l.b16 %v2840
    %v4057 = vunpack.c.h.b16 %v2840
    %v4058 = vunpack.c.l.b16 %v2841
    %v4059 = vunpack.c.l.b16 %v2842
    %v4060 = vunpack.c.h.b16 %v2842
    %v4061 = vunpack.c.l.b16 %v2843
    %v4062 = vunpack.c.h.b16 %v2843
    %v4063 = vunpack.c.l.b16 %v2844
    %v4064 = vunpack.c.h.b16 %v2844
    %v4065 = vunpack.c.l.b16 %v2845
    %v4066 = vunpack.c.l.b16 %v2846
    %v4067 = vunpack.c.h.b16 %v2846
    %v4068 = vunpack.c.l.b16 %v2847
    %v4069 = vunpack.c.h.b16 %v2847
    %v4070 = vunpack.c.l.b16 %v2848
    %v4071 = vunpack.c.h.b16 %v2848
    %v4072 = vunpack.c.l.b16 %v2849
    %v4073 = vunpack.c.l.b16 %v2850
    %v4074 = vunpack.c.h.b16 %v2850
    %v4075 = vunpack.c.l.b16 %v2851
    %v4076 = vunpack.c.h.b16 %v2851
    %v4077 = vunpack.c.l.b16 %v2852
    %v4078 = vunpack.c.h.b16 %v2852
    %v4079 = vunpack.c.l.b16 %v2853
    %v4080 = vunpack.c.l.b16 %v2854
    %v4081 = vunpack.c.h.b16 %v2854
    %v4082 = vunpack.c.l.b16 %v2855
    %v4083 = vunpack.c.h.b16 %v2855
    %v4084 = vunpack.c.l.b16 %v2856
    %v4085 = vunpack.c.h.b16 %v2856
    %v4086 = vunpack.c.l.b16 %v2857
    %v4087 = vunpack.c.l.b16 %v2858
    %v4088 = vunpack.c.h.b16 %v2858
    %v4089 = vunpack.c.l.b16 %v2859
    %v4090 = vunpack.c.h.b16 %v2859
    %v4091 = vunpack.c.l.b16 %v2860
    %v4092 = vunpack.c.h.b16 %v2860
    %v4093 = vunpack.c.l.b16 %v2861
    %v4094 = vunpack.c.l.b16 %v2862
    %v4095 = vunpack.c.h.b16 %v2862
    %v4096 = vunpack.c.l.b16 %v2863
    %v4097 = vunpack.c.h.b16 %v2863
    %v4098 = vunpack.c.l.b16 %v2864
    %v4099 = vunpack.c.h.b16 %v2864
    %v4100 = vunpack.c.l.b16 %v2865
    %v4101 = vunpack.c.l.b16 %v2866
    %v4102 = vunpack.c.h.b16 %v2866
    %v4103 = vunpack.c.l.b16 %v2867
    %v4104 = vunpack.c.h.b16 %v2867
    %v4105 = vunpack.c.l.b16 %v2868
    %v4106 = vunpack.c.h.b16 %v2868
    %v4107 = vunpack.c.l.b16 %v2869
    %v4108 = vunpack.c.l.b16 %v2870
    %v4109 = vunpack.c.h.b16 %v2870
    %v4110 = vunpack.c.l.b16 %v2871
    %v4111 = vunpack.c.h.b16 %v2871
    %v4112 = vunpack.c.l.b16 %v2872
    %v4113 = vunpack.c.h.b16 %v2872
    %v4114 = vunpack.c.l.b16 %v2873
    %v4115 = vunpack.c.l.b16 %v2874
    %v4116 = vunpack.c.h.b16 %v2874
    %v4117 = vunpack.c.l.b16 %v2875
    %v4118 = vunpack.c.h.b16 %v2875
    %v4119 = vunpack.c.l.b16 %v2876
    %v4120 = vunpack.c.h.b16 %v2876
    %v4121 = vunpack.c.l.b16 %v2877
    %v4122 = vunpack.c.l.b16 %v2878
    %v4123 = vunpack.c.h.b16 %v2878
    %v4124 = vunpack.c.l.b16 %v2879
    %v4125 = vunpack.c.h.b16 %v2879
    %v4126 = vunpack.c.l.b16 %v2880
    %v4127 = vunpack.c.h.b16 %v2880
    %v4128 = vunpack.c.l.b16 %v2881
    %v4129 = vunpack.c.l.b16 %v2882
    %v4130 = vunpack.c.h.b16 %v2882
    %v4131 = vunpack.c.l.b16 %v2883
    %v4132 = vunpack.c.h.b16 %v2883
    %v4133 = vunpack.c.l.b16 %v2884
    %v4134 = vunpack.c.h.b16 %v2884
    %v4135 = vunpack.c.l.b16 %v2885
    %v4136 = vunpack.c.l.b16 %v2886
    %v4137 = vunpack.c.h.b16 %v2886
    %v4138 = vunpack.c.l.b16 %v2887
    %v4139 = vunpack.c.h.b16 %v2887
    %v4140 = vunpack.c.l.b16 %v2888
    %v4141 = vunpack.c.h.b16 %v2888
    %v4142 = vunpack.c.l.b16 %v2889
    %v4143 = vunpack.c.l.b16 %v2890
    %v4144 = vunpack.c.h.b16 %v2890
    %v4145 = vunpack.c.l.b16 %v2891
    %v4146 = vunpack.c.h.b16 %v2891
    %v4147 = vunpack.c.l.b16 %v2892
    %v4148 = vunpack.c.h.b16 %v2892
    %v4149 = vunpack.c.l.b16 %v2893
    %v4150 = vunpack.c.l.b16 %v2894
    %v4151 = vunpack.c.h.b16 %v2894
    %v4152 = vunpack.c.l.b16 %v2895
    %v4153 = vunpack.c.h.b16 %v2895
    %v4154 = vunpack.c.l.b16 %v2896
    %v4155 = vunpack.c.h.b16 %v2896
    %v4156 = vunpack.c.l.b16 %v2897
    %v4157 = vunpack.c.l.b16 %v2898
    %v4158 = vunpack.c.h.b16 %v2898
    %v4159 = vunpack.c.l.b16 %v2899
    %v4160 = vunpack.c.h.b16 %v2899
    %v4161 = vunpack.c.l.b16 %v2900
    %v4162 = vunpack.c.h.b16 %v2900
    %v4163 = vunpack.c.l.b16 %v2901
    %v4164 = vunpack.c.l.b16 %v2902
    %v4165 = vunpack.c.h.b16 %v2902
    %v4166 = vunpack.c.l.b16 %v2903
    %v4167 = vunpack.c.h.b16 %v2903
    %v4168 = vunpack.c.l.b16 %v2904
    %v4169 = vunpack.c.h.b16 %v2904
    %v4170 = vunpack.c.l.b16 %v2905
    %v4171 = vunpack.c.l.b16 %v2906
    %v4172 = vunpack.c.h.b16 %v2906
    %v4173 = vunpack.c.l.b16 %v2907
    %v4174 = vunpack.c.h.b16 %v2907
    %v4175 = vunpack.c.l.b16 %v2908
    %v4176 = vunpack.c.h.b16 %v2908
    %v4177 = vunpack.c.l.b16 %v2909
    %v4178 = vunpack.c.l.b16 %v2910
    %v4179 = vunpack.c.h.b16 %v2910
    %v4180 = vunpack.c.l.b16 %v2911
    %v4181 = vunpack.c.h.b16 %v2911
    %v4182 = vunpack.c.l.b16 %v2912
    %v4183 = vunpack.c.h.b16 %v2912
    %v4184 = vunpack.c.l.b16 %v2913
    %v4185 = vunpack.c.l.b16 %v2914
    %v4186 = vunpack.c.h.b16 %v2914
    %v4187 = vunpack.c.l.b16 %v2915
    %v4188 = vunpack.c.h.b16 %v2915
    %v4189 = vunpack.c.l.b16 %v2916
    %v4190 = vunpack.c.h.b16 %v2916
    %v4191 = vunpack.c.l.b16 %v2917
    %v4192 = vunpack.c.l.b16 %v2918
    %v4193 = vunpack.c.h.b16 %v2918
    %v4194 = vunpack.c.l.b16 %v2919
    %v4195 = vunpack.c.h.b16 %v2919
    %v4196 = vunpack.c.l.b16 %v2920
    %v4197 = vunpack.c.h.b16 %v2920
    %v4198 = vunpack.c.l.b16 %v2921
    %v4199 = vunpack.c.l.b16 %v2922
    %v4200 = vunpack.c.h.b16 %v2922
    %v4201 = vunpack.c.l.b16 %v2923
    %v4202 = vunpack.c.h.b16 %v2923
    %v4203 = vunpack.c.l.b16 %v2924
    %v4204 = vunpack.c.h.b16 %v2924
    %v4205 = vunpack.c.l.b16 %v2925
    %v4206 = vunpack.c.l.b16 %v2926
    %v4207 = vunpack.c.h.b16 %v2926
    %v4208 = vunpack.c.l.b16 %v2927
    %v4209 = vunpack.c.h.b16 %v2927
    %v4210 = vunpack.c.l.b16 %v2928
    %v4211 = vunpack.c.h.b16 %v2928
    %v4212 = vunpack.c.l.b16 %v2929
    %v4213 = vunpack.c.l.b16 %v2930
    %v4214 = vunpack.c.h.b16 %v2930
    %v4215 = vunpack.c.l.b16 %v2931
    %v4216 = vunpack.c.h.b16 %v2931
    %v4217 = vunpack.c.l.b16 %v2932
    %v4218 = vunpack.c.h.b16 %v2932
    %v4219 = vunpack.c.l.b16 %v2933
    %v4220 = vunpack.c.l.b16 %v2934
    %v4221 = vunpack.c.h.b16 %v2934
    %v4222 = vunpack.c.l.b16 %v2935
    %v4223 = vunpack.c.h.b16 %v2935
    %v4224 = vunpack.c.l.b16 %v2936
    %v4225 = vunpack.c.h.b16 %v2936
    %v4226 = vunpack.c.l.b16 %v2937
    %v4227 = vunpack.c.l.b16 %v2938
    %v4228 = vunpack.c.h.b16 %v2938
    %v4229 = vunpack.c.l.b16 %v2939
    %v4230 = vunpack.c.h.b16 %v2939
    %v4231 = vunpack.c.l.b16 %v2940
    %v4232 = vunpack.c.h.b16 %v2940
    %v4233 = vunpack.c.l.b16 %v2941
    %v4234 = vunpack.c.l.b16 %v2942
    %v4235 = vunpack.c.h.b16 %v2942
    %v4236 = vunpack.c.l.b16 %v2943
    %v4237 = vunpack.c.h.b16 %v2943
    %v4238 = vunpack.c.l.b16 %v2944
    %v4239 = vunpack.c.h.b16 %v2944
    %v4240 = vunpack.c.l.b16 %v2945
    %v4241 = vunpack.c.l.b16 %v2946
    %v4242 = vunpack.c.h.b16 %v2946
    %v4243 = vunpack.c.l.b16 %v2947
    %v4244 = vunpack.c.h.b16 %v2947
    %v4245 = vunpack.c.l.b16 %v2948
    %v4246 = vunpack.c.h.b16 %v2948
    %v4247 = vunpack.c.l.b16 %v2949
    %v4248 = vunpack.c.l.b16 %v2950
    %v4249 = vunpack.c.h.b16 %v2950
    %v4250 = vunpack.c.l.b16 %v2951
    %v4251 = vunpack.c.h.b16 %v2951
    %v4252 = vunpack.c.l.b16 %v2952
    %v4253 = vunpack.c.h.b16 %v2952
    %v4254 = vunpack.c.l.b16 %v2953
    %v4255 = vunpack.c.l.b16 %v2954
    %v4256 = vunpack.c.h.b16 %v2954
    %v4257 = vunpack.c.l.b16 %v2955
    %v4258 = vunpack.c.h.b16 %v2955
    %v4259 = vunpack.c.l.b16 %v2956
    %v4260 = vunpack.c.h.b16 %v2956
    %v4261 = vunpack.c.l.b16 %v2957
    %v4262 = vunpack.c.l.b16 %v2958
    %v4263 = vunpack.c.h.b16 %v2958
    %v4264 = vunpack.c.l.b16 %v2959
    %v4265 = vunpack.c.h.b16 %v2959
    %v4266 = vunpack.c.l.b16 %v2960
    %v4267 = vunpack.c.h.b16 %v2960
    %v4268 = vunpack.c.l.b16 %v2961
    %v4269 = vunpack.c.l.b16 %v2962
    %v4270 = vunpack.c.h.b16 %v2962
    %v4271 = vunpack.c.l.b16 %v2963
    %v4272 = vunpack.c.h.b16 %v2963
    %v4273 = vunpack.c.l.b16 %v2964
    %v4274 = vunpack.c.h.b16 %v2964
    %v4275 = vunpack.c.l.b16 %v2965
    %v4276 = vunpack.c.l.b16 %v2966
    %v4277 = vunpack.c.h.b16 %v2966
    %v4278 = vunpack.c.l.b16 %v2967
    %v4279 = vunpack.c.h.b16 %v2967
    %v4280 = vunpack.c.l.b16 %v2968
    %v4281 = vunpack.c.h.b16 %v2968
    %v4282 = vunpack.c.l.b16 %v2969
    %v4283 = vunpack.c.l.b16 %v2970
    %v4284 = vunpack.c.h.b16 %v2970
    %v4285 = vunpack.c.l.b16 %v2971
    %v4286 = vunpack.c.h.b16 %v2971
    %v4287 = vunpack.c.l.b16 %v2972
    %v4288 = vunpack.c.h.b16 %v2972
    %v4289 = vunpack.c.l.b16 %v2973
    %v4290 = vunpack.c.l.b16 %v2974
    %v4291 = vunpack.c.h.b16 %v2974
    %v4292 = vunpack.c.l.b16 %v2975
    %v4293 = vunpack.c.h.b16 %v2975
    %v4294 = vunpack.c.l.b16 %v2976
    %v4295 = vunpack.c.h.b16 %v2976
    %v4296 = vunpack.c.l.b16 %v2977
    %v4297 = vunpack.c.l.b16 %v2978
    %v4298 = vunpack.c.h.b16 %v2978
    %v4299 = vunpack.c.l.b16 %v2979
    %v4300 = vunpack.c.h.b16 %v2979
    %v4301 = vunpack.c.l.b16 %v2980
    %v4302 = vunpack.c.h.b16 %v2980
    %v4303 = vunpack.c.l.b16 %v2981
    %v4304 = vunpack.c.l.b16 %v2982
    %v4305 = vunpack.c.h.b16 %v2982
    %v4306 = vunpack.c.l.b16 %v2983
    %v4307 = vunpack.c.h.b16 %v2983
    %v4308 = vunpack.c.l.b16 %v2984
    %v4309 = vunpack.c.h.b16 %v2984
    %v4310 = vunpack.c.l.b16 %v2985
    %v4311 = vunpack.c.l.b16 %v2986
    %v4312 = vunpack.c.h.b16 %v2986
    %v4313 = vunpack.c.l.b16 %v2987
    %v4314 = vunpack.c.h.b16 %v2987
    %v4315 = vunpack.c.l.b16 %v2988
    %v4316 = vunpack.c.h.b16 %v2988
    %v4317 = vunpack.c.l.b16 %v2989
    %v4318 = vunpack.c.l.b16 %v2990
    %v4319 = vunpack.c.h.b16 %v2990
    %v4320 = vunpack.c.l.b16 %v2991
    %v4321 = vunpack.c.h.b16 %v2991
    %v4322 = vunpack.c.l.b16 %v2992
    %v4323 = vunpack.c.h.b16 %v2992
    %v4324 = vunpack.c.l.b16 %v2993
    %v4325 = vunpack.c.l.b16 %v2994
    %v4326 = vunpack.c.h.b16 %v2994
    %v4327 = vunpack.c.l.b16 %v2995
    %v4328 = vunpack.c.h.b16 %v2995
    %v4329 = vunpack.c.l.b16 %v2996
    %v4330 = vunpack.c.h.b16 %v2996
    %v4331 = vunpack.c.l.b16 %v2997
    %v4332 = vunpack.c.l.b16 %v2998
    %v4333 = vunpack.c.h.b16 %v2998
    %v4334 = vunpack.c.l.b16 %v2999
    %v4335 = vunpack.c.h.b16 %v2999
    %v4336 = vunpack.c.l.b16 %v3000
    %v4337 = vunpack.c.h.b16 %v3000
    %v4338 = vunpack.c.l.b16 %v3001
    %v4339 = vunpack.c.l.b16 %v3002
    %v4340 = vunpack.c.h.b16 %v3002
    %v4341 = vunpack.c.l.b16 %v3003
    %v4342 = vunpack.c.h.b16 %v3003
    %v4343 = vunpack.c.l.b16 %v3004
    %v4344 = vunpack.c.h.b16 %v3004
    %v4345 = vunpack.c.l.b16 %v3005
    %v4346 = vunpack.c.l.b16 %v3006
    %v4347 = vunpack.c.h.b16 %v3006
    %v4348 = vunpack.c.l.b16 %v3007
    %v4349 = vunpack.c.h.b16 %v3007
    %v4350 = vunpack.c.l.b16 %v3008
    %v4351 = vunpack.c.h.b16 %v3008
    %v4352 = vunpack.c.l.b16 %v3009
    %v4353 = vunpack.c.l.b16 %v3010
    %v4354 = vunpack.c.h.b16 %v3010
    %v4355 = vunpack.c.l.b16 %v3011
    %v4356 = vunpack.c.h.b16 %v3011
    %v4357 = vunpack.c.l.b16 %v3012
    %v4358 = vunpack.c.h.b16 %v3012
    %v4359 = vunpack.c.l.b16 %v3013
    %v4360 = vunpack.c.l.b16 %v3014
    %v4361 = vunpack.c.h.b16 %v3014
    %v4362 = vunpack.c.l.b16 %v3015
    %v4363 = vunpack.c.h.b16 %v3015
    %v4364 = vunpack.c.l.b16 %v3016
    %v4365 = vunpack.c.h.b16 %v3016
    %v4366 = vunpack.c.l.b16 %v3017
    %v4367 = vunpack.c.l.b16 %v3018
    %v4368 = vunpack.c.h.b16 %v3018
    %v4369 = vunpack.c.l.b16 %v3019
    %v4370 = vunpack.c.h.b16 %v3019
    %v4371 = vunpack.c.l.b16 %v3020
    %v4372 = vunpack.c.h.b16 %v3020
    %v4373 = vunpack.c.l.b16 %v3021
    %v4374 = vunpack.c.l.b16 %v3022
    %v4375 = vunpack.c.h.b16 %v3022
    %v4376 = vunpack.c.l.b16 %v3023
    %v4377 = vunpack.c.h.b16 %v3023
    %v4378 = vunpack.c.l.b16 %v3024
    %v4379 = vunpack.c.h.b16 %v3024
    %v4380 = vunpack.c.l.b16 %v3025
    %v4381 = vunpack.c.l.b16 %v3026
    %v4382 = vunpack.c.h.b16 %v3026
    %v4383 = vunpack.c.l.b16 %v3027
    %v4384 = vunpack.c.h.b16 %v3027
    %v4385 = vunpack.c.l.b16 %v3028
    %v4386 = vunpack.c.h.b16 %v3028
    %v4387 = vunpack.c.l.b16 %v3029
    %v4388 = vunpack.c.l.b16 %v3030
    %v4389 = vunpack.c.h.b16 %v3030
    %v4390 = vunpack.c.l.b16 %v3031
    %v4391 = vunpack.c.h.b16 %v3031
    %v4392 = vunpack.c.l.b16 %v3032
    %v4393 = vunpack.c.h.b16 %v3032
    %v4394 = vunpack.c.l.b16 %v3033
    %v4395 = vunpack.c.l.b16 %v3034
    %v4396 = vunpack.c.h.b16 %v3034
    %v4397 = vunpack.c.l.b16 %v3035
    %v4398 = vunpack.c.h.b16 %v3035
    %v4399 = vunpack.c.l.b16 %v3036
    %v4400 = vunpack.c.h.b16 %v3036
    %v4401 = vunpack.c.l.b16 %v3037
    %v4402 = vunpack.c.l.b16 %v3038
    %v4403 = vunpack.c.h.b16 %v3038
    %v4404 = vunpack.c.l.b16 %v3039
    %v4405 = vunpack.c.h.b16 %v3039
    %v4406 = vunpack.c.l.b16 %v3040
    %v4407 = vunpack.c.h.b16 %v3040
    %v4408 = vunpack.c.l.b16 %v3041
    %v4409 = vunpack.c.l.b16 %v3042
    %v4410 = vunpack.c.h.b16 %v3042
    %v4411 = vunpack.c.l.b16 %v3043
    %v4412 = vunpack.c.h.b16 %v3043
    %v4413 = vunpack.c.l.b16 %v3044
    %v4414 = vunpack.c.h.b16 %v3044
    %v4415 = vunpack.c.l.b16 %v3045
    %v4416 = vunpack.c.l.b16 %v3046
    %v4417 = vunpack.c.h.b16 %v3046
    %v4418 = vunpack.c.l.b16 %v3047
    %v4419 = vunpack.c.h.b16 %v3047
    %v4420 = vunpack.c.l.b16 %v3048
    %v4421 = vunpack.c.h.b16 %v3048
    %v4422 = vunpack.c.l.b16 %v3049
    %v4423 = vunpack.c.l.b16 %v3050
    %v4424 = vunpack.c.h.b16 %v3050
    %v4425 = vunpack.c.l.b16 %v3051
    %v4426 = vunpack.c.h.b16 %v3051
    %v4427 = vunpack.c.l.b16 %v3052
    %v4428 = vunpack.c.h.b16 %v3052
    %v4429 = vunpack.c.l.b16 %v3053
    %v4430 = vunpack.c.l.b16 %v3054
    %v4431 = vunpack.c.h.b16 %v3054
    %v4432 = vunpack.c.l.b16 %v3055
    %v4433 = vunpack.c.h.b16 %v3055
    %v4434 = vunpack.c.l.b16 %v3056
    %v4435 = vunpack.c.h.b16 %v3056
    %v4436 = vunpack.c.l.b16 %v3057
    %v4437 = vunpack.c.l.b16 %v3058
    %v4438 = vunpack.c.h.b16 %v3058
    %v4439 = vunpack.c.l.b16 %v3059
    %v4440 = vunpack.c.h.b16 %v3059
    %v4441 = vunpack.c.l.b16 %v3060
    %v4442 = vunpack.c.h.b16 %v3060
    %v4443 = vunpack.c.l.b16 %v3061
    %v4444 = vunpack.c.l.b16 %v3062
    %v4445 = vunpack.c.h.b16 %v3062
    %v4446 = vunpack.c.l.b16 %v3063
    %v4447 = vunpack.c.h.b16 %v3063
    %v4448 = vunpack.c.l.b16 %v3064
    %v4449 = vunpack.c.h.b16 %v3064
    %v4450 = vunpack.c.l.b16 %v3065
    %v4451 = vunpack.c.l.b16 %v3066
    %v4452 = vunpack.c.h.b16 %v3066
    %v4453 = vunpack.c.l.b16 %v3067
    %v4454 = vunpack.c.h.b16 %v3067
    %v4455 = vunpack.c.l.b16 %v3068
    %v4456 = vunpack.c.h.b16 %v3068
    %v4457 = vunpack.c.l.b16 %v3069
    %v4458 = vunpack.c.l.b16 %v3070
    %v4459 = vunpack.c.h.b16 %v3070
    %v4460 = vunpack.c.l.b16 %v3071
    %v4461 = vunpack.c.h.b16 %v3071
    %v4462 = vunpack.c.l.b16 %v3072
    %v4463 = vunpack.c.h.b16 %v3072
    %v4464 = vunpack.c.l.b16 %v3073
    %v4465 = vunpack.c.l.b16 %v3074
    %v4466 = vunpack.c.h.b16 %v3074
    %v4467 = vunpack.c.l.b16 %v3075
    %v4468 = vunpack.c.h.b16 %v3075
    %v4469 = vunpack.c.l.b16 %v3076
    %v4470 = vunpack.c.h.b16 %v3076
    %v4471 = vunpack.c.l.b16 %v3077
    %v4472 = vunpack.c.l.b16 %v3078
    %v4473 = vunpack.c.h.b16 %v3078
    %v4474 = vunpack.c.l.b16 %v3079
    %v4475 = vunpack.c.h.b16 %v3079
    %v4476 = vunpack.c.l.b16 %v3080
    %v4477 = vunpack.c.h.b16 %v3080
    %v4478 = vunpack.c.l.b16 %v3081
    %v4479 = vunpack.c.l.b16 %v3082
    %v4480 = vunpack.c.h.b16 %v3082
    %v4481 = vunpack.c.l.b16 %v3083
    %v4482 = vunpack.c.h.b16 %v3083
    %v4483 = vunpack.c.l.b16 %v3084
    %v4484 = vunpack.c.h.b16 %v3084
    %v4485 = vunpack.c.l.b16 %v3085
    %v4486 = vunpack.c.l.b16 %v3086
    %v4487 = vunpack.c.h.b16 %v3086
    %v4488 = vunpack.c.l.b16 %v3087
    %v4489 = vunpack.c.h.b16 %v3087
    %v4490 = vunpack.c.l.b16 %v3088
    %v4491 = vunpack.c.h.b16 %v3088
    %v4492 = vunpack.c.l.b16 %v3089
    %v4493 = vunpack.c.l.b16 %v3090
    %v4494 = vunpack.c.h.b16 %v3090
    %v4495 = vunpack.c.l.b16 %v3091
    %v4496 = vunpack.c.h.b16 %v3091
    %v4497 = vunpack.c.l.b16 %v3092
    %v4498 = vunpack.c.h.b16 %v3092
    %v4499 = vunpack.c.l.b16 %v3093
    %v4500 = vunpack.c.l.b16 %v3094
    %v4501 = vunpack.c.h.b16 %v3094
    %v4502 = vunpack.c.l.b16 %v3095
    %v4503 = vunpack.c.h.b16 %v3095
    %v4504 = vunpack.c.l.b16 %v3096
    %v4505 = vunpack.c.h.b16 %v3096
    %v4506 = vunpack.c.l.b16 %v3097
    %v4507 = vunpack.c.l.b16 %v3098
    %v4508 = vunpack.c.h.b16 %v3098
    %v4509 = vunpack.c.l.b16 %v3099
    %v4510 = vunpack.c.h.b16 %v3099
    %v4511 = vunpack.c.l.b16 %v3100
    %v4512 = vunpack.c.h.b16 %v3100
    %v4513 = vunpack.c.l.b16 %v3101
    %v4514 = vunpack.c.l.b16 %v3102
    %v4515 = vunpack.c.h.b16 %v3102
    %v4516 = vunpack.c.l.b16 %v3103
    %v4517 = vunpack.c.h.b16 %v3103
    %v4518 = vunpack.c.l.b16 %v3104
    %v4519 = vunpack.c.h.b16 %v3104
    %v4520 = vunpack.c.l.b16 %v3105
    %v4521 = vunpack.c.l.b16 %v3106
    %v4522 = vunpack.c.h.b16 %v3106
    %v4523 = vunpack.c.l.b16 %v3107
    %v4524 = vunpack.c.h.b16 %v3107
    %v4525 = vunpack.c.l.b16 %v3108
    %v4526 = vunpack.c.h.b16 %v3108
    %v4527 = vunpack.c.l.b16 %v3109
    %v4528 = vunpack.c.l.b16 %v3110
    %v4529 = vunpack.c.h.b16 %v3110
    %v4530 = vunpack.c.l.b16 %v3111
    %v4531 = vunpack.c.h.b16 %v3111
    %v4532 = vunpack.c.l.b16 %v3112
    %v4533 = vunpack.c.h.b16 %v3112
    %v4534 = vunpack.c.l.b16 %v3113
    %v4535 = vunpack.c.l.b16 %v3114
    %v4536 = vunpack.c.h.b16 %v3114
    %v4537 = vunpack.c.l.b16 %v3115
    %v4538 = vunpack.c.h.b16 %v3115
    %v4539 = vunpack.c.l.b16 %v3116
    %v4540 = vunpack.c.h.b16 %v3116
    %v4541 = vunpack.c.l.b16 %v3117
    %v4542 = vunpack.c.l.b16 %v3118
    %v4543 = vunpack.c.h.b16 %v3118
    %v4544 = vunpack.c.l.b16 %v3119
    %v4545 = vunpack.c.h.b16 %v3119
    %v4546 = vunpack.c.l.b16 %v3120
    %v4547 = vunpack.c.h.b16 %v3120
    %v4548 = vunpack.c.l.b16 %v3121
    %v4549 = vunpack.c.l.b16 %v3122
    %v4550 = vunpack.c.h.b16 %v3122
    %v4551 = vunpack.c.l.b16 %v3123
    %v4552 = vunpack.c.h.b16 %v3123
    %v4553 = vunpack.c.l.b16 %v3124
    %v4554 = vunpack.c.h.b16 %v3124
    %v4555 = vunpack.c.l.b16 %v3125
    %v4556 = vunpack.c.l.b16 %v3126
    %v4557 = vunpack.c.h.b16 %v3126
    %v4558 = vunpack.c.l.b16 %v3127
    %v4559 = vunpack.c.h.b16 %v3127
    %v4560 = vunpack.c.l.b16 %v3128
    %v4561 = vunpack.c.h.b16 %v3128
    %v4562 = vunpack.c.l.b16 %v3129
    %v4563 = vunpack.c.l.b16 %v3130
    %v4564 = vunpack.c.h.b16 %v3130
    %v4565 = vunpack.c.l.b16 %v3131
    %v4566 = vunpack.c.h.b16 %v3131
    %v4567 = vunpack.c.l.b16 %v3132
    %v4568 = vunpack.c.h.b16 %v3132
    %v4569 = vunpack.c.l.b16 %v3133
    %v4570 = vunpack.c.l.b16 %v3134
    %v4571 = vunpack.c.h.b16 %v3134
    %v4572 = vunpack.c.l.b16 %v3135
    %v4573 = vunpack.c.h.b16 %v3135
    %v4574 = vunpack.c.l.b16 %v3136
    %v4575 = vunpack.c.h.b16 %v3136
    %v4576 = vunpack.c.l.b16 %v3137
    %v4577 = vunpack.c.l.b16 %v3138
    %v4578 = vunpack.c.h.b16 %v3138
    %v4579 = vunpack.c.l.b16 %v3139
    %v4580 = vunpack.c.h.b16 %v3139
    %v4581 = vunpack.c.l.b16 %v3140
    %v4582 = vunpack.c.h.b16 %v3140
    %v4583 = vunpack.c.l.b16 %v3141
    %v4584 = vunpack.c.l.b16 %v3142
    %v4585 = vunpack.c.h.b16 %v3142
    %v4586 = vunpack.c.l.b16 %v3143
    %v4587 = vunpack.c.h.b16 %v3143
    %v4588 = vunpack.c.l.b16 %v3144
    %v4589 = vunpack.c.h.b16 %v3144
    %v4590 = vunpack.c.l.b16 %v3145
    %v4591 = vpack.c.b16 %v3702, %v3695
    %v4592 = vpack.c.b16 %v3703, %v3696
    %v4593 = vpack.c.b16 %v3704, %v3697
    %v4594 = vpack.c.b16 %v3705, %v3698
    %v4595 = vpack.c.b16 %v3706, %v3699
    %v4596 = vpack.c.b16 %v3707, %v3700
    %v4597 = vpack.c.b16 %v3708, %v3701
    %v4598 = vpack.c.b16 %v3716, %v3709
    %v4599 = vpack.c.b16 %v3717, %v3710
    %v4600 = vpack.c.b16 %v3718, %v3711
    %v4601 = vpack.c.b16 %v3719, %v3712
    %v4602 = vpack.c.b16 %v3720, %v3713
    %v4603 = vpack.c.b16 %v3721, %v3714
    %v4604 = vpack.c.b16 %v3722, %v3715
    %v4605 = vpack.c.b16 %v3730, %v3723
    %v4606 = vpack.c.b16 %v3731, %v3724
    %v4607 = vpack.c.b16 %v3732, %v3725
    %v4608 = vpack.c.b16 %v3733, %v3726
    %v4609 = vpack.c.b16 %v3734, %v3727
    %v4610 = vpack.c.b16 %v3735, %v3728
    %v4611 = vpack.c.b16 %v3736, %v3729
    %v4612 = vpack.c.b16 %v3744, %v3737
    %v4613 = vpack.c.b16 %v3745, %v3738
    %v4614 = vpack.c.b16 %v3746, %v3739
    %v4615 = vpack.c.b16 %v3747, %v3740
    %v4616 = vpack.c.b16 %v3748, %v3741
    %v4617 = vpack.c.b16 %v3749, %v3742
    %v4618 = vpack.c.b16 %v3750, %v3743
    %v4619 = vpack.c.b16 %v3758, %v3751
    %v4620 = vpack.c.b16 %v3759, %v3752
    %v4621 = vpack.c.b16 %v3760, %v3753
    %v4622 = vpack.c.b16 %v3761, %v3754
    %v4623 = vpack.c.b16 %v3762, %v3755
    %v4624 = vpack.c.b16 %v3763, %v3756
    %v4625 = vpack.c.b16 %v3764, %v3757
    %v4626 = vpack.c.b16 %v3772, %v3765
    %v4627 = vpack.c.b16 %v3773, %v3766
    %v4628 = vpack.c.b16 %v3774, %v3767
    %v4629 = vpack.c.b16 %v3775, %v3768
    %v4630 = vpack.c.b16 %v3776, %v3769
    %v4631 = vpack.c.b16 %v3777, %v3770
    %v4632 = vpack.c.b16 %v3778, %v3771
    %v4633 = vpack.c.b16 %v3786, %v3779
    %v4634 = vpack.c.b16 %v3787, %v3780
    %v4635 = vpack.c.b16 %v3788, %v3781
    %v4636 = vpack.c.b16 %v3789, %v3782
    %v4637 = vpack.c.b16 %v3790, %v3783
    %v4638 = vpack.c.b16 %v3791, %v3784
    %v4639 = vpack.c.b16 %v3792, %v3785
    %v4640 = vpack.c.b16 %v3800, %v3793
    %v4641 = vpack.c.b16 %v3801, %v3794
    %v4642 = vpack.c.b16 %v3802, %v3795
    %v4643 = vpack.c.b16 %v3803, %v3796
    %v4644 = vpack.c.b16 %v3804, %v3797
    %v4645 = vpack.c.b16 %v3805, %v3798
    %v4646 = vpack.c.b16 %v3806, %v3799
    %v4647 = vpack.c.b16 %v3814, %v3807
    %v4648 = vpack.c.b16 %v3815, %v3808
    %v4649 = vpack.c.b16 %v3816, %v3809
    %v4650 = vpack.c.b16 %v3817, %v3810
    %v4651 = vpack.c.b16 %v3818, %v3811
    %v4652 = vpack.c.b16 %v3819, %v3812
    %v4653 = vpack.c.b16 %v3820, %v3813
    %v4654 = vpack.c.b16 %v3828, %v3821
    %v4655 = vpack.c.b16 %v3829, %v3822
    %v4656 = vpack.c.b16 %v3830, %v3823
    %v4657 = vpack.c.b16 %v3831, %v3824
    %v4658 = vpack.c.b16 %v3832, %v3825
    %v4659 = vpack.c.b16 %v3833, %v3826
    %v4660 = vpack.c.b16 %v3834, %v3827
    %v4661 = vpack.c.b16 %v3842, %v3835
    %v4662 = vpack.c.b16 %v3843, %v3836
    %v4663 = vpack.c.b16 %v3844, %v3837
    %v4664 = vpack.c.b16 %v3845, %v3838
    %v4665 = vpack.c.b16 %v3846, %v3839
    %v4666 = vpack.c.b16 %v3847, %v3840
    %v4667 = vpack.c.b16 %v3848, %v3841
    %v4668 = vpack.c.b16 %v3856, %v3849
    %v4669 = vpack.c.b16 %v3857, %v3850
    %v4670 = vpack.c.b16 %v3858, %v3851
    %v4671 = vpack.c.b16 %v3859, %v3852
    %v4672 = vpack.c.b16 %v3860, %v3853
    %v4673 = vpack.c.b16 %v3861, %v3854
    %v4674 = vpack.c.b16 %v3862, %v3855
    %v4675 = vpack.c.b16 %v3870, %v3863
    %v4676 = vpack.c.b16 %v3871, %v3864
    %v4677 = vpack.c.b16 %v3872, %v3865
    %v4678 = vpack.c.b16 %v3873, %v3866
    %v4679 = vpack.c.b16 %v3874, %v3867
    %v4680 = vpack.c.b16 %v3875, %v3868
    %v4681 = vpack.c.b16 %v3876, %v3869
    %v4682 = vpack.c.b16 %v3884, %v3877
    %v4683 = vpack.c.b16 %v3885, %v3878
    %v4684 = vpack.c.b16 %v3886, %v3879
    %v4685 = vpack.c.b16 %v3887, %v3880
    %v4686 = vpack.c.b16 %v3888, %v3881
    %v4687 = vpack.c.b16 %v3889, %v3882
    %v4688 = vpack.c.b16 %v3890, %v3883
    %v4689 = vpack.c.b16 %v3898, %v3891
    %v4690 = vpack.c.b16 %v3899, %v3892
    %v4691 = vpack.c.b16 %v3900, %v3893
    %v4692 = vpack.c.b16 %v3901, %v3894
    %v4693 = vpack.c.b16 %v3902, %v3895
    %v4694 = vpack.c.b16 %v3903, %v3896
    %v4695 = vpack.c.b16 %v3904, %v3897
    %v4696 = vpack.c.b16 %v3912, %v3905
    %v4697 = vpack.c.b16 %v3913, %v3906
    %v4698 = vpack.c.b16 %v3914, %v3907
    %v4699 = vpack.c.b16 %v3915, %v3908
    %v4700 = vpack.c.b16 %v3916, %v3909
    %v4701 = vpack.c.b16 %v3917, %v3910
    %v4702 = vpack.c.b16 %v3918, %v3911
    %v4703 = vpack.c.b16 %v3926, %v3919
    %v4704 = vpack.c.b16 %v3927, %v3920
    %v4705 = vpack.c.b16 %v3928, %v3921
    %v4706 = vpack.c.b16 %v3929, %v3922
    %v4707 = vpack.c.b16 %v3930, %v3923
    %v4708 = vpack.c.b16 %v3931, %v3924
    %v4709 = vpack.c.b16 %v3932, %v3925
    %v4710 = vpack.c.b16 %v3940, %v3933
    %v4711 = vpack.c.b16 %v3941, %v3934
    %v4712 = vpack.c.b16 %v3942, %v3935
    %v4713 = vpack.c.b16 %v3943, %v3936
    %v4714 = vpack.c.b16 %v3944, %v3937
    %v4715 = vpack.c.b16 %v3945, %v3938
    %v4716 = vpack.c.b16 %v3946, %v3939
    %v4717 = vpack.c.b16 %v3954, %v3947
    %v4718 = vpack.c.b16 %v3955, %v3948
    %v4719 = vpack.c.b16 %v3956, %v3949
    %v4720 = vpack.c.b16 %v3957, %v3950
    %v4721 = vpack.c.b16 %v3958, %v3951
    %v4722 = vpack.c.b16 %v3959, %v3952
    %v4723 = vpack.c.b16 %v3960, %v3953
    %v4724 = vpack.c.b16 %v3968, %v3961
    %v4725 = vpack.c.b16 %v3969, %v3962
    %v4726 = vpack.c.b16 %v3970, %v3963
    %v4727 = vpack.c.b16 %v3971, %v3964
    %v4728 = vpack.c.b16 %v3972, %v3965
    %v4729 = vpack.c.b16 %v3973, %v3966
    %v4730 = vpack.c.b16 %v3974, %v3967
    %v4731 = vpack.c.b16 %v3982, %v3975
    %v4732 = vpack.c.b16 %v3983, %v3976
    %v4733 = vpack.c.b16 %v3984, %v3977
    %v4734 = vpack.c.b16 %v3985, %v3978
    %v4735 = vpack.c.b16 %v3986, %v3979
    %v4736 = vpack.c.b16 %v3987, %v3980
    %v4737 = vpack.c.b16 %v3988, %v3981
    %v4738 = vpack.c.b16 %v3996, %v3989
    %v4739 = vpack.c.b16 %v3997, %v3990
    %v4740 = vpack.c.b16 %v3998, %v3991
    %v4741 = vpack.c.b16 %v3999, %v3992
    %v4742 = vpack.c.b16 %v4000, %v3993
    %v4743 = vpack.c.b16 %v4001, %v3994
    %v4744 = vpack.c.b16 %v4002, %v3995
    %v4745 = vpack.c.b16 %v4010, %v4003
    %v4746 = vpack.c.b16 %v4011, %v4004
    %v4747 = vpack.c.b16 %v4012, %v4005
    %v4748 = vpack.c.b16 %v4013, %v4006
    %v4749 = vpack.c.b16 %v4014, %v4007
    %v4750 = vpack.c.b16 %v4015, %v4008
    %v4751 = vpack.c.b16 %v4016, %v4009
    %v4752 = vpack.c.b16 %v4024, %v4017
    %v4753 = vpack.c.b16 %v4025, %v4018
    %v4754 = vpack.c.b16 %v4026, %v4019
    %v4755 = vpack.c.b16 %v4027, %v4020
    %v4756 = vpack.c.b16 %v4028, %v4021
    %v4757 = vpack.c.b16 %v4029, %v4022
    %v4758 = vpack.c.b16 %v4030, %v4023
    %v4759 = vpack.c.b16 %v4038, %v4031
    %v4760 = vpack.c.b16 %v4039, %v4032
    %v4761 = vpack.c.b16 %v4040, %v4033
    %v4762 = vpack.c.b16 %v4041, %v4034
    %v4763 = vpack.c.b16 %v4042, %v4035
    %v4764 = vpack.c.b16 %v4043, %v4036
    %v4765 = vpack.c.b16 %v4044, %v4037
    %v4766 = vpack.c.b16 %v4052, %v4045
    %v4767 = vpack.c.b16 %v4053, %v4046
    %v4768 = vpack.c.b16 %v4054, %v4047
    %v4769 = vpack.c.b16 %v4055, %v4048
    %v4770 = vpack.c.b16 %v4056, %v4049
    %v4771 = vpack.c.b16 %v4057, %v4050
    %v4772 = vpack.c.b16 %v4058, %v4051
    %v4773 = vpack.c.b16 %v4066, %v4059
    %v4774 = vpack.c.b16 %v4067, %v4060
    %v4775 = vpack.c.b16 %v4068, %v4061
    %v4776 = vpack.c.b16 %v4069, %v4062
    %v4777 = vpack.c.b16 %v4070, %v4063
    %v4778 = vpack.c.b16 %v4071, %v4064
    %v4779 = vpack.c.b16 %v4072, %v4065
    %v4780 = vpack.c.b16 %v4080, %v4073
    %v4781 = vpack.c.b16 %v4081, %v4074
    %v4782 = vpack.c.b16 %v4082, %v4075
    %v4783 = vpack.c.b16 %v4083, %v4076
    %v4784 = vpack.c.b16 %v4084, %v4077
    %v4785 = vpack.c.b16 %v4085, %v4078
    %v4786 = vpack.c.b16 %v4086, %v4079
    %v4787 = vpack.c.b16 %v4094, %v4087
    %v4788 = vpack.c.b16 %v4095, %v4088
    %v4789 = vpack.c.b16 %v4096, %v4089
    %v4790 = vpack.c.b16 %v4097, %v4090
    %v4791 = vpack.c.b16 %v4098, %v4091
    %v4792 = vpack.c.b16 %v4099, %v4092
    %v4793 = vpack.c.b16 %v4100, %v4093
    %v4794 = vpack.c.b16 %v4108, %v4101
    %v4795 = vpack.c.b16 %v4109, %v4102
    %v4796 = vpack.c.b16 %v4110, %v4103
    %v4797 = vpack.c.b16 %v4111, %v4104
    %v4798 = vpack.c.b16 %v4112, %v4105
    %v4799 = vpack.c.b16 %v4113, %v4106
    %v4800 = vpack.c.b16 %v4114, %v4107
    %v4801 = vpack.c.b16 %v4122, %v4115
    %v4802 = vpack.c.b16 %v4123, %v4116
    %v4803 = vpack.c.b16 %v4124, %v4117
    %v4804 = vpack.c.b16 %v4125, %v4118
    %v4805 = vpack.c.b16 %v4126, %v4119
    %v4806 = vpack.c.b16 %v4127, %v4120
    %v4807 = vpack.c.b16 %v4128, %v4121
    %v4808 = vpack.c.b16 %v4136, %v4129
    %v4809 = vpack.c.b16 %v4137, %v4130
    %v4810 = vpack.c.b16 %v4138, %v4131
    %v4811 = vpack.c.b16 %v4139, %v4132
    %v4812 = vpack.c.b16 %v4140, %v4133
    %v4813 = vpack.c.b16 %v4141, %v4134
    %v4814 = vpack.c.b16 %v4142, %v4135
    %v4815 = vpack.c.b16 %v4150, %v4143
    %v4816 = vpack.c.b16 %v4151, %v4144
    %v4817 = vpack.c.b16 %v4152, %v4145
    %v4818 = vpack.c.b16 %v4153, %v4146
    %v4819 = vpack.c.b16 %v4154, %v4147
    %v4820 = vpack.c.b16 %v4155, %v4148
    %v4821 = vpack.c.b16 %v4156, %v4149
    %v4822 = vpack.c.b16 %v4164, %v4157
    %v4823 = vpack.c.b16 %v4165, %v4158
    %v4824 = vpack.c.b16 %v4166, %v4159
    %v4825 = vpack.c.b16 %v4167, %v4160
    %v4826 = vpack.c.b16 %v4168, %v4161
    %v4827 = vpack.c.b16 %v4169, %v4162
    %v4828 = vpack.c.b16 %v4170, %v4163
    %v4829 = vpack.c.b16 %v4178, %v4171
    %v4830 = vpack.c.b16 %v4179, %v4172
    %v4831 = vpack.c.b16 %v4180, %v4173
    %v4832 = vpack.c.b16 %v4181, %v4174
    %v4833 = vpack.c.b16 %v4182, %v4175
    %v4834 = vpack.c.b16 %v4183, %v4176
    %v4835 = vpack.c.b16 %v4184, %v4177
    %v4836 = vpack.c.b16 %v4192, %v4185
    %v4837 = vpack.c.b16 %v4193, %v4186
    %v4838 = vpack.c.b16 %v4194, %v4187
    %v4839 = vpack.c.b16 %v4195, %v4188
    %v4840 = vpack.c.b16 %v4196, %v4189
    %v4841 = vpack.c.b16 %v4197, %v4190
    %v4842 = vpack.c.b16 %v4198, %v4191
    %v4843 = vpack.c.b16 %v4206, %v4199
    %v4844 = vpack.c.b16 %v4207, %v4200
    %v4845 = vpack.c.b16 %v4208, %v4201
    %v4846 = vpack.c.b16 %v4209, %v4202
    %v4847 = vpack.c.b16 %v4210, %v4203
    %v4848 = vpack.c.b16 %v4211, %v4204
    %v4849 = vpack.c.b16 %v4212, %v4205
    %v4850 = vpack.c.b16 %v4220, %v4213
    %v4851 = vpack.c.b16 %v4221, %v4214
    %v4852 = vpack.c.b16 %v4222, %v4215
    %v4853 = vpack.c.b16 %v4223, %v4216
    %v4854 = vpack.c.b16 %v4224, %v4217
    %v4855 = vpack.c.b16 %v4225, %v4218
    %v4856 = vpack.c.b16 %v4226, %v4219
    %v4857 = vpack.c.b16 %v4234, %v4227
    %v4858 = vpack.c.b16 %v4235, %v4228
    %v4859 = vpack.c.b16 %v4236, %v4229
    %v4860 = vpack.c.b16 %v4237, %v4230
    %v4861 = vpack.c.b16 %v4238, %v4231
    %v4862 = vpack.c.b16 %v4239, %v4232
    %v4863 = vpack.c.b16 %v4240, %v4233
    %v4864 = vpack.c.b16 %v4248, %v4241
    %v4865 = vpack.c.b16 %v4249, %v4242
    %v4866 = vpack.c.b16 %v4250, %v4243
    %v4867 = vpack.c.b16 %v4251, %v4244
    %v4868 = vpack.c.b16 %v4252, %v4245
    %v4869 = vpack.c.b16 %v4253, %v4246
    %v4870 = vpack.c.b16 %v4254, %v4247
    %v4871 = vpack.c.b16 %v4262, %v4255
    %v4872 = vpack.c.b16 %v4263, %v4256
    %v4873 = vpack.c.b16 %v4264, %v4257
    %v4874 = vpack.c.b16 %v4265, %v4258
    %v4875 = vpack.c.b16 %v4266, %v4259
    %v4876 = vpack.c.b16 %v4267, %v4260
    %v4877 = vpack.c.b16 %v4268, %v4261
    %v4878 = vpack.c.b16 %v4276, %v4269
    %v4879 = vpack.c.b16 %v4277, %v4270
    %v4880 = vpack.c.b16 %v4278, %v4271
    %v4881 = vpack.c.b16 %v4279, %v4272
    %v4882 = vpack.c.b16 %v4280, %v4273
    %v4883 = vpack.c.b16 %v4281, %v4274
    %v4884 = vpack.c.b16 %v4282, %v4275
    %v4885 = vpack.c.b16 %v4290, %v4283
    %v4886 = vpack.c.b16 %v4291, %v4284
    %v4887 = vpack.c.b16 %v4292, %v4285
    %v4888 = vpack.c.b16 %v4293, %v4286
    %v4889 = vpack.c.b16 %v4294, %v4287
    %v4890 = vpack.c.b16 %v4295, %v4288
    %v4891 = vpack.c.b16 %v4296, %v4289
    %v4892 = vpack.c.b16 %v4304, %v4297
    %v4893 = vpack.c.b16 %v4305, %v4298
    %v4894 = vpack.c.b16 %v4306, %v4299
    %v4895 = vpack.c.b16 %v4307, %v4300
    %v4896 = vpack.c.b16 %v4308, %v4301
    %v4897 = vpack.c.b16 %v4309, %v4302
    %v4898 = vpack.c.b16 %v4310, %v4303
    %v4899 = vpack.c.b16 %v4318, %v4311
    %v4900 = vpack.c.b16 %v4319, %v4312
    %v4901 = vpack.c.b16 %v4320, %v4313
    %v4902 = vpack.c.b16 %v4321, %v4314
    %v4903 = vpack.c.b16 %v4322, %v4315
    %v4904 = vpack.c.b16 %v4323, %v4316
    %v4905 = vpack.c.b16 %v4324, %v4317
    %v4906 = vpack.c.b16 %v4332, %v4325
    %v4907 = vpack.c.b16 %v4333, %v4326
    %v4908 = vpack.c.b16 %v4334, %v4327
    %v4909 = vpack.c.b16 %v4335, %v4328
    %v4910 = vpack.c.b16 %v4336, %v4329
    %v4911 = vpack.c.b16 %v4337, %v4330
    %v4912 = vpack.c.b16 %v4338, %v4331
    %v4913 = vpack.c.b16 %v4346, %v4339
    %v4914 = vpack.c.b16 %v4347, %v4340
    %v4915 = vpack.c.b16 %v4348, %v4341
    %v4916 = vpack.c.b16 %v4349, %v4342
    %v4917 = vpack.c.b16 %v4350, %v4343
    %v4918 = vpack.c.b16 %v4351, %v4344
    %v4919 = vpack.c.b16 %v4352, %v4345
    %v4920 = vpack.c.b16 %v4360, %v4353
    %v4921 = vpack.c.b16 %v4361, %v4354
    %v4922 = vpack.c.b16 %v4362, %v4355
    %v4923 = vpack.c.b16 %v4363, %v4356
    %v4924 = vpack.c.b16 %v4364, %v4357
    %v4925 = vpack.c.b16 %v4365, %v4358
    %v4926 = vpack.c.b16 %v4366, %v4359
    %v4927 = vpack.c.b16 %v4374, %v4367
    %v4928 = vpack.c.b16 %v4375, %v4368
    %v4929 = vpack.c.b16 %v4376, %v4369
    %v4930 = vpack.c.b16 %v4377, %v4370
    %v4931 = vpack.c.b16 %v4378, %v4371
    %v4932 = vpack.c.b16 %v4379, %v4372
    %v4933 = vpack.c.b16 %v4380, %v4373
    %v4934 = vpack.c.b16 %v4388, %v4381
    %v4935 = vpack.c.b16 %v4389, %v4382
    %v4936 = vpack.c.b16 %v4390, %v4383
    %v4937 = vpack.c.b16 %v4391, %v4384
    %v4938 = vpack.c.b16 %v4392, %v4385
    %v4939 = vpack.c.b16 %v4393, %v4386
    %v4940 = vpack.c.b16 %v4394, %v4387
    %v4941 = vpack.c.b16 %v4402, %v4395
    %v4942 = vpack.c.b16 %v4403, %v4396
    %v4943 = vpack.c.b16 %v4404, %v4397
    %v4944 = vpack.c.b16 %v4405, %v4398
    %v4945 = vpack.c.b16 %v4406, %v4399
    %v4946 = vpack.c.b16 %v4407, %v4400
    %v4947 = vpack.c.b16 %v4408, %v4401
    %v4948 = vpack.c.b16 %v4416, %v4409
    %v4949 = vpack.c.b16 %v4417, %v4410
    %v4950 = vpack.c.b16 %v4418, %v4411
    %v4951 = vpack.c.b16 %v4419, %v4412
    %v4952 = vpack.c.b16 %v4420, %v4413
    %v4953 = vpack.c.b16 %v4421, %v4414
    %v4954 = vpack.c.b16 %v4422, %v4415
    %v4955 = vpack.c.b16 %v4430, %v4423
    %v4956 = vpack.c.b16 %v4431, %v4424
    %v4957 = vpack.c.b16 %v4432, %v4425
    %v4958 = vpack.c.b16 %v4433, %v4426
    %v4959 = vpack.c.b16 %v4434, %v4427
    %v4960 = vpack.c.b16 %v4435, %v4428
    %v4961 = vpack.c.b16 %v4436, %v4429
    %v4962 = vpack.c.b16 %v4444, %v4437
    %v4963 = vpack.c.b16 %v4445, %v4438
    %v4964 = vpack.c.b16 %v4446, %v4439
    %v4965 = vpack.c.b16 %v4447, %v4440
    %v4966 = vpack.c.b16 %v4448, %v4441
    %v4967 = vpack.c.b16 %v4449, %v4442
    %v4968 = vpack.c.b16 %v4450, %v4443
    %v4969 = vpack.c.b16 %v4458, %v4451
    %v4970 = vpack.c.b16 %v4459, %v4452
    %v4971 = vpack.c.b16 %v4460, %v4453
    %v4972 = vpack.c.b16 %v4461, %v4454
    %v4973 = vpack.c.b16 %v4462, %v4455
    %v4974 = vpack.c.b16 %v4463, %v4456
    %v4975 = vpack.c.b16 %v4464, %v4457
    %v4976 = vpack.c.b16 %v4472, %v4465
    %v4977 = vpack.c.b16 %v4473, %v4466
    %v4978 = vpack.c.b16 %v4474, %v4467
    %v4979 = vpack.c.b16 %v4475, %v4468
    %v4980 = vpack.c.b16 %v4476, %v4469
    %v4981 = vpack.c.b16 %v4477, %v4470
    %v4982 = vpack.c.b16 %v4478, %v4471
    %v4983 = vpack.c.b16 %v4486, %v4479
    %v4984 = vpack.c.b16 %v4487, %v4480
    %v4985 = vpack.c.b16 %v4488, %v4481
    %v4986 = vpack.c.b16 %v4489, %v4482
    %v4987 = vpack.c.b16 %v4490, %v4483
    %v4988 = vpack.c.b16 %v4491, %v4484
    %v4989 = vpack.c.b16 %v4492, %v4485
    %v4990 = vpack.c.b16 %v4500, %v4493
    %v4991 = vpack.c.b16 %v4501, %v4494
    %v4992 = vpack.c.b16 %v4502, %v4495
    %v4993 = vpack.c.b16 %v4503, %v4496
    %v4994 = vpack.c.b16 %v4504, %v4497
    %v4995 = vpack.c.b16 %v4505, %v4498
    %v4996 = vpack.c.b16 %v4506, %v4499
    %v4997 = vpack.c.b16 %v4514, %v4507
    %v4998 = vpack.c.b16 %v4515, %v4508
    %v4999 = vpack.c.b16 %v4516, %v4509
    %v5000 = vpack.c.b16 %v4517, %v4510
    %v5001 = vpack.c.b16 %v4518, %v4511
    %v5002 = vpack.c.b16 %v4519, %v4512
    %v5003 = vpack.c.b16 %v4520, %v4513
    %v5004 = vpack.c.b16 %v4528, %v4521
    %v5005 = vpack.c.b16 %v4529, %v4522
    %v5006 = vpack.c.b16 %v4530, %v4523
    %v5007 = vpack.c.b16 %v4531, %v4524
    %v5008 = vpack.c.b16 %v4532, %v4525
    %v5009 = vpack.c.b16 %v4533, %v4526
    %v5010 = vpack.c.b16 %v4534, %v4527
    %v5011 = vpack.c.b16 %v4542, %v4535
    %v5012 = vpack.c.b16 %v4543, %v4536
    %v5013 = vpack.c.b16 %v4544, %v4537
    %v5014 = vpack.c.b16 %v4545, %v4538
    %v5015 = vpack.c.b16 %v4546, %v4539
    %v5016 = vpack.c.b16 %v4547, %v4540
    %v5017 = vpack.c.b16 %v4548, %v4541
    %v5018 = vpack.c.b16 %v4556, %v4549
    %v5019 = vpack.c.b16 %v4557, %v4550
    %v5020 = vpack.c.b16 %v4558, %v4551
    %v5021 = vpack.c.b16 %v4559, %v4552
    %v5022 = vpack.c.b16 %v4560, %v4553
    %v5023 = vpack.c.b16 %v4561, %v4554
    %v5024 = vpack.c.b16 %v4562, %v4555
    %v5025 = vpack.c.b16 %v4570, %v4563
    %v5026 = vpack.c.b16 %v4571, %v4564
    %v5027 = vpack.c.b16 %v4572, %v4565
    %v5028 = vpack.c.b16 %v4573, %v4566
    %v5029 = vpack.c.b16 %v4574, %v4567
    %v5030 = vpack.c.b16 %v4575, %v4568
    %v5031 = vpack.c.b16 %v4576, %v4569
    %v5032 = vpack.c.b16 %v4584, %v4577
    %v5033 = vpack.c.b16 %v4585, %v4578
    %v5034 = vpack.c.b16 %v4586, %v4579
    %v5035 = vpack.c.b16 %v4587, %v4580
    %v5036 = vpack.c.b16 %v4588, %v4581
    %v5037 = vpack.c.b16 %v4589, %v4582
    %v5038 = vpack.c.b16 %v4590, %v4583
    %5487 = vmatprep.subr.bf16.mxu0 %v4592
    %5488 = vmatpush1.bf16.msra.mxu0 %v4591
    %5489 = vmatprep.subr.bf16.mxu0 %v4599
    %5490 = vmatpush1.bf16.msra.mxu0 %v4598
    %5491 = vmatprep.subr.bf16.mxu0 %v4606
    %5492 = vmatpush1.bf16.msra.mxu0 %v4605
    %5493 = vmatprep.subr.bf16.mxu0 %v4613
    %5494 = vmatpush1.bf16.msra.mxu0 %v4612
    %5495 = vmatprep.subr.bf16.mxu0 %v4620
    %5496 = vmatpush1.bf16.msra.mxu0 %v4619
    %5497 = vmatprep.subr.bf16.mxu0 %v4627
    %5498 = vmatpush1.bf16.msra.mxu0 %v4626
    %5499 = vmatprep.subr.bf16.mxu0 %v4634
    %5500 = vmatpush1.bf16.msra.mxu0 %v4633
    %5501 = vmatprep.subr.bf16.mxu0 %v4641
    %5502 = vmatpush1.bf16.msra.mxu0 %v4640
    %5503 = vmatprep.subr.bf16.mxu0 %v4648
    %5504 = vmatpush1.bf16.msra.mxu0 %v4647
    %5505 = vmatprep.subr.bf16.mxu0 %v4655
    %5506 = vmatpush1.bf16.msra.mxu0 %v4654
    %5507 = vmatprep.subr.bf16.mxu0 %v4662
    %5508 = vmatpush1.bf16.msra.mxu0 %v4661
    %5509 = vmatprep.subr.bf16.mxu0 %v4669
    %5510 = vmatpush1.bf16.msra.mxu0 %v4668
    %5511 = vmatprep.subr.bf16.mxu0 %v4676
    %5512 = vmatpush1.bf16.msra.mxu0 %v4675
    %5513 = vmatprep.subr.bf16.mxu0 %v4683
    %5514 = vmatpush1.bf16.msra.mxu0 %v4682
    %5515 = vmatprep.subr.bf16.mxu0 %v4690
    %5516 = vmatpush1.bf16.msra.mxu0 %v4689
    %5517 = vmatprep.subr.bf16.mxu0 %v4697
    %5518 = vmatpush1.bf16.msra.mxu0 %v4696
    %5519 = vmatprep.mubr.bf16.mxu0 %v2627
    %5520 = vmatmul.mubr.bf16.gmra.mrb[0].mxu0 %v2626
    %v5521 = vpop.f32.mrb[0].mxu0
    %v5522 = vadd.f32 %v3151, %v5521
    %v5523 = vpop.f32.mrb[0].mxu0
    %v5524 = vadd.f32 %v3155, %v5523
    %v5525 = vpop.f32.mrb[0].mxu0
    %v5526 = vpop.f32.mrb[0].mxu0
    %5527 = vdwg.mxu0
    %5528 = vmatprep.subr.bf16.mxu0 %v4704
    %5529 = vmatpush1.bf16.msra.mxu0 %v4703
    %5530 = vmatprep.subr.bf16.mxu0 %v4711
    %5531 = vmatpush1.bf16.msra.mxu0 %v4710
    %5532 = vmatprep.subr.bf16.mxu0 %v4718
    %5533 = vmatpush1.bf16.msra.mxu0 %v4717
    %5534 = vmatprep.subr.bf16.mxu0 %v4725
    %5535 = vmatpush1.bf16.msra.mxu0 %v4724
    %5536 = vmatprep.subr.bf16.mxu0 %v4732
    %5537 = vmatpush1.bf16.msra.mxu0 %v4731
    %5538 = vmatprep.subr.bf16.mxu0 %v4739
    %5539 = vmatpush1.bf16.msra.mxu0 %v4738
    %5540 = vmatprep.subr.bf16.mxu0 %v4746
    %5541 = vmatpush1.bf16.msra.mxu0 %v4745
    %5542 = vmatprep.subr.bf16.mxu0 %v4753
    %5543 = vmatpush1.bf16.msra.mxu0 %v4752
    %5544 = vmatprep.subr.bf16.mxu0 %v4760
    %5545 = vmatpush1.bf16.msra.mxu0 %v4759
    %5546 = vmatprep.subr.bf16.mxu0 %v4767
    %5547 = vmatpush1.bf16.msra.mxu0 %v4766
    %5548 = vmatprep.subr.bf16.mxu0 %v4774
    %5549 = vmatpush1.bf16.msra.mxu0 %v4773
    %5550 = vmatprep.subr.bf16.mxu0 %v4781
    %5551 = vmatpush1.bf16.msra.mxu0 %v4780
    %5552 = vmatprep.subr.bf16.mxu0 %v4788
    %5553 = vmatpush1.bf16.msra.mxu0 %v4787
    %5554 = vmatprep.subr.bf16.mxu0 %v4795
    %5555 = vmatpush1.bf16.msra.mxu0 %v4794
    %5556 = vmatprep.subr.bf16.mxu0 %v4802
    %5557 = vmatpush1.bf16.msra.mxu0 %v4801
    %5558 = vmatprep.subr.bf16.mxu0 %v4809
    %5559 = vmatpush1.bf16.msra.mxu0 %v4808
    %5560 = vmatprep.mubr.bf16.mxu0 %v2629
    %5561 = vmatmul.mubr.bf16.gmra.mrb[0].mxu0 %v2628
    %v5562 = vpop.f32.mrb[0].mxu0
    %v5563 = vadd.f32 %v5522, %v5562
    %v5564 = vpop.f32.mrb[0].mxu0
    %v5565 = vadd.f32 %v5524, %v5564
    %v5566 = vpop.f32.mrb[0].mxu0
    %v5567 = vpop.f32.mrb[0].mxu0
    %5568 = vdwg.mxu0
    %5569 = vmatprep.subr.bf16.mxu0 %v4816
    %5570 = vmatpush1.bf16.msra.mxu0 %v4815
    %5571 = vmatprep.subr.bf16.mxu0 %v4823
    %5572 = vmatpush1.bf16.msra.mxu0 %v4822
    %5573 = vmatprep.subr.bf16.mxu0 %v4830
    %5574 = vmatpush1.bf16.msra.mxu0 %v4829
    %5575 = vmatprep.subr.bf16.mxu0 %v4837
    %5576 = vmatpush1.bf16.msra.mxu0 %v4836
    %5577 = vmatprep.subr.bf16.mxu0 %v4844
    %5578 = vmatpush1.bf16.msra.mxu0 %v4843
    %5579 = vmatprep.subr.bf16.mxu0 %v4851
    %5580 = vmatpush1.bf16.msra.mxu0 %v4850
    %5581 = vmatprep.subr.bf16.mxu0 %v4858
    %5582 = vmatpush1.bf16.msra.mxu0 %v4857
    %5583 = vmatprep.subr.bf16.mxu0 %v4865
    %5584 = vmatpush1.bf16.msra.mxu0 %v4864
    %5585 = vmatprep.subr.bf16.mxu0 %v4872
    %5586 = vmatpush1.bf16.msra.mxu0 %v4871
    %5587 = vmatprep.subr.bf16.mxu0 %v4879
    %5588 = vmatpush1.bf16.msra.mxu0 %v4878
    %5589 = vmatprep.subr.bf16.mxu0 %v4886
    %5590 = vmatpush1.bf16.msra.mxu0 %v4885
    %5591 = vmatprep.subr.bf16.mxu0 %v4893
    %5592 = vmatpush1.bf16.msra.mxu0 %v4892
    %5593 = vmatprep.subr.bf16.mxu0 %v4900
    %5594 = vmatpush1.bf16.msra.mxu0 %v4899
    %5595 = vmatprep.subr.bf16.mxu0 %v4907
    %5596 = vmatpush1.bf16.msra.mxu0 %v4906
    %5597 = vmatprep.subr.bf16.mxu0 %v4914
    %5598 = vmatpush1.bf16.msra.mxu0 %v4913
    %5599 = vmatprep.subr.bf16.mxu0 %v4921
    %5600 = vmatpush1.bf16.msra.mxu0 %v4920
    %5601 = vmatprep.mubr.bf16.mxu0 %v2631
    %5602 = vmatmul.mubr.bf16.gmra.mrb[0].mxu0 %v2630
    %v5603 = vpop.f32.mrb[0].mxu0
    %v5604 = vadd.f32 %v5563, %v5603
    %v5605 = vpop.f32.mrb[0].mxu0
    %v5606 = vadd.f32 %v5565, %v5605
    %v5607 = vpop.f32.mrb[0].mxu0
    %v5608 = vpop.f32.mrb[0].mxu0
    %5609 = vdwg.mxu0
    %5610 = vmatprep.subr.bf16.mxu0 %v4928
    %5611 = vmatpush1.bf16.msra.mxu0 %v4927
    %5612 = vmatprep.subr.bf16.mxu0 %v4935
    %5613 = vmatpush1.bf16.msra.mxu0 %v4934
    %5614 = vmatprep.subr.bf16.mxu0 %v4942
    %5615 = vmatpush1.bf16.msra.mxu0 %v4941
    %5616 = vmatprep.subr.bf16.mxu0 %v4949
    %5617 = vmatpush1.bf16.msra.mxu0 %v4948
    %5618 = vmatprep.subr.bf16.mxu0 %v4956
    %5619 = vmatpush1.bf16.msra.mxu0 %v4955
    %5620 = vmatprep.subr.bf16.mxu0 %v4963
    %5621 = vmatpush1.bf16.msra.mxu0 %v4962
    %5622 = vmatprep.subr.bf16.mxu0 %v4970
    %5623 = vmatpush1.bf16.msra.mxu0 %v4969
    %5624 = vmatprep.subr.bf16.mxu0 %v4977
    %5625 = vmatpush1.bf16.msra.mxu0 %v4976
    %5626 = vmatprep.subr.bf16.mxu0 %v4984
    %5627 = vmatpush1.bf16.msra.mxu0 %v4983
    %5628 = vmatprep.subr.bf16.mxu0 %v4991
    %5629 = vmatpush1.bf16.msra.mxu0 %v4990
    %5630 = vmatprep.subr.bf16.mxu0 %v4998
    %5631 = vmatpush1.bf16.msra.mxu0 %v4997
    %5632 = vmatprep.subr.bf16.mxu0 %v5005
    %5633 = vmatpush1.bf16.msra.mxu0 %v5004
    %5634 = vmatprep.subr.bf16.mxu0 %v5012
    %5635 = vmatpush1.bf16.msra.mxu0 %v5011
    %5636 = vmatprep.subr.bf16.mxu0 %v5019
    %5637 = vmatpush1.bf16.msra.mxu0 %v5018
    %5638 = vmatprep.subr.bf16.mxu0 %v5026
    %5639 = vmatpush1.bf16.msra.mxu0 %v5025
    %5640 = vmatprep.subr.bf16.mxu0 %v5033
    %5641 = vmatpush1.bf16.msra.mxu0 %v5032
    %5642 = vmatprep.mubr.bf16.mxu0 %v2633
    %5643 = vmatmul.mubr.bf16.gmra.mrb[0].mxu0 %v2632
    %v5644 = vpop.f32.mrb[0].mxu0
    %v5645 = vadd.f32 %v5604, %v5644
    %v5646 = vpop.f32.mrb[0].mxu0
    %v5647 = vadd.f32 %v5606, %v5646
    %v5648 = vpop.f32.mrb[0].mxu0
    %v5649 = vpop.f32.mrb[0].mxu0
    %5650 = vdwg.mxu0
    %5651 = vmatprep.subr.bf16.mxu0 %v4594
    %5652 = vmatpush1.bf16.msra.mxu0 %v4593
    %5653 = vmatprep.subr.bf16.mxu0 %v4601
    %5654 = vmatpush1.bf16.msra.mxu0 %v4600
    %5655 = vmatprep.subr.bf16.mxu0 %v4608
    %5656 = vmatpush1.bf16.msra.mxu0 %v4607
    %5657 = vmatprep.subr.bf16.mxu0 %v4615
    %5658 = vmatpush1.bf16.msra.mxu0 %v4614
    %5659 = vmatprep.subr.bf16.mxu0 %v4622
    %5660 = vmatpush1.bf16.msra.mxu0 %v4621
    %5661 = vmatprep.subr.bf16.mxu0 %v4629
    %5662 = vmatpush1.bf16.msra.mxu0 %v4628
    %5663 = vmatprep.subr.bf16.mxu0 %v4636
    %5664 = vmatpush1.bf16.msra.mxu0 %v4635
    %5665 = vmatprep.subr.bf16.mxu0 %v4643
    %5666 = vmatpush1.bf16.msra.mxu0 %v4642
    %5667 = vmatprep.subr.bf16.mxu0 %v4650
    %5668 = vmatpush1.bf16.msra.mxu0 %v4649
    %5669 = vmatprep.subr.bf16.mxu0 %v4657
    %5670 = vmatpush1.bf16.msra.mxu0 %v4656
    %5671 = vmatprep.subr.bf16.mxu0 %v4664
    %5672 = vmatpush1.bf16.msra.mxu0 %v4663
    %5673 = vmatprep.subr.bf16.mxu0 %v4671
    %5674 = vmatpush1.bf16.msra.mxu0 %v4670
    %5675 = vmatprep.subr.bf16.mxu0 %v4678
    %5676 = vmatpush1.bf16.msra.mxu0 %v4677
    %5677 = vmatprep.subr.bf16.mxu0 %v4685
    %5678 = vmatpush1.bf16.msra.mxu0 %v4684
    %5679 = vmatprep.subr.bf16.mxu0 %v4692
    %5680 = vmatpush1.bf16.msra.mxu0 %v4691
    %5681 = vmatprep.subr.bf16.mxu0 %v4699
    %5682 = vmatpush1.bf16.msra.mxu0 %v4698
    %5683 = vmatprep.mubr.bf16.mxu0 %v2627
    %5684 = vmatmul.mubr.bf16.gmra.mrb[0].mxu0 %v2626
    %v5685 = vpop.f32.mrb[0].mxu0
    %v5686 = vadd.f32 %v3159, %v5685
    %v5687 = vpop.f32.mrb[0].mxu0
    %v5688 = vadd.f32 %v3163, %v5687
    %v5689 = vpop.f32.mrb[0].mxu0
    %v5690 = vpop.f32.mrb[0].mxu0
    %5691 = vdwg.mxu0
    %5692 = vmatprep.subr.bf16.mxu0 %v4706
    %5693 = vmatpush1.bf16.msra.mxu0 %v4705
    %5694 = vmatprep.subr.bf16.mxu0 %v4713
    %5695 = vmatpush1.bf16.msra.mxu0 %v4712
    %5696 = vmatprep.subr.bf16.mxu0 %v4720
    %5697 = vmatpush1.bf16.msra.mxu0 %v4719
    %5698 = vmatprep.subr.bf16.mxu0 %v4727
    %5699 = vmatpush1.bf16.msra.mxu0 %v4726
    %5700 = vmatprep.subr.bf16.mxu0 %v4734
    %5701 = vmatpush1.bf16.msra.mxu0 %v4733
    %5702 = vmatprep.subr.bf16.mxu0 %v4741
    %5703 = vmatpush1.bf16.msra.mxu0 %v4740
    %5704 = vmatprep.subr.bf16.mxu0 %v4748
    %5705 = vmatpush1.bf16.msra.mxu0 %v4747
    %5706 = vmatprep.subr.bf16.mxu0 %v4755
    %5707 = vmatpush1.bf16.msra.mxu0 %v4754
    %5708 = vmatprep.subr.bf16.mxu0 %v4762
    %5709 = vmatpush1.bf16.msra.mxu0 %v4761
    %5710 = vmatprep.subr.bf16.mxu0 %v4769
    %5711 = vmatpush1.bf16.msra.mxu0 %v4768
    %5712 = vmatprep.subr.bf16.mxu0 %v4776
    %5713 = vmatpush1.bf16.msra.mxu0 %v4775
    %5714 = vmatprep.subr.bf16.mxu0 %v4783
    %5715 = vmatpush1.bf16.msra.mxu0 %v4782
    %5716 = vmatprep.subr.bf16.mxu0 %v4790
    %5717 = vmatpush1.bf16.msra.mxu0 %v4789
    %5718 = vmatprep.subr.bf16.mxu0 %v4797
    %5719 = vmatpush1.bf16.msra.mxu0 %v4796
    %5720 = vmatprep.subr.bf16.mxu0 %v4804
    %5721 = vmatpush1.bf16.msra.mxu0 %v4803
    %5722 = vmatprep.subr.bf16.mxu0 %v4811
    %5723 = vmatpush1.bf16.msra.mxu0 %v4810
    %5724 = vmatprep.mubr.bf16.mxu0 %v2629
    %5725 = vmatmul.mubr.bf16.gmra.mrb[0].mxu0 %v2628
    %v5726 = vpop.f32.mrb[0].mxu0
    %v5727 = vadd.f32 %v5686, %v5726
    %v5728 = vpop.f32.mrb[0].mxu0
    %v5729 = vadd.f32 %v5688, %v5728
    %v5730 = vpop.f32.mrb[0].mxu0
    %v5731 = vpop.f32.mrb[0].mxu0
    %5732 = vdwg.mxu0
    %5733 = vmatprep.subr.bf16.mxu0 %v4818
    %5734 = vmatpush1.bf16.msra.mxu0 %v4817
    %5735 = vmatprep.subr.bf16.mxu0 %v4825
    %5736 = vmatpush1.bf16.msra.mxu0 %v4824
    %5737 = vmatprep.subr.bf16.mxu0 %v4832
    %5738 = vmatpush1.bf16.msra.mxu0 %v4831
    %5739 = vmatprep.subr.bf16.mxu0 %v4839
    %5740 = vmatpush1.bf16.msra.mxu0 %v4838
    %5741 = vmatprep.subr.bf16.mxu0 %v4846
    %5742 = vmatpush1.bf16.msra.mxu0 %v4845
    %5743 = vmatprep.subr.bf16.mxu0 %v4853
    %5744 = vmatpush1.bf16.msra.mxu0 %v4852
    %5745 = vmatprep.subr.bf16.mxu0 %v4860
    %5746 = vmatpush1.bf16.msra.mxu0 %v4859
    %5747 = vmatprep.subr.bf16.mxu0 %v4867
    %5748 = vmatpush1.bf16.msra.mxu0 %v4866
    %5749 = vmatprep.subr.bf16.mxu0 %v4874
    %5750 = vmatpush1.bf16.msra.mxu0 %v4873
    %5751 = vmatprep.subr.bf16.mxu0 %v4881
    %5752 = vmatpush1.bf16.msra.mxu0 %v4880
    %5753 = vmatprep.subr.bf16.mxu0 %v4888
    %5754 = vmatpush1.bf16.msra.mxu0 %v4887
    %5755 = vmatprep.subr.bf16.mxu0 %v4895
    %5756 = vmatpush1.bf16.msra.mxu0 %v4894
    %5757 = vmatprep.subr.bf16.mxu0 %v4902
    %5758 = vmatpush1.bf16.msra.mxu0 %v4901
    %5759 = vmatprep.subr.bf16.mxu0 %v4909
    %5760 = vmatpush1.bf16.msra.mxu0 %v4908
    %5761 = vmatprep.subr.bf16.mxu0 %v4916
    %5762 = vmatpush1.bf16.msra.mxu0 %v4915
    %5763 = vmatprep.subr.bf16.mxu0 %v4923
    %5764 = vmatpush1.bf16.msra.mxu0 %v4922
    %5765 = vmatprep.mubr.bf16.mxu0 %v2631
    %5766 = vmatmul.mubr.bf16.gmra.mrb[0].mxu0 %v2630
    %v5767 = vpop.f32.mrb[0].mxu0
    %v5768 = vadd.f32 %v5727, %v5767
    %v5769 = vpop.f32.mrb[0].mxu0
    %v5770 = vadd.f32 %v5729, %v5769
    %v5771 = vpop.f32.mrb[0].mxu0
    %v5772 = vpop.f32.mrb[0].mxu0
    %5773 = vdwg.mxu0
    %5774 = vmatprep.subr.bf16.mxu0 %v4930
    %5775 = vmatpush1.bf16.msra.mxu0 %v4929
    %5776 = vmatprep.subr.bf16.mxu0 %v4937
    %5777 = vmatpush1.bf16.msra.mxu0 %v4936
    %5778 = vmatprep.subr.bf16.mxu0 %v4944
    %5779 = vmatpush1.bf16.msra.mxu0 %v4943
    %5780 = vmatprep.subr.bf16.mxu0 %v4951
    %5781 = vmatpush1.bf16.msra.mxu0 %v4950
    %5782 = vmatprep.subr.bf16.mxu0 %v4958
    %5783 = vmatpush1.bf16.msra.mxu0 %v4957
    %5784 = vmatprep.subr.bf16.mxu0 %v4965
    %5785 = vmatpush1.bf16.msra.mxu0 %v4964
    %5786 = vmatprep.subr.bf16.mxu0 %v4972
    %5787 = vmatpush1.bf16.msra.mxu0 %v4971
    %5788 = vmatprep.subr.bf16.mxu0 %v4979
    %5789 = vmatpush1.bf16.msra.mxu0 %v4978
    %5790 = vmatprep.subr.bf16.mxu0 %v4986
    %5791 = vmatpush1.bf16.msra.mxu0 %v4985
    %5792 = vmatprep.subr.bf16.mxu0 %v4993
    %5793 = vmatpush1.bf16.msra.mxu0 %v4992
    %5794 = vmatprep.subr.bf16.mxu0 %v5000
    %5795 = vmatpush1.bf16.msra.mxu0 %v4999
    %5796 = vmatprep.subr.bf16.mxu0 %v5007
    %5797 = vmatpush1.bf16.msra.mxu0 %v5006
    %5798 = vmatprep.subr.bf16.mxu0 %v5014
    %5799 = vmatpush1.bf16.msra.mxu0 %v5013
    %5800 = vmatprep.subr.bf16.mxu0 %v5021
    %5801 = vmatpush1.bf16.msra.mxu0 %v5020
    %5802 = vmatprep.subr.bf16.mxu0 %v5028
    %5803 = vmatpush1.bf16.msra.mxu0 %v5027
    %5804 = vmatprep.subr.bf16.mxu0 %v5035
    %5805 = vmatpush1.bf16.msra.mxu0 %v5034
    %5806 = vmatprep.mubr.bf16.mxu0 %v2633
    %5807 = vmatmul.mubr.bf16.gmra.mrb[0].mxu0 %v2632
    %v5808 = vpop.f32.mrb[0].mxu0
    %v5809 = vadd.f32 %v5768, %v5808
    %v5810 = vpop.f32.mrb[0].mxu0
    %v5811 = vadd.f32 %v5770, %v5810
    %v5812 = vpop.f32.mrb[0].mxu0
    %v5813 = vpop.f32.mrb[0].mxu0
    %5814 = vdwg.mxu0
    %5815 = vmatprep.subr.bf16.mxu0 %v4596
    %5816 = vmatpush1.bf16.msra.mxu0 %v4595
    %5817 = vmatprep.subr.bf16.mxu0 %v4603
    %5818 = vmatpush1.bf16.msra.mxu0 %v4602
    %5819 = vmatprep.subr.bf16.mxu0 %v4610
    %5820 = vmatpush1.bf16.msra.mxu0 %v4609
    %5821 = vmatprep.subr.bf16.mxu0 %v4617
    %5822 = vmatpush1.bf16.msra.mxu0 %v4616
    %5823 = vmatprep.subr.bf16.mxu0 %v4624
    %5824 = vmatpush1.bf16.msra.mxu0 %v4623
    %5825 = vmatprep.subr.bf16.mxu0 %v4631
    %5826 = vmatpush1.bf16.msra.mxu0 %v4630
    %5827 = vmatprep.subr.bf16.mxu0 %v4638
    %5828 = vmatpush1.bf16.msra.mxu0 %v4637
    %5829 = vmatprep.subr.bf16.mxu0 %v4645
    %5830 = vmatpush1.bf16.msra.mxu0 %v4644
    %5831 = vmatprep.subr.bf16.mxu0 %v4652
    %5832 = vmatpush1.bf16.msra.mxu0 %v4651
    %5833 = vmatprep.subr.bf16.mxu0 %v4659
    %5834 = vmatpush1.bf16.msra.mxu0 %v4658
    %5835 = vmatprep.subr.bf16.mxu0 %v4666
    %5836 = vmatpush1.bf16.msra.mxu0 %v4665
    %5837 = vmatprep.subr.bf16.mxu0 %v4673
    %5838 = vmatpush1.bf16.msra.mxu0 %v4672
    %5839 = vmatprep.subr.bf16.mxu0 %v4680
    %5840 = vmatpush1.bf16.msra.mxu0 %v4679
    %5841 = vmatprep.subr.bf16.mxu0 %v4687
    %5842 = vmatpush1.bf16.msra.mxu0 %v4686
    %5843 = vmatprep.subr.bf16.mxu0 %v4694
    %5844 = vmatpush1.bf16.msra.mxu0 %v4693
    %5845 = vmatprep.subr.bf16.mxu0 %v4701
    %5846 = vmatpush1.bf16.msra.mxu0 %v4700
    %5847 = vmatprep.mubr.bf16.mxu0 %v2627
    %5848 = vmatmul.mubr.bf16.gmra.mrb[0].mxu0 %v2626
    %v5849 = vpop.f32.mrb[0].mxu0
    %v5850 = vadd.f32 %v3167, %v5849
    %v5851 = vpop.f32.mrb[0].mxu0
    %v5852 = vadd.f32 %v3171, %v5851
    %v5853 = vpop.f32.mrb[0].mxu0
    %v5854 = vpop.f32.mrb[0].mxu0
    %5855 = vdwg.mxu0
    %5856 = vmatprep.subr.bf16.mxu0 %v4708
    %5857 = vmatpush1.bf16.msra.mxu0 %v4707
    %5858 = vmatprep.subr.bf16.mxu0 %v4715
    %5859 = vmatpush1.bf16.msra.mxu0 %v4714
    %5860 = vmatprep.subr.bf16.mxu0 %v4722
    %5861 = vmatpush1.bf16.msra.mxu0 %v4721
    %5862 = vmatprep.subr.bf16.mxu0 %v4729
    %5863 = vmatpush1.bf16.msra.mxu0 %v4728
    %5864 = vmatprep.subr.bf16.mxu0 %v4736
    %5865 = vmatpush1.bf16.msra.mxu0 %v4735
    %5866 = vmatprep.subr.bf16.mxu0 %v4743
    %5867 = vmatpush1.bf16.msra.mxu0 %v4742
    %5868 = vmatprep.subr.bf16.mxu0 %v4750
    %5869 = vmatpush1.bf16.msra.mxu0 %v4749
    %5870 = vmatprep.subr.bf16.mxu0 %v4757
    %5871 = vmatpush1.bf16.msra.mxu0 %v4756
    %5872 = vmatprep.subr.bf16.mxu0 %v4764
    %5873 = vmatpush1.bf16.msra.mxu0 %v4763
    %5874 = vmatprep.subr.bf16.mxu0 %v4771
    %5875 = vmatpush1.bf16.msra.mxu0 %v4770
    %5876 = vmatprep.subr.bf16.mxu0 %v4778
    %5877 = vmatpush1.bf16.msra.mxu0 %v4777
    %5878 = vmatprep.subr.bf16.mxu0 %v4785
    %5879 = vmatpush1.bf16.msra.mxu0 %v4784
    %5880 = vmatprep.subr.bf16.mxu0 %v4792
    %5881 = vmatpush1.bf16.msra.mxu0 %v4791
    %5882 = vmatprep.subr.bf16.mxu0 %v4799
    %5883 = vmatpush1.bf16.msra.mxu0 %v4798
    %5884 = vmatprep.subr.bf16.mxu0 %v4806
    %5885 = vmatpush1.bf16.msra.mxu0 %v4805
    %5886 = vmatprep.subr.bf16.mxu0 %v4813
    %5887 = vmatpush1.bf16.msra.mxu0 %v4812
    %5888 = vmatprep.mubr.bf16.mxu0 %v2629
    %5889 = vmatmul.mubr.bf16.gmra.mrb[0].mxu0 %v2628
    %v5890 = vpop.f32.mrb[0].mxu0
    %v5891 = vadd.f32 %v5850, %v5890
    %v5892 = vpop.f32.mrb[0].mxu0
    %v5893 = vadd.f32 %v5852, %v5892
    %v5894 = vpop.f32.mrb[0].mxu0
    %v5895 = vpop.f32.mrb[0].mxu0
    %5896 = vdwg.mxu0
    %5897 = vmatprep.subr.bf16.mxu0 %v4820
    %5898 = vmatpush1.bf16.msra.mxu0 %v4819
    %5899 = vmatprep.subr.bf16.mxu0 %v4827
    %5900 = vmatpush1.bf16.msra.mxu0 %v4826
    %5901 = vmatprep.subr.bf16.mxu0 %v4834
    %5902 = vmatpush1.bf16.msra.mxu0 %v4833
    %5903 = vmatprep.subr.bf16.mxu0 %v4841
    %5904 = vmatpush1.bf16.msra.mxu0 %v4840
    %5905 = vmatprep.subr.bf16.mxu0 %v4848
    %5906 = vmatpush1.bf16.msra.mxu0 %v4847
    %5907 = vmatprep.subr.bf16.mxu0 %v4855
    %5908 = vmatpush1.bf16.msra.mxu0 %v4854
    %5909 = vmatprep.subr.bf16.mxu0 %v4862
    %5910 = vmatpush1.bf16.msra.mxu0 %v4861
    %5911 = vmatprep.subr.bf16.mxu0 %v4869
    %5912 = vmatpush1.bf16.msra.mxu0 %v4868
    %5913 = vmatprep.subr.bf16.mxu0 %v4876
    %5914 = vmatpush1.bf16.msra.mxu0 %v4875
    %5915 = vmatprep.subr.bf16.mxu0 %v4883
    %5916 = vmatpush1.bf16.msra.mxu0 %v4882
    %5917 = vmatprep.subr.bf16.mxu0 %v4890
    %5918 = vmatpush1.bf16.msra.mxu0 %v4889
    %5919 = vmatprep.subr.bf16.mxu0 %v4897
    %5920 = vmatpush1.bf16.msra.mxu0 %v4896
    %5921 = vmatprep.subr.bf16.mxu0 %v4904
    %5922 = vmatpush1.bf16.msra.mxu0 %v4903
    %5923 = vmatprep.subr.bf16.mxu0 %v4911
    %5924 = vmatpush1.bf16.msra.mxu0 %v4910
    %5925 = vmatprep.subr.bf16.mxu0 %v4918
    %5926 = vmatpush1.bf16.msra.mxu0 %v4917
    %5927 = vmatprep.subr.bf16.mxu0 %v4925
    %5928 = vmatpush1.bf16.msra.mxu0 %v4924
    %5929 = vmatprep.mubr.bf16.mxu0 %v2631
    %5930 = vmatmul.mubr.bf16.gmra.mrb[0].mxu0 %v2630
    %v5931 = vpop.f32.mrb[0].mxu0
    %v5932 = vadd.f32 %v5891, %v5931
    %v5933 = vpop.f32.mrb[0].mxu0
    %v5934 = vadd.f32 %v5893, %v5933
    %v5935 = vpop.f32.mrb[0].mxu0
    %v5936 = vpop.f32.mrb[0].mxu0
    %5937 = vdwg.mxu0
    %5938 = vmatprep.subr.bf16.mxu0 %v4932
    %5939 = vmatpush1.bf16.msra.mxu0 %v4931
    %5940 = vmatprep.subr.bf16.mxu0 %v4939
    %5941 = vmatpush1.bf16.msra.mxu0 %v4938
    %5942 = vmatprep.subr.bf16.mxu0 %v4946
    %5943 = vmatpush1.bf16.msra.mxu0 %v4945
    %5944 = vmatprep.subr.bf16.mxu0 %v4953
    %5945 = vmatpush1.bf16.msra.mxu0 %v4952
    %5946 = vmatprep.subr.bf16.mxu0 %v4960
    %5947 = vmatpush1.bf16.msra.mxu0 %v4959
    %5948 = vmatprep.subr.bf16.mxu0 %v4967
    %5949 = vmatpush1.bf16.msra.mxu0 %v4966
    %5950 = vmatprep.subr.bf16.mxu0 %v4974
    %5951 = vmatpush1.bf16.msra.mxu0 %v4973
    %5952 = vmatprep.subr.bf16.mxu0 %v4981
    %5953 = vmatpush1.bf16.msra.mxu0 %v4980
    %5954 = vmatprep.subr.bf16.mxu0 %v4988
    %5955 = vmatpush1.bf16.msra.mxu0 %v4987
    %5956 = vmatprep.subr.bf16.mxu0 %v4995
    %5957 = vmatpush1.bf16.msra.mxu0 %v4994
    %5958 = vmatprep.subr.bf16.mxu0 %v5002
    %5959 = vmatpush1.bf16.msra.mxu0 %v5001
    %5960 = vmatprep.subr.bf16.mxu0 %v5009
    %5961 = vmatpush1.bf16.msra.mxu0 %v5008
    %5962 = vmatprep.subr.bf16.mxu0 %v5016
    %5963 = vmatpush1.bf16.msra.mxu0 %v5015
    %5964 = vmatprep.subr.bf16.mxu0 %v5023
    %5965 = vmatpush1.bf16.msra.mxu0 %v5022
    %5966 = vmatprep.subr.bf16.mxu0 %v5030
    %5967 = vmatpush1.bf16.msra.mxu0 %v5029
    %5968 = vmatprep.subr.bf16.mxu0 %v5037
    %5969 = vmatpush1.bf16.msra.mxu0 %v5036
    %5970 = vmatprep.mubr.bf16.mxu0 %v2633
    %5971 = vmatmul.mubr.bf16.gmra.mrb[0].mxu0 %v2632
    %v5972 = vpop.f32.mrb[0].mxu0
    %v5973 = vadd.f32 %v5932, %v5972
    %v5974 = vpop.f32.mrb[0].mxu0
    %v5975 = vadd.f32 %v5934, %v5974
    %v5976 = vpop.f32.mrb[0].mxu0
    %v5977 = vpop.f32.mrb[0].mxu0
    %5978 = vdwg.mxu0
    %5979 = vmatprep.subr.bf16.mxu0 0
    %5980 = vmatpush1.bf16.msra.mxu0 %v4597
    %5981 = vmatprep.subr.bf16.mxu0 0
    %5982 = vmatpush1.bf16.msra.mxu0 %v4604
    %5983 = vmatprep.subr.bf16.mxu0 0
    %5984 = vmatpush1.bf16.msra.mxu0 %v4611
    %5985 = vmatprep.subr.bf16.mxu0 0
    %5986 = vmatpush1.bf16.msra.mxu0 %v4618
    %5987 = vmatprep.subr.bf16.mxu0 0
    %5988 = vmatpush1.bf16.msra.mxu0 %v4625
    %5989 = vmatprep.subr.bf16.mxu0 0
    %5990 = vmatpush1.bf16.msra.mxu0 %v4632
    %5991 = vmatprep.subr.bf16.mxu0 0
    %5992 = vmatpush1.bf16.msra.mxu0 %v4639
    %5993 = vmatprep.subr.bf16.mxu0 0
    %5994 = vmatpush1.bf16.msra.mxu0 %v4646
    %5995 = vmatprep.subr.bf16.mxu0 0
    %5996 = vmatpush1.bf16.msra.mxu0 %v4653
    %5997 = vmatprep.subr.bf16.mxu0 0
    %5998 = vmatpush1.bf16.msra.mxu0 %v4660
    %5999 = vmatprep.subr.bf16.mxu0 0
    %6000 = vmatpush1.bf16.msra.mxu0 %v4667
    %6001 = vmatprep.subr.bf16.mxu0 0
    %6002 = vmatpush1.bf16.msra.mxu0 %v4674
    %6003 = vmatprep.subr.bf16.mxu0 0
    %6004 = vmatpush1.bf16.msra.mxu0 %v4681
    %6005 = vmatprep.subr.bf16.mxu0 0
    %6006 = vmatpush1.bf16.msra.mxu0 %v4688
    %6007 = vmatprep.subr.bf16.mxu0 0
    %6008 = vmatpush1.bf16.msra.mxu0 %v4695
    %6009 = vmatprep.subr.bf16.mxu0 0
    %6010 = vmatpush1.bf16.msra.mxu0 %v4702
    %6011 = vmatprep.mubr.bf16.mxu0 %v2627
    %6012 = vmatmul.mubr.bf16.gmra.mrb[0].mxu0 %v2626
    %v6013 = vpop.f32.mrb[0].mxu0
    %v6014 = vadd.f32 %v3175, %v6013
    %v6015 = vpop.f32.mrb[0].mxu0
    %v6016 = vpop.f32.mrb[0].mxu0
    %v6017 = vpop.f32.mrb[0].mxu0
    %6018 = vdwg.mxu0
    %6019 = vmatprep.subr.bf16.mxu0 0
    %6020 = vmatpush1.bf16.msra.mxu0 %v4709
    %6021 = vmatprep.subr.bf16.mxu0 0
    %6022 = vmatpush1.bf16.msra.mxu0 %v4716
    %6023 = vmatprep.subr.bf16.mxu0 0
    %6024 = vmatpush1.bf16.msra.mxu0 %v4723
    %6025 = vmatprep.subr.bf16.mxu0 0
    %6026 = vmatpush1.bf16.msra.mxu0 %v4730
    %6027 = vmatprep.subr.bf16.mxu0 0
    %6028 = vmatpush1.bf16.msra.mxu0 %v4737
    %6029 = vmatprep.subr.bf16.mxu0 0
    %6030 = vmatpush1.bf16.msra.mxu0 %v4744
    %6031 = vmatprep.subr.bf16.mxu0 0
    %6032 = vmatpush1.bf16.msra.mxu0 %v4751
    %6033 = vmatprep.subr.bf16.mxu0 0
    %6034 = vmatpush1.bf16.msra.mxu0 %v4758
    %6035 = vmatprep.subr.bf16.mxu0 0
    %6036 = vmatpush1.bf16.msra.mxu0 %v4765
    %6037 = vmatprep.subr.bf16.mxu0 0
    %6038 = vmatpush1.bf16.msra.mxu0 %v4772
    %6039 = vmatprep.subr.bf16.mxu0 0
    %6040 = vmatpush1.bf16.msra.mxu0 %v4779
    %6041 = vmatprep.subr.bf16.mxu0 0
    %6042 = vmatpush1.bf16.msra.mxu0 %v4786
    %6043 = vmatprep.subr.bf16.mxu0 0
    %6044 = vmatpush1.bf16.msra.mxu0 %v4793
    %6045 = vmatprep.subr.bf16.mxu0 0
    %6046 = vmatpush1.bf16.msra.mxu0 %v4800
    %6047 = vmatprep.subr.bf16.mxu0 0
    %6048 = vmatpush1.bf16.msra.mxu0 %v4807
    %6049 = vmatprep.subr.bf16.mxu0 0
    %6050 = vmatpush1.bf16.msra.mxu0 %v4814
    %6051 = vmatprep.mubr.bf16.mxu0 %v2629
    %6052 = vmatmul.mubr.bf16.gmra.mrb[0].mxu0 %v2628
    %v6053 = vpop.f32.mrb[0].mxu0
    %v6054 = vadd.f32 %v6014, %v6053
    %v6055 = vpop.f32.mrb[0].mxu0
    %v6056 = vpop.f32.mrb[0].mxu0
    %v6057 = vpop.f32.mrb[0].mxu0
    %6058 = vdwg.mxu0
    %6059 = vmatprep.subr.bf16.mxu0 0
    %6060 = vmatpush1.bf16.msra.mxu0 %v4821
    %6061 = vmatprep.subr.bf16.mxu0 0
    %6062 = vmatpush1.bf16.msra.mxu0 %v4828
    %6063 = vmatprep.subr.bf16.mxu0 0
    %6064 = vmatpush1.bf16.msra.mxu0 %v4835
    %6065 = vmatprep.subr.bf16.mxu0 0
    %6066 = vmatpush1.bf16.msra.mxu0 %v4842
    %6067 = vmatprep.subr.bf16.mxu0 0
    %6068 = vmatpush1.bf16.msra.mxu0 %v4849
    %6069 = vmatprep.subr.bf16.mxu0 0
    %6070 = vmatpush1.bf16.msra.mxu0 %v4856
    %6071 = vmatprep.subr.bf16.mxu0 0
    %6072 = vmatpush1.bf16.msra.mxu0 %v4863
    %6073 = vmatprep.subr.bf16.mxu0 0
    %6074 = vmatpush1.bf16.msra.mxu0 %v4870
    %6075 = vmatprep.subr.bf16.mxu0 0
    %6076 = vmatpush1.bf16.msra.mxu0 %v4877
    %6077 = vmatprep.subr.bf16.mxu0 0
    %6078 = vmatpush1.bf16.msra.mxu0 %v4884
    %6079 = vmatprep.subr.bf16.mxu0 0
    %6080 = vmatpush1.bf16.msra.mxu0 %v4891
    %6081 = vmatprep.subr.bf16.mxu0 0
    %6082 = vmatpush1.bf16.msra.mxu0 %v4898
    %6083 = vmatprep.subr.bf16.mxu0 0
    %6084 = vmatpush1.bf16.msra.mxu0 %v4905
    %6085 = vmatprep.subr.bf16.mxu0 0
    %6086 = vmatpush1.bf16.msra.mxu0 %v4912
    %6087 = vmatprep.subr.bf16.mxu0 0
    %6088 = vmatpush1.bf16.msra.mxu0 %v4919
    %6089 = vmatprep.subr.bf16.mxu0 0
    %6090 = vmatpush1.bf16.msra.mxu0 %v4926
    %6091 = vmatprep.mubr.bf16.mxu0 %v2631
    %6092 = vmatmul.mubr.bf16.gmra.mrb[0].mxu0 %v2630
    %v6093 = vpop.f32.mrb[0].mxu0
    %v6094 = vadd.f32 %v6054, %v6093
    %v6095 = vpop.f32.mrb[0].mxu0
    %v6096 = vpop.f32.mrb[0].mxu0
    %v6097 = vpop.f32.mrb[0].mxu0
    %6098 = vdwg.mxu0
    %6099 = vmatprep.subr.bf16.mxu0 0
    %6100 = vmatpush1.bf16.msra.mxu0 %v4933
    %6101 = vmatprep.subr.bf16.mxu0 0
    %6102 = vmatpush1.bf16.msra.mxu0 %v4940
    %6103 = vmatprep.subr.bf16.mxu0 0
    %6104 = vmatpush1.bf16.msra.mxu0 %v4947
    %6105 = vmatprep.subr.bf16.mxu0 0
    %6106 = vmatpush1.bf16.msra.mxu0 %v4954
    %6107 = vmatprep.subr.bf16.mxu0 0
    %6108 = vmatpush1.bf16.msra.mxu0 %v4961
    %6109 = vmatprep.subr.bf16.mxu0 0
    %6110 = vmatpush1.bf16.msra.mxu0 %v4968
    %6111 = vmatprep.subr.bf16.mxu0 0
    %6112 = vmatpush1.bf16.msra.mxu0 %v4975
    %6113 = vmatprep.subr.bf16.mxu0 0
    %6114 = vmatpush1.bf16.msra.mxu0 %v4982
    %6115 = vmatprep.subr.bf16.mxu0 0
    %6116 = vmatpush1.bf16.msra.mxu0 %v4989
    %6117 = vmatprep.subr.bf16.mxu0 0
    %6118 = vmatpush1.bf16.msra.mxu0 %v4996
    %6119 = vmatprep.subr.bf16.mxu0 0
    %6120 = vmatpush1.bf16.msra.mxu0 %v5003
    %6121 = vmatprep.subr.bf16.mxu0 0
    %6122 = vmatpush1.bf16.msra.mxu0 %v5010
    %6123 = vmatprep.subr.bf16.mxu0 0
    %6124 = vmatpush1.bf16.msra.mxu0 %v5017
    %6125 = vmatprep.subr.bf16.mxu0 0
    %6126 = vmatpush1.bf16.msra.mxu0 %v5024
    %6127 = vmatprep.subr.bf16.mxu0 0
    %6128 = vmatpush1.bf16.msra.mxu0 %v5031
    %6129 = vmatprep.subr.bf16.mxu0 0
    %6130 = vmatpush1.bf16.msra.mxu0 %v5038
    %6131 = vmatprep.mubr.bf16.mxu0 %v2633
    %6132 = vmatmul.mubr.bf16.gmra.mrb[0].mxu0 %v2632
    %v6133 = vpop.f32.mrb[0].mxu0
    %v6134 = vadd.f32 %v6094, %v6133
    %v6135 = vpop.f32.mrb[0].mxu0
    %v6136 = vpop.f32.mrb[0].mxu0
    %v6137 = vpop.f32.mrb[0].mxu0
    %6138 = vdwg.mxu0
    %v6139 = vtanh.pop %v5645
    %v6140 = vtanh.pop %v5647
    %v6141 = vtanh.pop %v5809
    %v6142 = vtanh.pop %v5811
    %v6143 = vtanh.pop %v5973
    %v6144 = vtanh.pop %v5975
    %v6145 = vtanh.pop %v6134
    %6146 = vst [vmem:[#allocation2] sm:$0xff] %v6139
    %6147 = vst [vmem:[#allocation2 + $0x8] sm:$0xff] %v6140
    %6148 = vst [vmem:[#allocation2 + $0x10] sm:$0xff] %v6141
    %6149 = vst [vmem:[#allocation2 + $0x18] sm:$0xff] %v6142
    %6150 = vst [vmem:[#allocation2 + $0x20] sm:$0xff] %v6143
    %6151 = vst [vmem:[#allocation2 + $0x28] sm:$0xff] %v6144
    %vm6152 = vcmask 130048
    %6153 = vst.msk [vmem:[#allocation2 + $0x30] sm:$0xff] %vm6152, %v6145
    // Predicated region
    $region38: #{tpu_custom_call.1} parent=1 // pred_check
      _
    $region39: #{tpu_custom_call.1} parent=1 // pred_check_branch
      %6155 = sbr.rel (0) target = $region41
    $region40: #{tpu_custom_call.1} parent=1 // pred_region
      %s6157 = ssub.s32 896, 896
      %6158 = vsyncadd [#allocation3], %s6157
      %s6160 = sshll.u32 [#allocation2], 4
      %s6161 = int_to_ptr.vmem [resolvable:$true] %s6160
      %6163 = dma.vmem_to_hbm [thread:$0]  %s6161, 896, %s9, [#allocation3]
    $region41: #{tpu_custom_call.1} parent=1 // pred_fallthru
      _
    // Predicated region
    $region42: #{tpu_custom_call.1} parent=1 // pred_check
      _
    $region43: #{tpu_custom_call.1} parent=1 // pred_check_branch
      %6165 = sbr.rel (0) target = $region45
    $region44: #{tpu_custom_call.1} parent=1 // pred_region
      %6166 = dma.done [#allocation3], 896
    $region45: #{tpu_custom_call.1} parent=1 // pred_fallthru
      _
    %6167 = vsyncpa [#allocation3], 1

</llo_original>
